<compile_context>
chip_gen: v5e
topology: v5e:2x2
jax: 0.10.0
libtpu: 0.0.40
codegen_flags: <defaults>
</compile_context>

<pallas_src>
import jax
import jax.numpy as jnp
from jax.experimental import pallas as pl
from jax.experimental.pallas import tpu as pltpu

C_IN = 480
C_MID = 160
C_OUT = 960
BN_EPS = 1e-5
COUT_TILES = 2  # grid size along C_OUT (parallel axis)


def _fused_kernel(x_ref, s_ref, w1_ref, gamma_ref, beta_ref, w2_ref, o_ref):
    # x_ref:     [C_IN, P]   f32   flattened NCHW activations (channels major)
    # s_ref:     [C_IN, 1]   f32   SE gate logits (pre-sigmoid)
    # w1_ref:    [C_MID, C_IN]  bf16
    # gamma_ref: [C_MID, 1]  f32
    # beta_ref:  [C_MID, 1]  f32
    # w2_ref:    [C_OUT // COUT_TILES, C_MID]  bf16   (this program's tile)
    # o_ref:     [C_OUT // COUT_TILES, P]      f32

    # x273 = sigmoid(x272); x274 = x268 * x273  (broadcast over spatial lanes)
    gate = jax.nn.sigmoid(s_ref[...])                       # [C_IN, 1]
    xg = (x_ref[...] * gate).astype(jnp.bfloat16)           # [C_IN, P] bf16

    # x275 = conv2d(480 -> 160, 1x1, no bias)  ==  W1 @ xg  on the MXU
    h1 = jnp.dot(w1_ref[...], xg,
                 preferred_element_type=jnp.float32)        # [C_MID, P] f32

    # x276 = BatchNorm2d(160) in training mode: batch stats over (N, H, W) = P
    mean = jnp.mean(h1, axis=1, keepdims=True)              # [C_MID, 1]
    centered = h1 - mean
    var = jnp.mean(centered * centered, axis=1, keepdims=True)   # biased var
    scale = jax.lax.rsqrt(var + BN_EPS) * gamma_ref[...]    # fold inv_std*gamma
    y = (centered * scale + beta_ref[...]).astype(jnp.bfloat16)  # [C_MID, P]

    # x277 = conv2d(160 -> 960, 1x1, no bias): this tile of C_OUT
    o_ref[...] = jnp.dot(w2_ref[...], y,
                         preferred_element_type=jnp.float32)


def fused_se_conv_bn_conv(x268, x272, w1, gamma, beta, w2):
    """x268: [1, 480, H, W] NCHW, x272: [1, 480, 1, 1].
    w1: [160, 480], w2: [960, 160] (PyTorch [Cout, Cin] with 1x1 squeezed).
    Returns [1, 960, H, W]."""
    n, c_in, h, w = x268.shape
    assert n == 1 and c_in == C_IN
    p = h * w

    # Free reshapes of contiguous NCHW buffers — no transposes anywhere.
    x_flat = x268.reshape(C_IN, p).astype(jnp.float32)      # [480, P]
    s_col = x272.reshape(C_IN, 1).astype(jnp.float32)       # [480, 1]
    w1_bf = w1.astype(jnp.bfloat16)                         # [160, 480]
    w2_bf = w2.astype(jnp.bfloat16)                         # [960, 160]
    gamma2 = gamma.reshape(C_MID, 1).astype(jnp.float32)
    beta2 = beta.reshape(C_MID, 1).astype(jnp.float32)

    tile = C_OUT // COUT_TILES

    out_flat = pl.pallas_call(
        _fused_kernel,
        out_shape=jax.ShapeDtypeStruct((C_OUT, p), jnp.float32),
        grid=(COUT_TILES,),
        in_specs=[
            pl.BlockSpec((C_IN, p), lambda j: (0, 0)),       # x (resident)
            pl.BlockSpec((C_IN, 1), lambda j: (0, 0)),       # gate logits
            pl.BlockSpec((C_MID, C_IN), lambda j: (0, 0)),   # w1 (resident)
            pl.BlockSpec((C_MID, 1), lambda j: (0, 0)),      # gamma
            pl.BlockSpec((C_MID, 1), lambda j: (0, 0)),      # beta
            pl.BlockSpec((tile, C_MID), lambda j: (j, 0)),   # w2 tile
        ],
        out_specs=pl.BlockSpec((tile, p), lambda j: (j, 0)),
        compiler_params=pltpu.CompilerParams(
            dimension_semantics=("parallel",)),
    )(x_flat, s_col, w1_bf, gamma2, beta2, w2_bf)

    # [C_OUT, P] -> NCHW, free reshape.
    return out_flat.reshape(n, C_OUT, h, w)


def _reference(x268, x272, w1, gamma, beta, w2):
    """Pure-JAX f32 reference of the PyTorch forward (training-mode BN)."""
    gate = jax.nn.sigmoid(x272)                              # [1, 480, 1, 1]
    xg = x268 * gate                                         # [1, 480, 14, 14]
    h1 = jnp.einsum('nchw,dc->ndhw', xg, w1)                 # [1, 160, 14, 14]
    mean = jnp.mean(h1, axis=(0, 2, 3), keepdims=True)
    var = jnp.mean((h1 - mean) ** 2, axis=(0, 2, 3), keepdims=True)
    y = (h1 - mean) / jnp.sqrt(var + BN_EPS)
    y = y * gamma.reshape(1, -1, 1, 1) + beta.reshape(1, -1, 1, 1)
    return jnp.einsum('nchw,dc->ndhw', y, w2)                # [1, 960, 14, 14]


if __name__ == "__main__":
    key = jax.random.PRNGKey(0)
    k_x, k_s, k_w1, k_w2 = jax.random.split(key, 4)

    # Inputs at the module's native (already small) shapes.
    x268 = jax.random.normal(k_x, (1, C_IN, 14, 14), dtype=jnp.float32)
    x272 = jax.random.normal(k_s, (1, C_IN, 1, 1), dtype=jnp.float32)

    # Conv weights in PyTorch [Cout, Cin] layout (1x1 kernel squeezed).
    w1 = jax.random.normal(k_w1, (C_MID, C_IN), dtype=jnp.float32) * 0.05
    w2 = jax.random.normal(k_w2, (C_OUT, C_MID), dtype=jnp.float32) * 0.05
    gamma = jnp.ones((C_MID,), dtype=jnp.float32)   # BatchNorm2d default affine
    beta = jnp.zeros((C_MID,), dtype=jnp.float32)

    out = fused_se_conv_bn_conv(x268, x272, w1, gamma, beta, w2)
    out = jax.block_until_ready(out)

    ref = _reference(x268, x272, w1, gamma, beta, w2)
    assert out.shape == (1, C_OUT, 14, 14), out.shape
    # Tolerance loosened vs. the f32 reference: matmul operands are bf16 on the
    # MXU (f32 accumulation); estimated max abs error ~2e-2.
    err = float(jnp.max(jnp.abs(out - ref)))
    assert jnp.allclose(out, ref, atol=5e-2, rtol=5e-2), err

    print("KERNEL_OK")
</pallas_src>

<mosaic_0001>
module attributes {stable_mosaic.version = 11 : i64} {
  func.func @_fused_kernel(%arg0: i32, %arg1: memref<480x196xf32, #tpu.memory_space<vmem>>, %arg2: memref<480x1xf32, #tpu.memory_space<vmem>>, %arg3: memref<160x480xbf16, #tpu.memory_space<vmem>>, %arg4: memref<160x1xf32, #tpu.memory_space<vmem>>, %arg5: memref<160x1xf32, #tpu.memory_space<vmem>>, %arg6: memref<480x160xbf16, #tpu.memory_space<vmem>>, %arg7: memref<480x196xf32, #tpu.memory_space<vmem>>) attributes {dimension_semantics = [#tpu.dimension_semantics<parallel>], iteration_bounds = array<i64: 2>, scalar_prefetch = 0 : i64, scratch_operands = 0 : i64, tpu.core_type = #tpu.core_type<tc>, window_params = [{pipeline_mode = #tpu.pipeline_mode<synchronous>, transform_indices = @transform_0, window_bounds = array<i64: 480, 196>}, {pipeline_mode = #tpu.pipeline_mode<synchronous>, transform_indices = @transform_1, window_bounds = array<i64: 480, 1>}, {pipeline_mode = #tpu.pipeline_mode<synchronous>, transform_indices = @transform_2, window_bounds = array<i64: 160, 480>}, {pipeline_mode = #tpu.pipeline_mode<synchronous>, transform_indices = @transform_3, window_bounds = array<i64: 160, 1>}, {pipeline_mode = #tpu.pipeline_mode<synchronous>, transform_indices = @transform_4, window_bounds = array<i64: 160, 1>}, {transform_indices = @transform_5, window_bounds = array<i64: 480, 160>}, {transform_indices = @transform_6, window_bounds = array<i64: 480, 196>}]} {
    %c0 = arith.constant 0 : index
    %c0_0 = arith.constant 0 : index
    %0 = vector.load %arg2[%c0, %c0_0] : memref<480x1xf32, #tpu.memory_space<vmem>>, vector<480x1xf32>
    %1 = arith.negf %0 : vector<480x1xf32>
    %2 = math.exp %1 : vector<480x1xf32>
    %cst = arith.constant 1.000000e+00 : f32
    %3 = vector.broadcast %cst : f32 to vector<480x1xf32>
    %4 = arith.addf %3, %2 : vector<480x1xf32>
    %5 = arith.divf %3, %4 : vector<480x1xf32>
    %c0_1 = arith.constant 0 : index
    %c0_2 = arith.constant 0 : index
    %6 = vector.load %arg1[%c0_1, %c0_2] : memref<480x196xf32, #tpu.memory_space<vmem>>, vector<480x196xf32>
    %7 = vector.broadcast %5 : vector<480x1xf32> to vector<480x196xf32>
    %8 = arith.mulf %6, %7 : vector<480x196xf32>
    %9 = arith.truncf %8 : vector<480x196xf32> to vector<480x196xbf16>
    %c0_3 = arith.constant 0 : index
    %c0_4 = arith.constant 0 : index
    %10 = vector.load %arg3[%c0_3, %c0_4] : memref<160x480xbf16, #tpu.memory_space<vmem>>, vector<160x480xbf16>
    %cst_5 = arith.constant dense<0.000000e+00> : vector<160x196xf32>
    %11 = tpu.matmul %10, %9, %cst_5 {dimension_numbers = #tpu.dot_dimension_numbers<[1], [0], [0], [1], [0, 0, 1, 1], [], []>} : vector<160x480xbf16>, vector<480x196xbf16>, vector<160x196xf32> -> vector<160x196xf32>
    %cst_6 = arith.constant dense<0.000000e+00> : vector<160xf32>
    %12 = vector.multi_reduction <add>, %11, %cst_6 [1] : vector<160x196xf32> to vector<160xf32>
    %13 = vector.shape_cast %12 : vector<160xf32> to vector<160x1xf32>
    %cst_7 = arith.constant 1.960000e+02 : f32
    %14 = vector.broadcast %cst_7 : f32 to vector<160x1xf32>
    %15 = arith.divf %13, %14 : vector<160x1xf32>
    %16 = vector.broadcast %15 : vector<160x1xf32> to vector<160x196xf32>
    %17 = arith.subf %11, %16 : vector<160x196xf32>
    %18 = arith.mulf %17, %17 : vector<160x196xf32>
    %cst_8 = arith.constant dense<0.000000e+00> : vector<160xf32>
    %19 = vector.multi_reduction <add>, %18, %cst_8 [1] : vector<160x196xf32> to vector<160xf32>
    %20 = vector.shape_cast %19 : vector<160xf32> to vector<160x1xf32>
    %cst_9 = arith.constant 1.960000e+02 : f32
    %21 = vector.broadcast %cst_9 : f32 to vector<160x1xf32>
    %22 = arith.divf %20, %21 : vector<160x1xf32>
    %cst_10 = arith.constant 9.99999974E-6 : f32
    %23 = vector.broadcast %cst_10 : f32 to vector<160x1xf32>
    %24 = arith.addf %22, %23 : vector<160x1xf32>
    %25 = math.rsqrt %24 : vector<160x1xf32>
    %c0_11 = arith.constant 0 : index
    %c0_12 = arith.constant 0 : index
    %26 = vector.load %arg4[%c0_11, %c0_12] : memref<160x1xf32, #tpu.memory_space<vmem>>, vector<160x1xf32>
    %27 = arith.mulf %25, %26 : vector<160x1xf32>
    %28 = vector.broadcast %27 : vector<160x1xf32> to vector<160x196xf32>
    %29 = arith.mulf %17, %28 : vector<160x196xf32>
    %c0_13 = arith.constant 0 : index
    %c0_14 = arith.constant 0 : index
    %30 = vector.load %arg5[%c0_13, %c0_14] : memref<160x1xf32, #tpu.memory_space<vmem>>, vector<160x1xf32>
    %31 = vector.broadcast %30 : vector<160x1xf32> to vector<160x196xf32>
    %32 = arith.addf %29, %31 : vector<160x196xf32>
    %33 = arith.truncf %32 : vector<160x196xf32> to vector<160x196xbf16>
    %c0_15 = arith.constant 0 : index
    %c0_16 = arith.constant 0 : index
    %34 = vector.load %arg6[%c0_15, %c0_16] : memref<480x160xbf16, #tpu.memory_space<vmem>>, vector<480x160xbf16>
    %cst_17 = arith.constant dense<0.000000e+00> : vector<480x196xf32>
    %35 = tpu.matmul %34, %33, %cst_17 {dimension_numbers = #tpu.dot_dimension_numbers<[1], [0], [0], [1], [0, 0, 1, 1], [], []>} : vector<480x160xbf16>, vector<160x196xbf16>, vector<480x196xf32> -> vector<480x196xf32>
    %c0_18 = arith.constant 0 : index
    %c0_19 = arith.constant 0 : index
    %36 = vector.load %arg7[%c0_18, %c0_19] : memref<480x196xf32, #tpu.memory_space<vmem>>, vector<480x196xf32>
    tpu.vector_store %arg7[%c0_18, %c0_19], %35 {strides = array<i32>} : memref<480x196xf32, #tpu.memory_space<vmem>>, vector<480x196xf32>,
    return
  }
  func.func @transform_0(%arg0: i32) -> (i32, i32) {
    %c0_i32 = arith.constant 0 : i32
    %c0_i32_0 = arith.constant 0 : i32
    %c0_i32_1 = arith.constant 0 : i32
    return %c0_i32, %c0_i32_0 : i32, i32
  }
  func.func @transform_1(%arg0: i32) -> (i32, i32) {
    %c0_i32 = arith.constant 0 : i32
    %c0_i32_0 = arith.constant 0 : i32
    %c0_i32_1 = arith.constant 0 : i32
    return %c0_i32, %c0_i32_0 : i32, i32
  }
  func.func @transform_2(%arg0: i32) -> (i32, i32) {
    %c0_i32 = arith.constant 0 : i32
    %c0_i32_0 = arith.constant 0 : i32
    %c0_i32_1 = arith.constant 0 : i32
    return %c0_i32, %c0_i32_0 : i32, i32
  }
  func.func @transform_3(%arg0: i32) -> (i32, i32) {
    %c0_i32 = arith.constant 0 : i32
    %c0_i32_0 = arith.constant 0 : i32
    %c0_i32_1 = arith.constant 0 : i32
    return %c0_i32, %c0_i32_0 : i32, i32
  }
  func.func @transform_4(%arg0: i32) -> (i32, i32) {
    %c0_i32 = arith.constant 0 : i32
    %c0_i32_0 = arith.constant 0 : i32
    %c0_i32_1 = arith.constant 0 : i32
    return %c0_i32, %c0_i32_0 : i32, i32
  }
  func.func @transform_5(%arg0: i32) -> (i32, i32) {
    %c0_i32 = arith.constant 0 : i32
    %c0_i32_0 = arith.constant 0 : i32
    return %arg0, %c0_i32 : i32, i32
  }
  func.func @transform_6(%arg0: i32) -> (i32, i32) {
    %c0_i32 = arith.constant 0 : i32
    %c0_i32_0 = arith.constant 0 : i32
    return %arg0, %c0_i32 : i32, i32
  }
}

</mosaic_0001>

<llo_original>
// kernel: tpu_custom_call.1
$region0: #{tpu_custom_call.1}
  #allocation0 [shape = 'u32[]', space=smem, size = 0x4, offset = 0x4, fixed_abs, tag = 'smem constant byte address 0x4 - core index']
  #allocation1 [shape = 'u32[72,128]{1,0:T(1,128)}', space=vmem, size = 0x9000, scoped, tag = 'internal scratch']
  %s0 = inlined_call_operand.vmem [shape: f32[480,196], index: 0, kind: input, shape index: {}]
  %s1 = inlined_call_operand.vmem [shape: f32[480,1], index: 1, kind: input, shape index: {}]
  %s2 = inlined_call_operand.vmem [shape: bf16[160,480], index: 2, kind: input, shape index: {}]
  %s3 = inlined_call_operand.vmem [shape: f32[160,1], index: 3, kind: input, shape index: {}]
  %s4 = inlined_call_operand.vmem [shape: f32[160,1], index: 4, kind: input, shape index: {}]
  %s5 = inlined_call_operand.vmem [shape: bf16[960,160], index: 5, kind: input, shape index: {}]
  %s6 = inlined_call_operand.vmem [shape: f32[960,196], index: 6, kind: output, shape index: {}]
  %s7 = sld [smem:[#allocation0]]
  $region57: #{tpu_custom_call.1} parent=0
    _
  %s9 = ssub.s32 1, %s7
  %s10 = scalar_select 0, %s9, %s7
  loop: start=0, step=1, limit=4
  $region2: #{tpu_custom_call.1} parent=0 // loop_pre_header
    _
  $region3: #{tpu_custom_call.1} parent=0 // loop_header
    %s12 = sphi 0, %s16
    %p13 = scmp.ge.s32.totalorder %s12, 4
    %s20 = sphi 0, %s20
    %s22 = sphi 0, %s20
    %s23 = sphi 0, %s22
    %s37 = sphi 0, %s23
    %s41 = sphi 0, %s41
    %s43 = sphi 0, %s41
    %s44 = sphi 0, %s43
    %s58 = sphi 0, %s44
    %s62 = sphi 0, %s62
    %s64 = sphi 0, %s62
    %s65 = sphi 0, %s64
    %s79 = sphi 0, %s65
    %s83 = sphi 0, %s83
    %s85 = sphi 0, %s83
    %s86 = sphi 0, %s85
    %s100 = sphi 0, %s86
    %s104 = sphi 0, %s104
    %s106 = sphi 0, %s104
    %s107 = sphi 0, %s106
    %s121 = sphi 0, %s107
    %s127 = sphi 0, %s129
    %s130 = sphi 0, %s127
    %s131 = sphi 0, %s130
    %s147 = sphi 0, %s131
    %s153 = sphi 0, %s155
    %s156 = sphi 0, %s153
    %s157 = sphi 0, %s156
    %s173 = sphi 0, %s157
  $region4: #{tpu_custom_call.1} parent=0 // loop_header_branch
    %15 = sbr.rel (%p13) target = $region8
  $region5: #{tpu_custom_call.1} parent=0 // loop_body
    %s17 = ssub.s32 %s12, 1
    %s18 = ssub.s32 %s12, 2
    %s19 = sadd.s32 %s12, 1
    %s21 = sadd.s32 %s20, 1
    %p24 = scmp.eq.s32.totalorder %s12, 1
    %p25 = scmp.ne.s32.totalorder %s20, %s22
    %p26 = scmp.eq.s32.totalorder %s12, 0
    %p27 = por %p25, %p26
    %p28 = scmp.ne.s32.totalorder %s20, %s22
    %p29 = scmp.eq.s32.totalorder %s17, 1
    %p30 = por %p28, %p29
    %p31 = scmp.ne.s32.totalorder %s22, %s23
    %p32 = scmp.eq.s32.totalorder %s17, 0
    %p33 = por %p31, %p32
    %p34 = scmp.ne.s32.totalorder %s22, %s23
    %p35 = scmp.eq.s32.totalorder %s18, 1
    %p36 = por %p34, %p35
    %p38 = scmp.ne.s32.totalorder %s23, %s37
    %p39 = scmp.eq.s32.totalorder %s18, 0
    %p40 = por %p38, %p39
    %s42 = sadd.s32 %s41, 1
    %p45 = scmp.eq.s32.totalorder %s12, 1
    %p46 = scmp.ne.s32.totalorder %s41, %s43
    %p47 = scmp.eq.s32.totalorder %s12, 0
    %p48 = por %p46, %p47
    %p49 = scmp.ne.s32.totalorder %s41, %s43
    %p50 = scmp.eq.s32.totalorder %s17, 1
    %p51 = por %p49, %p50
    %p52 = scmp.ne.s32.totalorder %s43, %s44
    %p53 = scmp.eq.s32.totalorder %s17, 0
    %p54 = por %p52, %p53
    %p55 = scmp.ne.s32.totalorder %s43, %s44
    %p56 = scmp.eq.s32.totalorder %s18, 1
    %p57 = por %p55, %p56
    %p59 = scmp.ne.s32.totalorder %s44, %s58
    %p60 = scmp.eq.s32.totalorder %s18, 0
    %p61 = por %p59, %p60
    %s63 = sadd.s32 %s62, 1
    %p66 = scmp.eq.s32.totalorder %s12, 1
    %p67 = scmp.ne.s32.totalorder %s62, %s64
    %p68 = scmp.eq.s32.totalorder %s12, 0
    %p69 = por %p67, %p68
    %p70 = scmp.ne.s32.totalorder %s62, %s64
    %p71 = scmp.eq.s32.totalorder %s17, 1
    %p72 = por %p70, %p71
    %p73 = scmp.ne.s32.totalorder %s64, %s65
    %p74 = scmp.eq.s32.totalorder %s17, 0
    %p75 = por %p73, %p74
    %p76 = scmp.ne.s32.totalorder %s64, %s65
    %p77 = scmp.eq.s32.totalorder %s18, 1
    %p78 = por %p76, %p77
    %p80 = scmp.ne.s32.totalorder %s65, %s79
    %p81 = scmp.eq.s32.totalorder %s18, 0
    %p82 = por %p80, %p81
    %s84 = sadd.s32 %s83, 1
    %p87 = scmp.eq.s32.totalorder %s12, 1
    %p88 = scmp.ne.s32.totalorder %s83, %s85
    %p89 = scmp.eq.s32.totalorder %s12, 0
    %p90 = por %p88, %p89
    %p91 = scmp.ne.s32.totalorder %s83, %s85
    %p92 = scmp.eq.s32.totalorder %s17, 1
    %p93 = por %p91, %p92
    %p94 = scmp.ne.s32.totalorder %s85, %s86
    %p95 = scmp.eq.s32.totalorder %s17, 0
    %p96 = por %p94, %p95
    %p97 = scmp.ne.s32.totalorder %s85, %s86
    %p98 = scmp.eq.s32.totalorder %s18, 1
    %p99 = por %p97, %p98
    %p101 = scmp.ne.s32.totalorder %s86, %s100
    %p102 = scmp.eq.s32.totalorder %s18, 0
    %p103 = por %p101, %p102
    %s105 = sadd.s32 %s104, 1
    %p108 = scmp.eq.s32.totalorder %s12, 1
    %p109 = scmp.ne.s32.totalorder %s104, %s106
    %p110 = scmp.eq.s32.totalorder %s12, 0
    %p111 = por %p109, %p110
    %p112 = scmp.ne.s32.totalorder %s104, %s106
    %p113 = scmp.eq.s32.totalorder %s17, 1
    %p114 = por %p112, %p113
    %p115 = scmp.ne.s32.totalorder %s106, %s107
    %p116 = scmp.eq.s32.totalorder %s17, 0
    %p117 = por %p115, %p116
    %p118 = scmp.ne.s32.totalorder %s106, %s107
    %p119 = scmp.eq.s32.totalorder %s18, 1
    %p120 = por %p118, %p119
    %p122 = scmp.ne.s32.totalorder %s107, %s121
    %p123 = scmp.eq.s32.totalorder %s18, 0
    %p124 = por %p122, %p123
    %s125 = ssub.s32 %s12, %s19
    %p126 = scmp.eq.s32.totalorder %s125, 0
    %s128 = sadd.s32 %s127, 1
    %s129 = scalar_select %p126, %s127, %s128
    %p132 = pneg %p126
    %p133 = scmp.eq.s32.totalorder %s12, 1
    %p134 = por %p132, %p133
    %p135 = scmp.ne.s32.totalorder %s127, %s130
    %p136 = scmp.eq.s32.totalorder %s12, 0
    %p137 = por %p135, %p136
    %p138 = scmp.ne.s32.totalorder %s127, %s130
    %p139 = scmp.eq.s32.totalorder %s17, 1
    %p140 = por %p138, %p139
    %p141 = scmp.ne.s32.totalorder %s130, %s131
    %p142 = scmp.eq.s32.totalorder %s17, 0
    %p143 = por %p141, %p142
    %p144 = scmp.ne.s32.totalorder %s130, %s131
    %p145 = scmp.eq.s32.totalorder %s18, 1
    %p146 = por %p144, %p145
    %p148 = scmp.ne.s32.totalorder %s131, %s147
    %p149 = scmp.eq.s32.totalorder %s18, 0
    %p150 = por %p148, %p149
    %s151 = ssub.s32 %s12, %s19
    %p152 = scmp.eq.s32.totalorder %s151, 0
    %s154 = sadd.s32 %s153, 1
    %s155 = scalar_select %p152, %s153, %s154
    %p158 = pneg %p152
    %p159 = scmp.eq.s32.totalorder %s12, 1
    %p160 = por %p158, %p159
    %p161 = scmp.ne.s32.totalorder %s153, %s156
    %p162 = scmp.eq.s32.totalorder %s12, 0
    %p163 = por %p161, %p162
    %p164 = scmp.ne.s32.totalorder %s153, %s156
    %p165 = scmp.eq.s32.totalorder %s17, 1
    %p166 = por %p164, %p165
    %p167 = scmp.ne.s32.totalorder %s156, %s157
    %p168 = scmp.eq.s32.totalorder %s17, 0
    %p169 = por %p167, %p168
    %p170 = scmp.ne.s32.totalorder %s156, %s157
    %p171 = scmp.eq.s32.totalorder %s18, 1
    %p172 = por %p170, %p171
    %p174 = scmp.ne.s32.totalorder %s157, %s173
    %p175 = scmp.eq.s32.totalorder %s18, 0
    %p176 = por %p174, %p175
    %p177 = scmp.le.s32.totalorder 1, %s12
    %p178 = scmp.lt.s32.totalorder %s12, 3
    %p179 = pnand %p177, %p178
    %p180 = pneg %p179
    // Predicated region
    $region9: #{tpu_custom_call.1} parent=5 // pred_check
      _
    $region10: #{tpu_custom_call.1} parent=5 // pred_check_branch
      %182 = sbr.rel (%p179) target = $region12
    $region11: #{tpu_custom_call.1} parent=5 // pred_region
      %s183 = ssub.s32 %s12, 1
      // Predicated region
      $region13: #{tpu_custom_call.1} parent=11 // pred_check
        %p184 = pneg %p33
      $region14: #{tpu_custom_call.1} parent=11 // pred_check_branch
        %186 = sbr.rel (%p184) target = $region16
      $region15: #{tpu_custom_call.1} parent=11 // pred_region
        _
      $region16: #{tpu_custom_call.1} parent=11 // pred_fallthru
        _
      // Predicated region
      $region17: #{tpu_custom_call.1} parent=11 // pred_check
        %p187 = pneg %p54
      $region18: #{tpu_custom_call.1} parent=11 // pred_check_branch
        %189 = sbr.rel (%p187) target = $region20
      $region19: #{tpu_custom_call.1} parent=11 // pred_region
        _
      $region20: #{tpu_custom_call.1} parent=11 // pred_fallthru
        _
      // Predicated region
      $region21: #{tpu_custom_call.1} parent=11 // pred_check
        %p190 = pneg %p75
      $region22: #{tpu_custom_call.1} parent=11 // pred_check_branch
        %192 = sbr.rel (%p190) target = $region24
      $region23: #{tpu_custom_call.1} parent=11 // pred_region
        _
      $region24: #{tpu_custom_call.1} parent=11 // pred_fallthru
        _
      // Predicated region
      $region25: #{tpu_custom_call.1} parent=11 // pred_check
        %p193 = pneg %p96
      $region26: #{tpu_custom_call.1} parent=11 // pred_check_branch
        %195 = sbr.rel (%p193) target = $region28
      $region27: #{tpu_custom_call.1} parent=11 // pred_region
        _
      $region28: #{tpu_custom_call.1} parent=11 // pred_fallthru
        _
      // Predicated region
      $region29: #{tpu_custom_call.1} parent=11 // pred_check
        %p196 = pneg %p117
      $region30: #{tpu_custom_call.1} parent=11 // pred_check_branch
        %198 = sbr.rel (%p196) target = $region32
      $region31: #{tpu_custom_call.1} parent=11 // pred_region
        _
      $region32: #{tpu_custom_call.1} parent=11 // pred_fallthru
        _
    $region12: #{tpu_custom_call.1} parent=5 // pred_fallthru
      _
    %p199 = scmp.lt.s32.totalorder %s12, 2
    // Predicated region
    $region33: #{tpu_custom_call.1} parent=5 // pred_check
      %p200 = pneg %p199
    $region34: #{tpu_custom_call.1} parent=5 // pred_check_branch
      %202 = sbr.rel (%p200) target = $region36
    $region35: #{tpu_custom_call.1} parent=5 // pred_region
      // Predicated region
      $region37: #{tpu_custom_call.1} parent=35 // pred_check
        %p203 = pneg %p137
      $region38: #{tpu_custom_call.1} parent=35 // pred_check_branch
        %205 = sbr.rel (%p203) target = $region40
      $region39: #{tpu_custom_call.1} parent=35 // pred_region
        %s206 = smul.u32 60, %s12
        %p207 = scmp.lt.s32.totalorder %s206, 119
        %s208 = scalar_select %p207, %s206, 119
        %s209 = smul.addr %s208, 2
        %s210 = smul.addr %s209, 4
        %s211 = scalar_lea.vmem %s5, %s210
        %s212 = smul.u32 60, %s12
      $region40: #{tpu_custom_call.1} parent=35 // pred_fallthru
        _
    $region36: #{tpu_custom_call.1} parent=5 // pred_fallthru
      _
    %p213 = scmp.le.s32.totalorder 1, %s12
    %p214 = scmp.lt.s32.totalorder %s12, 3
    %p215 = pnand %p213, %p214
    %p216 = pneg %p215
    // Predicated region
    $region41: #{tpu_custom_call.1} parent=5 // pred_check
      _
    $region42: #{tpu_custom_call.1} parent=5 // pred_check_branch
      %218 = sbr.rel (%p215) target = $region44
    $region43: #{tpu_custom_call.1} parent=5 // pred_region
      %s219 = ssub.s32 %s12, 1
      %p220 = pneg %p33
      %p221 = pneg %p30
      %p222 = pneg %p54
      %p223 = pneg %p51
      %p224 = pneg %p75
      %p225 = pneg %p72
      %p226 = pneg %p96
      %p227 = pneg %p93
      %p228 = pneg %p117
      %p229 = pneg %p114
      %s230 = smul.u32 60, %s17
      %p231 = scmp.lt.s32.totalorder %s230, 119
      %s232 = scalar_select %p231, %s230, 119
      %s233 = smul.addr %s232, 2
      %s234 = smul.addr %s233, 4
      %s235 = scalar_lea.vmem %s5, %s234
      %p236 = pneg %p143
      %p237 = pneg %p140
      %p238 = pneg %p169
      %p239 = pneg %p166
      %s240 = smul.u32 60, %s17
      %p241 = scmp.lt.s32.totalorder %s240, 119
      %s242 = scalar_select %p241, %s240, 119
      %s243 = smul.addr %s242, 2
      %s244 = smul.addr %s243, 8
      %s245 = scalar_lea.vmem %s6, %s244
      %s246 = smul.u32 60, %s17
      %p247 = scmp.lt.s32.totalorder %s246, 119
      %s248 = scalar_select %p247, %s246, 119
      %s249 = smul.addr %s248, 2
      %s250 = smul.addr %s249, 4
      %s251 = scalar_lea.vmem %s5, %s250
      %s252 = smul.u32 60, %s17
      %s253 = smul.u32 60, %s17
      %p254 = scmp.lt.s32.totalorder %s253, 119
      %s255 = scalar_select %p254, %s253, 119
      %s256 = smul.addr %s255, 2
      %s257 = smul.addr %s256, 8
      %s258 = scalar_lea.vmem %s6, %s257
      %s259 = smul.u32 60, %s17
      %v261 = vld [vmem:[%s1] sm:$0xff]
      %v262 = vld [vmem:[%s1 + $0x8] sm:$0xff]
      %v263 = vld [vmem:[%s1 + $0x10] sm:$0xff]
      %v264 = vld [vmem:[%s1 + $0x18] sm:$0xff]
      %v265 = vld [vmem:[%s1 + $0x20] sm:$0xff]
      %v266 = vld [vmem:[%s1 + $0x28] sm:$0xff]
      %v267 = vld [vmem:[%s1 + $0x30] sm:$0xff]
      %v268 = vld [vmem:[%s1 + $0x38] sm:$0xff]
      %v269 = vld [vmem:[%s1 + $0x40] sm:$0xff]
      %v270 = vld [vmem:[%s1 + $0x48] sm:$0xff]
      %v271 = vld [vmem:[%s1 + $0x50] sm:$0xff]
      %v272 = vld [vmem:[%s1 + $0x58] sm:$0xff]
      %v273 = vld [vmem:[%s1 + $0x60] sm:$0xff]
      %v274 = vld [vmem:[%s1 + $0x68] sm:$0xff]
      %v275 = vld [vmem:[%s1 + $0x70] sm:$0xff]
      %v276 = vld [vmem:[%s1 + $0x78] sm:$0xff]
      %v277 = vld [vmem:[%s1 + $0x80] sm:$0xff]
      %v278 = vld [vmem:[%s1 + $0x88] sm:$0xff]
      %v279 = vld [vmem:[%s1 + $0x90] sm:$0xff]
      %v280 = vld [vmem:[%s1 + $0x98] sm:$0xff]
      %v281 = vld [vmem:[%s1 + $0xa0] sm:$0xff]
      %v282 = vld [vmem:[%s1 + $0xa8] sm:$0xff]
      %v283 = vld [vmem:[%s1 + $0xb0] sm:$0xff]
      %v284 = vld [vmem:[%s1 + $0xb8] sm:$0xff]
      %v285 = vld [vmem:[%s1 + $0xc0] sm:$0xff]
      %v286 = vld [vmem:[%s1 + $0xc8] sm:$0xff]
      %v287 = vld [vmem:[%s1 + $0xd0] sm:$0xff]
      %v288 = vld [vmem:[%s1 + $0xd8] sm:$0xff]
      %v289 = vld [vmem:[%s1 + $0xe0] sm:$0xff]
      %v290 = vld [vmem:[%s1 + $0xe8] sm:$0xff]
      %v291 = vld [vmem:[%s1 + $0xf0] sm:$0xff]
      %v292 = vld [vmem:[%s1 + $0xf8] sm:$0xff]
      %v293 = vld [vmem:[%s1 + $0x100] sm:$0xff]
      %v294 = vld [vmem:[%s1 + $0x108] sm:$0xff]
      %v295 = vld [vmem:[%s1 + $0x110] sm:$0xff]
      %v296 = vld [vmem:[%s1 + $0x118] sm:$0xff]
      %v297 = vld [vmem:[%s1 + $0x120] sm:$0xff]
      %v298 = vld [vmem:[%s1 + $0x128] sm:$0xff]
      %v299 = vld [vmem:[%s1 + $0x130] sm:$0xff]
      %v300 = vld [vmem:[%s1 + $0x138] sm:$0xff]
      %v301 = vld [vmem:[%s1 + $0x140] sm:$0xff]
      %v302 = vld [vmem:[%s1 + $0x148] sm:$0xff]
      %v303 = vld [vmem:[%s1 + $0x150] sm:$0xff]
      %v304 = vld [vmem:[%s1 + $0x158] sm:$0xff]
      %v305 = vld [vmem:[%s1 + $0x160] sm:$0xff]
      %v306 = vld [vmem:[%s1 + $0x168] sm:$0xff]
      %v307 = vld [vmem:[%s1 + $0x170] sm:$0xff]
      %v308 = vld [vmem:[%s1 + $0x178] sm:$0xff]
      %v309 = vld [vmem:[%s1 + $0x180] sm:$0xff]
      %v310 = vld [vmem:[%s1 + $0x188] sm:$0xff]
      %v311 = vld [vmem:[%s1 + $0x190] sm:$0xff]
      %v312 = vld [vmem:[%s1 + $0x198] sm:$0xff]
      %v313 = vld [vmem:[%s1 + $0x1a0] sm:$0xff]
      %v314 = vld [vmem:[%s1 + $0x1a8] sm:$0xff]
      %v315 = vld [vmem:[%s1 + $0x1b0] sm:$0xff]
      %v316 = vld [vmem:[%s1 + $0x1b8] sm:$0xff]
      %v317 = vld [vmem:[%s1 + $0x1c0] sm:$0xff]
      %v318 = vld [vmem:[%s1 + $0x1c8] sm:$0xff]
      %v319 = vld [vmem:[%s1 + $0x1d0] sm:$0xff]
      %v320 = vld [vmem:[%s1 + $0x1d8] sm:$0xff]
      %v321 = vxor.u32 %v261, 2147483648
      %v322 = vxor.u32 %v262, 2147483648
      %v323 = vxor.u32 %v263, 2147483648
      %v324 = vxor.u32 %v264, 2147483648
      %v325 = vxor.u32 %v265, 2147483648
      %v326 = vxor.u32 %v266, 2147483648
      %v327 = vxor.u32 %v267, 2147483648
      %v328 = vxor.u32 %v268, 2147483648
      %v329 = vxor.u32 %v269, 2147483648
      %v330 = vxor.u32 %v270, 2147483648
      %v331 = vxor.u32 %v271, 2147483648
      %v332 = vxor.u32 %v272, 2147483648
      %v333 = vxor.u32 %v273, 2147483648
      %v334 = vxor.u32 %v274, 2147483648
      %v335 = vxor.u32 %v275, 2147483648
      %v336 = vxor.u32 %v276, 2147483648
      %v337 = vxor.u32 %v277, 2147483648
      %v338 = vxor.u32 %v278, 2147483648
      %v339 = vxor.u32 %v279, 2147483648
      %v340 = vxor.u32 %v280, 2147483648
      %v341 = vxor.u32 %v281, 2147483648
      %v342 = vxor.u32 %v282, 2147483648
      %v343 = vxor.u32 %v283, 2147483648
      %v344 = vxor.u32 %v284, 2147483648
      %v345 = vxor.u32 %v285, 2147483648
      %v346 = vxor.u32 %v286, 2147483648
      %v347 = vxor.u32 %v287, 2147483648
      %v348 = vxor.u32 %v288, 2147483648
      %v349 = vxor.u32 %v289, 2147483648
      %v350 = vxor.u32 %v290, 2147483648
      %v351 = vxor.u32 %v291, 2147483648
      %v352 = vxor.u32 %v292, 2147483648
      %v353 = vxor.u32 %v293, 2147483648
      %v354 = vxor.u32 %v294, 2147483648
      %v355 = vxor.u32 %v295, 2147483648
      %v356 = vxor.u32 %v296, 2147483648
      %v357 = vxor.u32 %v297, 2147483648
      %v358 = vxor.u32 %v298, 2147483648
      %v359 = vxor.u32 %v299, 2147483648
      %v360 = vxor.u32 %v300, 2147483648
      %v361 = vxor.u32 %v301, 2147483648
      %v362 = vxor.u32 %v302, 2147483648
      %v363 = vxor.u32 %v303, 2147483648
      %v364 = vxor.u32 %v304, 2147483648
      %v365 = vxor.u32 %v305, 2147483648
      %v366 = vxor.u32 %v306, 2147483648
      %v367 = vxor.u32 %v307, 2147483648
      %v368 = vxor.u32 %v308, 2147483648
      %v369 = vxor.u32 %v309, 2147483648
      %v370 = vxor.u32 %v310, 2147483648
      %v371 = vxor.u32 %v311, 2147483648
      %v372 = vxor.u32 %v312, 2147483648
      %v373 = vxor.u32 %v313, 2147483648
      %v374 = vxor.u32 %v314, 2147483648
      %v375 = vxor.u32 %v315, 2147483648
      %v376 = vxor.u32 %v316, 2147483648
      %v377 = vxor.u32 %v317, 2147483648
      %v378 = vxor.u32 %v318, 2147483648
      %v379 = vxor.u32 %v319, 2147483648
      %v380 = vxor.u32 %v320, 2147483648
      %v381 = vmul.f32 %v321, 1.442695
      %v382 = vpow.pop %v381
      %v383 = vmul.f32 %v322, 1.442695
      %v384 = vpow.pop %v383
      %v385 = vmul.f32 %v323, 1.442695
      %v386 = vpow.pop %v385
      %v387 = vmul.f32 %v324, 1.442695
      %v388 = vpow.pop %v387
      %v389 = vmul.f32 %v325, 1.442695
      %v390 = vpow.pop %v389
      %v391 = vmul.f32 %v326, 1.442695
      %v392 = vpow.pop %v391
      %v393 = vmul.f32 %v327, 1.442695
      %v394 = vpow.pop %v393
      %v395 = vmul.f32 %v328, 1.442695
      %v396 = vpow.pop %v395
      %v397 = vmul.f32 %v329, 1.442695
      %v398 = vpow.pop %v397
      %v399 = vmul.f32 %v330, 1.442695
      %v400 = vpow.pop %v399
      %v401 = vmul.f32 %v331, 1.442695
      %v402 = vpow.pop %v401
      %v403 = vmul.f32 %v332, 1.442695
      %v404 = vpow.pop %v403
      %v405 = vmul.f32 %v333, 1.442695
      %v406 = vpow.pop %v405
      %v407 = vmul.f32 %v334, 1.442695
      %v408 = vpow.pop %v407
      %v409 = vmul.f32 %v335, 1.442695
      %v410 = vpow.pop %v409
      %v411 = vmul.f32 %v336, 1.442695
      %v412 = vpow.pop %v411
      %v413 = vmul.f32 %v337, 1.442695
      %v414 = vpow.pop %v413
      %v415 = vmul.f32 %v338, 1.442695
      %v416 = vpow.pop %v415
      %v417 = vmul.f32 %v339, 1.442695
      %v418 = vpow.pop %v417
      %v419 = vmul.f32 %v340, 1.442695
      %v420 = vpow.pop %v419
      %v421 = vmul.f32 %v341, 1.442695
      %v422 = vpow.pop %v421
      %v423 = vmul.f32 %v342, 1.442695
      %v424 = vpow.pop %v423
      %v425 = vmul.f32 %v343, 1.442695
      %v426 = vpow.pop %v425
      %v427 = vmul.f32 %v344, 1.442695
      %v428 = vpow.pop %v427
      %v429 = vmul.f32 %v345, 1.442695
      %v430 = vpow.pop %v429
      %v431 = vmul.f32 %v346, 1.442695
      %v432 = vpow.pop %v431
      %v433 = vmul.f32 %v347, 1.442695
      %v434 = vpow.pop %v433
      %v435 = vmul.f32 %v348, 1.442695
      %v436 = vpow.pop %v435
      %v437 = vmul.f32 %v349, 1.442695
      %v438 = vpow.pop %v437
      %v439 = vmul.f32 %v350, 1.442695
      %v440 = vpow.pop %v439
      %v441 = vmul.f32 %v351, 1.442695
      %v442 = vpow.pop %v441
      %v443 = vmul.f32 %v352, 1.442695
      %v444 = vpow.pop %v443
      %v445 = vmul.f32 %v353, 1.442695
      %v446 = vpow.pop %v445
      %v447 = vmul.f32 %v354, 1.442695
      %v448 = vpow.pop %v447
      %v449 = vmul.f32 %v355, 1.442695
      %v450 = vpow.pop %v449
      %v451 = vmul.f32 %v356, 1.442695
      %v452 = vpow.pop %v451
      %v453 = vmul.f32 %v357, 1.442695
      %v454 = vpow.pop %v453
      %v455 = vmul.f32 %v358, 1.442695
      %v456 = vpow.pop %v455
      %v457 = vmul.f32 %v359, 1.442695
      %v458 = vpow.pop %v457
      %v459 = vmul.f32 %v360, 1.442695
      %v460 = vpow.pop %v459
      %v461 = vmul.f32 %v361, 1.442695
      %v462 = vpow.pop %v461
      %v463 = vmul.f32 %v362, 1.442695
      %v464 = vpow.pop %v463
      %v465 = vmul.f32 %v363, 1.442695
      %v466 = vpow.pop %v465
      %v467 = vmul.f32 %v364, 1.442695
      %v468 = vpow.pop %v467
      %v469 = vmul.f32 %v365, 1.442695
      %v470 = vpow.pop %v469
      %v471 = vmul.f32 %v366, 1.442695
      %v472 = vpow.pop %v471
      %v473 = vmul.f32 %v367, 1.442695
      %v474 = vpow.pop %v473
      %v475 = vmul.f32 %v368, 1.442695
      %v476 = vpow.pop %v475
      %v477 = vmul.f32 %v369, 1.442695
      %v478 = vpow.pop %v477
      %v479 = vmul.f32 %v370, 1.442695
      %v480 = vpow.pop %v479
      %v481 = vmul.f32 %v371, 1.442695
      %v482 = vpow.pop %v481
      %v483 = vmul.f32 %v372, 1.442695
      %v484 = vpow.pop %v483
      %v485 = vmul.f32 %v373, 1.442695
      %v486 = vpow.pop %v485
      %v487 = vmul.f32 %v374, 1.442695
      %v488 = vpow.pop %v487
      %v489 = vmul.f32 %v375, 1.442695
      %v490 = vpow.pop %v489
      %v491 = vmul.f32 %v376, 1.442695
      %v492 = vpow.pop %v491
      %v493 = vmul.f32 %v377, 1.442695
      %v494 = vpow.pop %v493
      %v495 = vmul.f32 %v378, 1.442695
      %v496 = vpow.pop %v495
      %v497 = vmul.f32 %v379, 1.442695
      %v498 = vpow.pop %v497
      %v499 = vmul.f32 %v380, 1.442695
      %v500 = vpow.pop %v499
      %v501 = vadd.f32 %v382, 1.0
      %v502 = vadd.f32 %v384, 1.0
      %v503 = vadd.f32 %v386, 1.0
      %v504 = vadd.f32 %v388, 1.0
      %v505 = vadd.f32 %v390, 1.0
      %v506 = vadd.f32 %v392, 1.0
      %v507 = vadd.f32 %v394, 1.0
      %v508 = vadd.f32 %v396, 1.0
      %v509 = vadd.f32 %v398, 1.0
      %v510 = vadd.f32 %v400, 1.0
      %v511 = vadd.f32 %v402, 1.0
      %v512 = vadd.f32 %v404, 1.0
      %v513 = vadd.f32 %v406, 1.0
      %v514 = vadd.f32 %v408, 1.0
      %v515 = vadd.f32 %v410, 1.0
      %v516 = vadd.f32 %v412, 1.0
      %v517 = vadd.f32 %v414, 1.0
      %v518 = vadd.f32 %v416, 1.0
      %v519 = vadd.f32 %v418, 1.0
      %v520 = vadd.f32 %v420, 1.0
      %v521 = vadd.f32 %v422, 1.0
      %v522 = vadd.f32 %v424, 1.0
      %v523 = vadd.f32 %v426, 1.0
      %v524 = vadd.f32 %v428, 1.0
      %v525 = vadd.f32 %v430, 1.0
      %v526 = vadd.f32 %v432, 1.0
      %v527 = vadd.f32 %v434, 1.0
      %v528 = vadd.f32 %v436, 1.0
      %v529 = vadd.f32 %v438, 1.0
      %v530 = vadd.f32 %v440, 1.0
      %v531 = vadd.f32 %v442, 1.0
      %v532 = vadd.f32 %v444, 1.0
      %v533 = vadd.f32 %v446, 1.0
      %v534 = vadd.f32 %v448, 1.0
      %v535 = vadd.f32 %v450, 1.0
      %v536 = vadd.f32 %v452, 1.0
      %v537 = vadd.f32 %v454, 1.0
      %v538 = vadd.f32 %v456, 1.0
      %v539 = vadd.f32 %v458, 1.0
      %v540 = vadd.f32 %v460, 1.0
      %v541 = vadd.f32 %v462, 1.0
      %v542 = vadd.f32 %v464, 1.0
      %v543 = vadd.f32 %v466, 1.0
      %v544 = vadd.f32 %v468, 1.0
      %v545 = vadd.f32 %v470, 1.0
      %v546 = vadd.f32 %v472, 1.0
      %v547 = vadd.f32 %v474, 1.0
      %v548 = vadd.f32 %v476, 1.0
      %v549 = vadd.f32 %v478, 1.0
      %v550 = vadd.f32 %v480, 1.0
      %v551 = vadd.f32 %v482, 1.0
      %v552 = vadd.f32 %v484, 1.0
      %v553 = vadd.f32 %v486, 1.0
      %v554 = vadd.f32 %v488, 1.0
      %v555 = vadd.f32 %v490, 1.0
      %v556 = vadd.f32 %v492, 1.0
      %v557 = vadd.f32 %v494, 1.0
      %v558 = vadd.f32 %v496, 1.0
      %v559 = vadd.f32 %v498, 1.0
      %v560 = vadd.f32 %v500, 1.0
      %v561 = vrcp.pop %v501
      %v562 = vmul.f32 %v501, %v561
      %v563 = vsub.f32 1.0, %v562
      %v564 = vmul.f32 %v561, %v563
      %v565 = vadd.f32 %v561, %v564
      %vm566 = vweird.f32 %v501
      %vm567 = vweird.f32 %v561
      %vm568 = vmor %vm566, %vm567
      %v569 = vsel %vm568, %v561, %v565
      %v570 = vand.u32 2147483647, %v501
      %vm571 = vcmp.eq.f32.partialorder %v570, 8.507059e+37
      %v572 = vand.u32 %v501, 2147483648
      %v573 = vor.u32 1.1754944e-38, %v572
      %v574 = vsel %vm571, %v573, %v569
      %v575 = vmul.f32 1.0, %v574
      %v576 = vrcp.pop %v502
      %v577 = vmul.f32 %v502, %v576
      %v578 = vsub.f32 1.0, %v577
      %v579 = vmul.f32 %v576, %v578
      %v580 = vadd.f32 %v576, %v579
      %vm581 = vweird.f32 %v502
      %vm582 = vweird.f32 %v576
      %vm583 = vmor %vm581, %vm582
      %v584 = vsel %vm583, %v576, %v580
      %v585 = vand.u32 2147483647, %v502
      %vm586 = vcmp.eq.f32.partialorder %v585, 8.507059e+37
      %v587 = vand.u32 %v502, 2147483648
      %v588 = vor.u32 1.1754944e-38, %v587
      %v589 = vsel %vm586, %v588, %v584
      %v590 = vmul.f32 1.0, %v589
      %v591 = vrcp.pop %v503
      %v592 = vmul.f32 %v503, %v591
      %v593 = vsub.f32 1.0, %v592
      %v594 = vmul.f32 %v591, %v593
      %v595 = vadd.f32 %v591, %v594
      %vm596 = vweird.f32 %v503
      %vm597 = vweird.f32 %v591
      %vm598 = vmor %vm596, %vm597
      %v599 = vsel %vm598, %v591, %v595
      %v600 = vand.u32 2147483647, %v503
      %vm601 = vcmp.eq.f32.partialorder %v600, 8.507059e+37
      %v602 = vand.u32 %v503, 2147483648
      %v603 = vor.u32 1.1754944e-38, %v602
      %v604 = vsel %vm601, %v603, %v599
      %v605 = vmul.f32 1.0, %v604
      %v606 = vrcp.pop %v504
      %v607 = vmul.f32 %v504, %v606
      %v608 = vsub.f32 1.0, %v607
      %v609 = vmul.f32 %v606, %v608
      %v610 = vadd.f32 %v606, %v609
      %vm611 = vweird.f32 %v504
      %vm612 = vweird.f32 %v606
      %vm613 = vmor %vm611, %vm612
      %v614 = vsel %vm613, %v606, %v610
      %v615 = vand.u32 2147483647, %v504
      %vm616 = vcmp.eq.f32.partialorder %v615, 8.507059e+37
      %v617 = vand.u32 %v504, 2147483648
      %v618 = vor.u32 1.1754944e-38, %v617
      %v619 = vsel %vm616, %v618, %v614
      %v620 = vmul.f32 1.0, %v619
      %v621 = vrcp.pop %v505
      %v622 = vmul.f32 %v505, %v621
      %v623 = vsub.f32 1.0, %v622
      %v624 = vmul.f32 %v621, %v623
      %v625 = vadd.f32 %v621, %v624
      %vm626 = vweird.f32 %v505
      %vm627 = vweird.f32 %v621
      %vm628 = vmor %vm626, %vm627
      %v629 = vsel %vm628, %v621, %v625
      %v630 = vand.u32 2147483647, %v505
      %vm631 = vcmp.eq.f32.partialorder %v630, 8.507059e+37
      %v632 = vand.u32 %v505, 2147483648
      %v633 = vor.u32 1.1754944e-38, %v632
      %v634 = vsel %vm631, %v633, %v629
      %v635 = vmul.f32 1.0, %v634
      %v636 = vrcp.pop %v506
      %v637 = vmul.f32 %v506, %v636
      %v638 = vsub.f32 1.0, %v637
      %v639 = vmul.f32 %v636, %v638
      %v640 = vadd.f32 %v636, %v639
      %vm641 = vweird.f32 %v506
      %vm642 = vweird.f32 %v636
      %vm643 = vmor %vm641, %vm642
      %v644 = vsel %vm643, %v636, %v640
      %v645 = vand.u32 2147483647, %v506
      %vm646 = vcmp.eq.f32.partialorder %v645, 8.507059e+37
      %v647 = vand.u32 %v506, 2147483648
      %v648 = vor.u32 1.1754944e-38, %v647
      %v649 = vsel %vm646, %v648, %v644
      %v650 = vmul.f32 1.0, %v649
      %v651 = vrcp.pop %v507
      %v652 = vmul.f32 %v507, %v651
      %v653 = vsub.f32 1.0, %v652
      %v654 = vmul.f32 %v651, %v653
      %v655 = vadd.f32 %v651, %v654
      %vm656 = vweird.f32 %v507
      %vm657 = vweird.f32 %v651
      %vm658 = vmor %vm656, %vm657
      %v659 = vsel %vm658, %v651, %v655
      %v660 = vand.u32 2147483647, %v507
      %vm661 = vcmp.eq.f32.partialorder %v660, 8.507059e+37
      %v662 = vand.u32 %v507, 2147483648
      %v663 = vor.u32 1.1754944e-38, %v662
      %v664 = vsel %vm661, %v663, %v659
      %v665 = vmul.f32 1.0, %v664
      %v666 = vrcp.pop %v508
      %v667 = vmul.f32 %v508, %v666
      %v668 = vsub.f32 1.0, %v667
      %v669 = vmul.f32 %v666, %v668
      %v670 = vadd.f32 %v666, %v669
      %vm671 = vweird.f32 %v508
      %vm672 = vweird.f32 %v666
      %vm673 = vmor %vm671, %vm672
      %v674 = vsel %vm673, %v666, %v670
      %v675 = vand.u32 2147483647, %v508
      %vm676 = vcmp.eq.f32.partialorder %v675, 8.507059e+37
      %v677 = vand.u32 %v508, 2147483648
      %v678 = vor.u32 1.1754944e-38, %v677
      %v679 = vsel %vm676, %v678, %v674
      %v680 = vmul.f32 1.0, %v679
      %v681 = vrcp.pop %v509
      %v682 = vmul.f32 %v509, %v681
      %v683 = vsub.f32 1.0, %v682
      %v684 = vmul.f32 %v681, %v683
      %v685 = vadd.f32 %v681, %v684
      %vm686 = vweird.f32 %v509
      %vm687 = vweird.f32 %v681
      %vm688 = vmor %vm686, %vm687
      %v689 = vsel %vm688, %v681, %v685
      %v690 = vand.u32 2147483647, %v509
      %vm691 = vcmp.eq.f32.partialorder %v690, 8.507059e+37
      %v692 = vand.u32 %v509, 2147483648
      %v693 = vor.u32 1.1754944e-38, %v692
      %v694 = vsel %vm691, %v693, %v689
      %v695 = vmul.f32 1.0, %v694
      %v696 = vrcp.pop %v510
      %v697 = vmul.f32 %v510, %v696
      %v698 = vsub.f32 1.0, %v697
      %v699 = vmul.f32 %v696, %v698
      %v700 = vadd.f32 %v696, %v699
      %vm701 = vweird.f32 %v510
      %vm702 = vweird.f32 %v696
      %vm703 = vmor %vm701, %vm702
      %v704 = vsel %vm703, %v696, %v700
      %v705 = vand.u32 2147483647, %v510
      %vm706 = vcmp.eq.f32.partialorder %v705, 8.507059e+37
      %v707 = vand.u32 %v510, 2147483648
      %v708 = vor.u32 1.1754944e-38, %v707
      %v709 = vsel %vm706, %v708, %v704
      %v710 = vmul.f32 1.0, %v709
      %v711 = vrcp.pop %v511
      %v712 = vmul.f32 %v511, %v711
      %v713 = vsub.f32 1.0, %v712
      %v714 = vmul.f32 %v711, %v713
      %v715 = vadd.f32 %v711, %v714
      %vm716 = vweird.f32 %v511
      %vm717 = vweird.f32 %v711
      %vm718 = vmor %vm716, %vm717
      %v719 = vsel %vm718, %v711, %v715
      %v720 = vand.u32 2147483647, %v511
      %vm721 = vcmp.eq.f32.partialorder %v720, 8.507059e+37
      %v722 = vand.u32 %v511, 2147483648
      %v723 = vor.u32 1.1754944e-38, %v722
      %v724 = vsel %vm721, %v723, %v719
      %v725 = vmul.f32 1.0, %v724
      %v726 = vrcp.pop %v512
      %v727 = vmul.f32 %v512, %v726
      %v728 = vsub.f32 1.0, %v727
      %v729 = vmul.f32 %v726, %v728
      %v730 = vadd.f32 %v726, %v729
      %vm731 = vweird.f32 %v512
      %vm732 = vweird.f32 %v726
      %vm733 = vmor %vm731, %vm732
      %v734 = vsel %vm733, %v726, %v730
      %v735 = vand.u32 2147483647, %v512
      %vm736 = vcmp.eq.f32.partialorder %v735, 8.507059e+37
      %v737 = vand.u32 %v512, 2147483648
      %v738 = vor.u32 1.1754944e-38, %v737
      %v739 = vsel %vm736, %v738, %v734
      %v740 = vmul.f32 1.0, %v739
      %v741 = vrcp.pop %v513
      %v742 = vmul.f32 %v513, %v741
      %v743 = vsub.f32 1.0, %v742
      %v744 = vmul.f32 %v741, %v743
      %v745 = vadd.f32 %v741, %v744
      %vm746 = vweird.f32 %v513
      %vm747 = vweird.f32 %v741
      %vm748 = vmor %vm746, %vm747
      %v749 = vsel %vm748, %v741, %v745
      %v750 = vand.u32 2147483647, %v513
      %vm751 = vcmp.eq.f32.partialorder %v750, 8.507059e+37
      %v752 = vand.u32 %v513, 2147483648
      %v753 = vor.u32 1.1754944e-38, %v752
      %v754 = vsel %vm751, %v753, %v749
      %v755 = vmul.f32 1.0, %v754
      %v756 = vrcp.pop %v514
      %v757 = vmul.f32 %v514, %v756
      %v758 = vsub.f32 1.0, %v757
      %v759 = vmul.f32 %v756, %v758
      %v760 = vadd.f32 %v756, %v759
      %vm761 = vweird.f32 %v514
      %vm762 = vweird.f32 %v756
      %vm763 = vmor %vm761, %vm762
      %v764 = vsel %vm763, %v756, %v760
      %v765 = vand.u32 2147483647, %v514
      %vm766 = vcmp.eq.f32.partialorder %v765, 8.507059e+37
      %v767 = vand.u32 %v514, 2147483648
      %v768 = vor.u32 1.1754944e-38, %v767
      %v769 = vsel %vm766, %v768, %v764
      %v770 = vmul.f32 1.0, %v769
      %v771 = vrcp.pop %v515
      %v772 = vmul.f32 %v515, %v771
      %v773 = vsub.f32 1.0, %v772
      %v774 = vmul.f32 %v771, %v773
      %v775 = vadd.f32 %v771, %v774
      %vm776 = vweird.f32 %v515
      %vm777 = vweird.f32 %v771
      %vm778 = vmor %vm776, %vm777
      %v779 = vsel %vm778, %v771, %v775
      %v780 = vand.u32 2147483647, %v515
      %vm781 = vcmp.eq.f32.partialorder %v780, 8.507059e+37
      %v782 = vand.u32 %v515, 2147483648
      %v783 = vor.u32 1.1754944e-38, %v782
      %v784 = vsel %vm781, %v783, %v779
      %v785 = vmul.f32 1.0, %v784
      %v786 = vrcp.pop %v516
      %v787 = vmul.f32 %v516, %v786
      %v788 = vsub.f32 1.0, %v787
      %v789 = vmul.f32 %v786, %v788
      %v790 = vadd.f32 %v786, %v789
      %vm791 = vweird.f32 %v516
      %vm792 = vweird.f32 %v786
      %vm793 = vmor %vm791, %vm792
      %v794 = vsel %vm793, %v786, %v790
      %v795 = vand.u32 2147483647, %v516
      %vm796 = vcmp.eq.f32.partialorder %v795, 8.507059e+37
      %v797 = vand.u32 %v516, 2147483648
      %v798 = vor.u32 1.1754944e-38, %v797
      %v799 = vsel %vm796, %v798, %v794
      %v800 = vmul.f32 1.0, %v799
      %v801 = vrcp.pop %v517
      %v802 = vmul.f32 %v517, %v801
      %v803 = vsub.f32 1.0, %v802
      %v804 = vmul.f32 %v801, %v803
      %v805 = vadd.f32 %v801, %v804
      %vm806 = vweird.f32 %v517
      %vm807 = vweird.f32 %v801
      %vm808 = vmor %vm806, %vm807
      %v809 = vsel %vm808, %v801, %v805
      %v810 = vand.u32 2147483647, %v517
      %vm811 = vcmp.eq.f32.partialorder %v810, 8.507059e+37
      %v812 = vand.u32 %v517, 2147483648
      %v813 = vor.u32 1.1754944e-38, %v812
      %v814 = vsel %vm811, %v813, %v809
      %v815 = vmul.f32 1.0, %v814
      %v816 = vrcp.pop %v518
      %v817 = vmul.f32 %v518, %v816
      %v818 = vsub.f32 1.0, %v817
      %v819 = vmul.f32 %v816, %v818
      %v820 = vadd.f32 %v816, %v819
      %vm821 = vweird.f32 %v518
      %vm822 = vweird.f32 %v816
      %vm823 = vmor %vm821, %vm822
      %v824 = vsel %vm823, %v816, %v820
      %v825 = vand.u32 2147483647, %v518
      %vm826 = vcmp.eq.f32.partialorder %v825, 8.507059e+37
      %v827 = vand.u32 %v518, 2147483648
      %v828 = vor.u32 1.1754944e-38, %v827
      %v829 = vsel %vm826, %v828, %v824
      %v830 = vmul.f32 1.0, %v829
      %v831 = vrcp.pop %v519
      %v832 = vmul.f32 %v519, %v831
      %v833 = vsub.f32 1.0, %v832
      %v834 = vmul.f32 %v831, %v833
      %v835 = vadd.f32 %v831, %v834
      %vm836 = vweird.f32 %v519
      %vm837 = vweird.f32 %v831
      %vm838 = vmor %vm836, %vm837
      %v839 = vsel %vm838, %v831, %v835
      %v840 = vand.u32 2147483647, %v519
      %vm841 = vcmp.eq.f32.partialorder %v840, 8.507059e+37
      %v842 = vand.u32 %v519, 2147483648
      %v843 = vor.u32 1.1754944e-38, %v842
      %v844 = vsel %vm841, %v843, %v839
      %v845 = vmul.f32 1.0, %v844
      %v846 = vrcp.pop %v520
      %v847 = vmul.f32 %v520, %v846
      %v848 = vsub.f32 1.0, %v847
      %v849 = vmul.f32 %v846, %v848
      %v850 = vadd.f32 %v846, %v849
      %vm851 = vweird.f32 %v520
      %vm852 = vweird.f32 %v846
      %vm853 = vmor %vm851, %vm852
      %v854 = vsel %vm853, %v846, %v850
      %v855 = vand.u32 2147483647, %v520
      %vm856 = vcmp.eq.f32.partialorder %v855, 8.507059e+37
      %v857 = vand.u32 %v520, 2147483648
      %v858 = vor.u32 1.1754944e-38, %v857
      %v859 = vsel %vm856, %v858, %v854
      %v860 = vmul.f32 1.0, %v859
      %v861 = vrcp.pop %v521
      %v862 = vmul.f32 %v521, %v861
      %v863 = vsub.f32 1.0, %v862
      %v864 = vmul.f32 %v861, %v863
      %v865 = vadd.f32 %v861, %v864
      %vm866 = vweird.f32 %v521
      %vm867 = vweird.f32 %v861
      %vm868 = vmor %vm866, %vm867
      %v869 = vsel %vm868, %v861, %v865
      %v870 = vand.u32 2147483647, %v521
      %vm871 = vcmp.eq.f32.partialorder %v870, 8.507059e+37
      %v872 = vand.u32 %v521, 2147483648
      %v873 = vor.u32 1.1754944e-38, %v872
      %v874 = vsel %vm871, %v873, %v869
      %v875 = vmul.f32 1.0, %v874
      %v876 = vrcp.pop %v522
      %v877 = vmul.f32 %v522, %v876
      %v878 = vsub.f32 1.0, %v877
      %v879 = vmul.f32 %v876, %v878
      %v880 = vadd.f32 %v876, %v879
      %vm881 = vweird.f32 %v522
      %vm882 = vweird.f32 %v876
      %vm883 = vmor %vm881, %vm882
      %v884 = vsel %vm883, %v876, %v880
      %v885 = vand.u32 2147483647, %v522
      %vm886 = vcmp.eq.f32.partialorder %v885, 8.507059e+37
      %v887 = vand.u32 %v522, 2147483648
      %v888 = vor.u32 1.1754944e-38, %v887
      %v889 = vsel %vm886, %v888, %v884
      %v890 = vmul.f32 1.0, %v889
      %v891 = vrcp.pop %v523
      %v892 = vmul.f32 %v523, %v891
      %v893 = vsub.f32 1.0, %v892
      %v894 = vmul.f32 %v891, %v893
      %v895 = vadd.f32 %v891, %v894
      %vm896 = vweird.f32 %v523
      %vm897 = vweird.f32 %v891
      %vm898 = vmor %vm896, %vm897
      %v899 = vsel %vm898, %v891, %v895
      %v900 = vand.u32 2147483647, %v523
      %vm901 = vcmp.eq.f32.partialorder %v900, 8.507059e+37
      %v902 = vand.u32 %v523, 2147483648
      %v903 = vor.u32 1.1754944e-38, %v902
      %v904 = vsel %vm901, %v903, %v899
      %v905 = vmul.f32 1.0, %v904
      %v906 = vrcp.pop %v524
      %v907 = vmul.f32 %v524, %v906
      %v908 = vsub.f32 1.0, %v907
      %v909 = vmul.f32 %v906, %v908
      %v910 = vadd.f32 %v906, %v909
      %vm911 = vweird.f32 %v524
      %vm912 = vweird.f32 %v906
      %vm913 = vmor %vm911, %vm912
      %v914 = vsel %vm913, %v906, %v910
      %v915 = vand.u32 2147483647, %v524
      %vm916 = vcmp.eq.f32.partialorder %v915, 8.507059e+37
      %v917 = vand.u32 %v524, 2147483648
      %v918 = vor.u32 1.1754944e-38, %v917
      %v919 = vsel %vm916, %v918, %v914
      %v920 = vmul.f32 1.0, %v919
      %v921 = vrcp.pop %v525
      %v922 = vmul.f32 %v525, %v921
      %v923 = vsub.f32 1.0, %v922
      %v924 = vmul.f32 %v921, %v923
      %v925 = vadd.f32 %v921, %v924
      %vm926 = vweird.f32 %v525
      %vm927 = vweird.f32 %v921
      %vm928 = vmor %vm926, %vm927
      %v929 = vsel %vm928, %v921, %v925
      %v930 = vand.u32 2147483647, %v525
      %vm931 = vcmp.eq.f32.partialorder %v930, 8.507059e+37
      %v932 = vand.u32 %v525, 2147483648
      %v933 = vor.u32 1.1754944e-38, %v932
      %v934 = vsel %vm931, %v933, %v929
      %v935 = vmul.f32 1.0, %v934
      %v936 = vrcp.pop %v526
      %v937 = vmul.f32 %v526, %v936
      %v938 = vsub.f32 1.0, %v937
      %v939 = vmul.f32 %v936, %v938
      %v940 = vadd.f32 %v936, %v939
      %vm941 = vweird.f32 %v526
      %vm942 = vweird.f32 %v936
      %vm943 = vmor %vm941, %vm942
      %v944 = vsel %vm943, %v936, %v940
      %v945 = vand.u32 2147483647, %v526
      %vm946 = vcmp.eq.f32.partialorder %v945, 8.507059e+37
      %v947 = vand.u32 %v526, 2147483648
      %v948 = vor.u32 1.1754944e-38, %v947
      %v949 = vsel %vm946, %v948, %v944
      %v950 = vmul.f32 1.0, %v949
      %v951 = vrcp.pop %v527
      %v952 = vmul.f32 %v527, %v951
      %v953 = vsub.f32 1.0, %v952
      %v954 = vmul.f32 %v951, %v953
      %v955 = vadd.f32 %v951, %v954
      %vm956 = vweird.f32 %v527
      %vm957 = vweird.f32 %v951
      %vm958 = vmor %vm956, %vm957
      %v959 = vsel %vm958, %v951, %v955
      %v960 = vand.u32 2147483647, %v527
      %vm961 = vcmp.eq.f32.partialorder %v960, 8.507059e+37
      %v962 = vand.u32 %v527, 2147483648
      %v963 = vor.u32 1.1754944e-38, %v962
      %v964 = vsel %vm961, %v963, %v959
      %v965 = vmul.f32 1.0, %v964
      %v966 = vrcp.pop %v528
      %v967 = vmul.f32 %v528, %v966
      %v968 = vsub.f32 1.0, %v967
      %v969 = vmul.f32 %v966, %v968
      %v970 = vadd.f32 %v966, %v969
      %vm971 = vweird.f32 %v528
      %vm972 = vweird.f32 %v966
      %vm973 = vmor %vm971, %vm972
      %v974 = vsel %vm973, %v966, %v970
      %v975 = vand.u32 2147483647, %v528
      %vm976 = vcmp.eq.f32.partialorder %v975, 8.507059e+37
      %v977 = vand.u32 %v528, 2147483648
      %v978 = vor.u32 1.1754944e-38, %v977
      %v979 = vsel %vm976, %v978, %v974
      %v980 = vmul.f32 1.0, %v979
      %v981 = vrcp.pop %v529
      %v982 = vmul.f32 %v529, %v981
      %v983 = vsub.f32 1.0, %v982
      %v984 = vmul.f32 %v981, %v983
      %v985 = vadd.f32 %v981, %v984
      %vm986 = vweird.f32 %v529
      %vm987 = vweird.f32 %v981
      %vm988 = vmor %vm986, %vm987
      %v989 = vsel %vm988, %v981, %v985
      %v990 = vand.u32 2147483647, %v529
      %vm991 = vcmp.eq.f32.partialorder %v990, 8.507059e+37
      %v992 = vand.u32 %v529, 2147483648
      %v993 = vor.u32 1.1754944e-38, %v992
      %v994 = vsel %vm991, %v993, %v989
      %v995 = vmul.f32 1.0, %v994
      %v996 = vrcp.pop %v530
      %v997 = vmul.f32 %v530, %v996
      %v998 = vsub.f32 1.0, %v997
      %v999 = vmul.f32 %v996, %v998
      %v1000 = vadd.f32 %v996, %v999
      %vm1001 = vweird.f32 %v530
      %vm1002 = vweird.f32 %v996
      %vm1003 = vmor %vm1001, %vm1002
      %v1004 = vsel %vm1003, %v996, %v1000
      %v1005 = vand.u32 2147483647, %v530
      %vm1006 = vcmp.eq.f32.partialorder %v1005, 8.507059e+37
      %v1007 = vand.u32 %v530, 2147483648
      %v1008 = vor.u32 1.1754944e-38, %v1007
      %v1009 = vsel %vm1006, %v1008, %v1004
      %v1010 = vmul.f32 1.0, %v1009
      %v1011 = vrcp.pop %v531
      %v1012 = vmul.f32 %v531, %v1011
      %v1013 = vsub.f32 1.0, %v1012
      %v1014 = vmul.f32 %v1011, %v1013
      %v1015 = vadd.f32 %v1011, %v1014
      %vm1016 = vweird.f32 %v531
      %vm1017 = vweird.f32 %v1011
      %vm1018 = vmor %vm1016, %vm1017
      %v1019 = vsel %vm1018, %v1011, %v1015
      %v1020 = vand.u32 2147483647, %v531
      %vm1021 = vcmp.eq.f32.partialorder %v1020, 8.507059e+37
      %v1022 = vand.u32 %v531, 2147483648
      %v1023 = vor.u32 1.1754944e-38, %v1022
      %v1024 = vsel %vm1021, %v1023, %v1019
      %v1025 = vmul.f32 1.0, %v1024
      %v1026 = vrcp.pop %v532
      %v1027 = vmul.f32 %v532, %v1026
      %v1028 = vsub.f32 1.0, %v1027
      %v1029 = vmul.f32 %v1026, %v1028
      %v1030 = vadd.f32 %v1026, %v1029
      %vm1031 = vweird.f32 %v532
      %vm1032 = vweird.f32 %v1026
      %vm1033 = vmor %vm1031, %vm1032
      %v1034 = vsel %vm1033, %v1026, %v1030
      %v1035 = vand.u32 2147483647, %v532
      %vm1036 = vcmp.eq.f32.partialorder %v1035, 8.507059e+37
      %v1037 = vand.u32 %v532, 2147483648
      %v1038 = vor.u32 1.1754944e-38, %v1037
      %v1039 = vsel %vm1036, %v1038, %v1034
      %v1040 = vmul.f32 1.0, %v1039
      %v1041 = vrcp.pop %v533
      %v1042 = vmul.f32 %v533, %v1041
      %v1043 = vsub.f32 1.0, %v1042
      %v1044 = vmul.f32 %v1041, %v1043
      %v1045 = vadd.f32 %v1041, %v1044
      %vm1046 = vweird.f32 %v533
      %vm1047 = vweird.f32 %v1041
      %vm1048 = vmor %vm1046, %vm1047
      %v1049 = vsel %vm1048, %v1041, %v1045
      %v1050 = vand.u32 2147483647, %v533
      %vm1051 = vcmp.eq.f32.partialorder %v1050, 8.507059e+37
      %v1052 = vand.u32 %v533, 2147483648
      %v1053 = vor.u32 1.1754944e-38, %v1052
      %v1054 = vsel %vm1051, %v1053, %v1049
      %v1055 = vmul.f32 1.0, %v1054
      %v1056 = vrcp.pop %v534
      %v1057 = vmul.f32 %v534, %v1056
      %v1058 = vsub.f32 1.0, %v1057
      %v1059 = vmul.f32 %v1056, %v1058
      %v1060 = vadd.f32 %v1056, %v1059
      %vm1061 = vweird.f32 %v534
      %vm1062 = vweird.f32 %v1056
      %vm1063 = vmor %vm1061, %vm1062
      %v1064 = vsel %vm1063, %v1056, %v1060
      %v1065 = vand.u32 2147483647, %v534
      %vm1066 = vcmp.eq.f32.partialorder %v1065, 8.507059e+37
      %v1067 = vand.u32 %v534, 2147483648
      %v1068 = vor.u32 1.1754944e-38, %v1067
      %v1069 = vsel %vm1066, %v1068, %v1064
      %v1070 = vmul.f32 1.0, %v1069
      %v1071 = vrcp.pop %v535
      %v1072 = vmul.f32 %v535, %v1071
      %v1073 = vsub.f32 1.0, %v1072
      %v1074 = vmul.f32 %v1071, %v1073
      %v1075 = vadd.f32 %v1071, %v1074
      %vm1076 = vweird.f32 %v535
      %vm1077 = vweird.f32 %v1071
      %vm1078 = vmor %vm1076, %vm1077
      %v1079 = vsel %vm1078, %v1071, %v1075
      %v1080 = vand.u32 2147483647, %v535
      %vm1081 = vcmp.eq.f32.partialorder %v1080, 8.507059e+37
      %v1082 = vand.u32 %v535, 2147483648
      %v1083 = vor.u32 1.1754944e-38, %v1082
      %v1084 = vsel %vm1081, %v1083, %v1079
      %v1085 = vmul.f32 1.0, %v1084
      %v1086 = vrcp.pop %v536
      %v1087 = vmul.f32 %v536, %v1086
      %v1088 = vsub.f32 1.0, %v1087
      %v1089 = vmul.f32 %v1086, %v1088
      %v1090 = vadd.f32 %v1086, %v1089
      %vm1091 = vweird.f32 %v536
      %vm1092 = vweird.f32 %v1086
      %vm1093 = vmor %vm1091, %vm1092
      %v1094 = vsel %vm1093, %v1086, %v1090
      %v1095 = vand.u32 2147483647, %v536
      %vm1096 = vcmp.eq.f32.partialorder %v1095, 8.507059e+37
      %v1097 = vand.u32 %v536, 2147483648
      %v1098 = vor.u32 1.1754944e-38, %v1097
      %v1099 = vsel %vm1096, %v1098, %v1094
      %v1100 = vmul.f32 1.0, %v1099
      %v1101 = vrcp.pop %v537
      %v1102 = vmul.f32 %v537, %v1101
      %v1103 = vsub.f32 1.0, %v1102
      %v1104 = vmul.f32 %v1101, %v1103
      %v1105 = vadd.f32 %v1101, %v1104
      %vm1106 = vweird.f32 %v537
      %vm1107 = vweird.f32 %v1101
      %vm1108 = vmor %vm1106, %vm1107
      %v1109 = vsel %vm1108, %v1101, %v1105
      %v1110 = vand.u32 2147483647, %v537
      %vm1111 = vcmp.eq.f32.partialorder %v1110, 8.507059e+37
      %v1112 = vand.u32 %v537, 2147483648
      %v1113 = vor.u32 1.1754944e-38, %v1112
      %v1114 = vsel %vm1111, %v1113, %v1109
      %v1115 = vmul.f32 1.0, %v1114
      %v1116 = vrcp.pop %v538
      %v1117 = vmul.f32 %v538, %v1116
      %v1118 = vsub.f32 1.0, %v1117
      %v1119 = vmul.f32 %v1116, %v1118
      %v1120 = vadd.f32 %v1116, %v1119
      %vm1121 = vweird.f32 %v538
      %vm1122 = vweird.f32 %v1116
      %vm1123 = vmor %vm1121, %vm1122
      %v1124 = vsel %vm1123, %v1116, %v1120
      %v1125 = vand.u32 2147483647, %v538
      %vm1126 = vcmp.eq.f32.partialorder %v1125, 8.507059e+37
      %v1127 = vand.u32 %v538, 2147483648
      %v1128 = vor.u32 1.1754944e-38, %v1127
      %v1129 = vsel %vm1126, %v1128, %v1124
      %v1130 = vmul.f32 1.0, %v1129
      %v1131 = vrcp.pop %v539
      %v1132 = vmul.f32 %v539, %v1131
      %v1133 = vsub.f32 1.0, %v1132
      %v1134 = vmul.f32 %v1131, %v1133
      %v1135 = vadd.f32 %v1131, %v1134
      %vm1136 = vweird.f32 %v539
      %vm1137 = vweird.f32 %v1131
      %vm1138 = vmor %vm1136, %vm1137
      %v1139 = vsel %vm1138, %v1131, %v1135
      %v1140 = vand.u32 2147483647, %v539
      %vm1141 = vcmp.eq.f32.partialorder %v1140, 8.507059e+37
      %v1142 = vand.u32 %v539, 2147483648
      %v1143 = vor.u32 1.1754944e-38, %v1142
      %v1144 = vsel %vm1141, %v1143, %v1139
      %v1145 = vmul.f32 1.0, %v1144
      %v1146 = vrcp.pop %v540
      %v1147 = vmul.f32 %v540, %v1146
      %v1148 = vsub.f32 1.0, %v1147
      %v1149 = vmul.f32 %v1146, %v1148
      %v1150 = vadd.f32 %v1146, %v1149
      %vm1151 = vweird.f32 %v540
      %vm1152 = vweird.f32 %v1146
      %vm1153 = vmor %vm1151, %vm1152
      %v1154 = vsel %vm1153, %v1146, %v1150
      %v1155 = vand.u32 2147483647, %v540
      %vm1156 = vcmp.eq.f32.partialorder %v1155, 8.507059e+37
      %v1157 = vand.u32 %v540, 2147483648
      %v1158 = vor.u32 1.1754944e-38, %v1157
      %v1159 = vsel %vm1156, %v1158, %v1154
      %v1160 = vmul.f32 1.0, %v1159
      %v1161 = vrcp.pop %v541
      %v1162 = vmul.f32 %v541, %v1161
      %v1163 = vsub.f32 1.0, %v1162
      %v1164 = vmul.f32 %v1161, %v1163
      %v1165 = vadd.f32 %v1161, %v1164
      %vm1166 = vweird.f32 %v541
      %vm1167 = vweird.f32 %v1161
      %vm1168 = vmor %vm1166, %vm1167
      %v1169 = vsel %vm1168, %v1161, %v1165
      %v1170 = vand.u32 2147483647, %v541
      %vm1171 = vcmp.eq.f32.partialorder %v1170, 8.507059e+37
      %v1172 = vand.u32 %v541, 2147483648
      %v1173 = vor.u32 1.1754944e-38, %v1172
      %v1174 = vsel %vm1171, %v1173, %v1169
      %v1175 = vmul.f32 1.0, %v1174
      %v1176 = vrcp.pop %v542
      %v1177 = vmul.f32 %v542, %v1176
      %v1178 = vsub.f32 1.0, %v1177
      %v1179 = vmul.f32 %v1176, %v1178
      %v1180 = vadd.f32 %v1176, %v1179
      %vm1181 = vweird.f32 %v542
      %vm1182 = vweird.f32 %v1176
      %vm1183 = vmor %vm1181, %vm1182
      %v1184 = vsel %vm1183, %v1176, %v1180
      %v1185 = vand.u32 2147483647, %v542
      %vm1186 = vcmp.eq.f32.partialorder %v1185, 8.507059e+37
      %v1187 = vand.u32 %v542, 2147483648
      %v1188 = vor.u32 1.1754944e-38, %v1187
      %v1189 = vsel %vm1186, %v1188, %v1184
      %v1190 = vmul.f32 1.0, %v1189
      %v1191 = vrcp.pop %v543
      %v1192 = vmul.f32 %v543, %v1191
      %v1193 = vsub.f32 1.0, %v1192
      %v1194 = vmul.f32 %v1191, %v1193
      %v1195 = vadd.f32 %v1191, %v1194
      %vm1196 = vweird.f32 %v543
      %vm1197 = vweird.f32 %v1191
      %vm1198 = vmor %vm1196, %vm1197
      %v1199 = vsel %vm1198, %v1191, %v1195
      %v1200 = vand.u32 2147483647, %v543
      %vm1201 = vcmp.eq.f32.partialorder %v1200, 8.507059e+37
      %v1202 = vand.u32 %v543, 2147483648
      %v1203 = vor.u32 1.1754944e-38, %v1202
      %v1204 = vsel %vm1201, %v1203, %v1199
      %v1205 = vmul.f32 1.0, %v1204
      %v1206 = vrcp.pop %v544
      %v1207 = vmul.f32 %v544, %v1206
      %v1208 = vsub.f32 1.0, %v1207
      %v1209 = vmul.f32 %v1206, %v1208
      %v1210 = vadd.f32 %v1206, %v1209
      %vm1211 = vweird.f32 %v544
      %vm1212 = vweird.f32 %v1206
      %vm1213 = vmor %vm1211, %vm1212
      %v1214 = vsel %vm1213, %v1206, %v1210
      %v1215 = vand.u32 2147483647, %v544
      %vm1216 = vcmp.eq.f32.partialorder %v1215, 8.507059e+37
      %v1217 = vand.u32 %v544, 2147483648
      %v1218 = vor.u32 1.1754944e-38, %v1217
      %v1219 = vsel %vm1216, %v1218, %v1214
      %v1220 = vmul.f32 1.0, %v1219
      %v1221 = vrcp.pop %v545
      %v1222 = vmul.f32 %v545, %v1221
      %v1223 = vsub.f32 1.0, %v1222
      %v1224 = vmul.f32 %v1221, %v1223
      %v1225 = vadd.f32 %v1221, %v1224
      %vm1226 = vweird.f32 %v545
      %vm1227 = vweird.f32 %v1221
      %vm1228 = vmor %vm1226, %vm1227
      %v1229 = vsel %vm1228, %v1221, %v1225
      %v1230 = vand.u32 2147483647, %v545
      %vm1231 = vcmp.eq.f32.partialorder %v1230, 8.507059e+37
      %v1232 = vand.u32 %v545, 2147483648
      %v1233 = vor.u32 1.1754944e-38, %v1232
      %v1234 = vsel %vm1231, %v1233, %v1229
      %v1235 = vmul.f32 1.0, %v1234
      %v1236 = vrcp.pop %v546
      %v1237 = vmul.f32 %v546, %v1236
      %v1238 = vsub.f32 1.0, %v1237
      %v1239 = vmul.f32 %v1236, %v1238
      %v1240 = vadd.f32 %v1236, %v1239
      %vm1241 = vweird.f32 %v546
      %vm1242 = vweird.f32 %v1236
      %vm1243 = vmor %vm1241, %vm1242
      %v1244 = vsel %vm1243, %v1236, %v1240
      %v1245 = vand.u32 2147483647, %v546
      %vm1246 = vcmp.eq.f32.partialorder %v1245, 8.507059e+37
      %v1247 = vand.u32 %v546, 2147483648
      %v1248 = vor.u32 1.1754944e-38, %v1247
      %v1249 = vsel %vm1246, %v1248, %v1244
      %v1250 = vmul.f32 1.0, %v1249
      %v1251 = vrcp.pop %v547
      %v1252 = vmul.f32 %v547, %v1251
      %v1253 = vsub.f32 1.0, %v1252
      %v1254 = vmul.f32 %v1251, %v1253
      %v1255 = vadd.f32 %v1251, %v1254
      %vm1256 = vweird.f32 %v547
      %vm1257 = vweird.f32 %v1251
      %vm1258 = vmor %vm1256, %vm1257
      %v1259 = vsel %vm1258, %v1251, %v1255
      %v1260 = vand.u32 2147483647, %v547
      %vm1261 = vcmp.eq.f32.partialorder %v1260, 8.507059e+37
      %v1262 = vand.u32 %v547, 2147483648
      %v1263 = vor.u32 1.1754944e-38, %v1262
      %v1264 = vsel %vm1261, %v1263, %v1259
      %v1265 = vmul.f32 1.0, %v1264
      %v1266 = vrcp.pop %v548
      %v1267 = vmul.f32 %v548, %v1266
      %v1268 = vsub.f32 1.0, %v1267
      %v1269 = vmul.f32 %v1266, %v1268
      %v1270 = vadd.f32 %v1266, %v1269
      %vm1271 = vweird.f32 %v548
      %vm1272 = vweird.f32 %v1266
      %vm1273 = vmor %vm1271, %vm1272
      %v1274 = vsel %vm1273, %v1266, %v1270
      %v1275 = vand.u32 2147483647, %v548
      %vm1276 = vcmp.eq.f32.partialorder %v1275, 8.507059e+37
      %v1277 = vand.u32 %v548, 2147483648
      %v1278 = vor.u32 1.1754944e-38, %v1277
      %v1279 = vsel %vm1276, %v1278, %v1274
      %v1280 = vmul.f32 1.0, %v1279
      %v1281 = vrcp.pop %v549
      %v1282 = vmul.f32 %v549, %v1281
      %v1283 = vsub.f32 1.0, %v1282
      %v1284 = vmul.f32 %v1281, %v1283
      %v1285 = vadd.f32 %v1281, %v1284
      %vm1286 = vweird.f32 %v549
      %vm1287 = vweird.f32 %v1281
      %vm1288 = vmor %vm1286, %vm1287
      %v1289 = vsel %vm1288, %v1281, %v1285
      %v1290 = vand.u32 2147483647, %v549
      %vm1291 = vcmp.eq.f32.partialorder %v1290, 8.507059e+37
      %v1292 = vand.u32 %v549, 2147483648
      %v1293 = vor.u32 1.1754944e-38, %v1292
      %v1294 = vsel %vm1291, %v1293, %v1289
      %v1295 = vmul.f32 1.0, %v1294
      %v1296 = vrcp.pop %v550
      %v1297 = vmul.f32 %v550, %v1296
      %v1298 = vsub.f32 1.0, %v1297
      %v1299 = vmul.f32 %v1296, %v1298
      %v1300 = vadd.f32 %v1296, %v1299
      %vm1301 = vweird.f32 %v550
      %vm1302 = vweird.f32 %v1296
      %vm1303 = vmor %vm1301, %vm1302
      %v1304 = vsel %vm1303, %v1296, %v1300
      %v1305 = vand.u32 2147483647, %v550
      %vm1306 = vcmp.eq.f32.partialorder %v1305, 8.507059e+37
      %v1307 = vand.u32 %v550, 2147483648
      %v1308 = vor.u32 1.1754944e-38, %v1307
      %v1309 = vsel %vm1306, %v1308, %v1304
      %v1310 = vmul.f32 1.0, %v1309
      %v1311 = vrcp.pop %v551
      %v1312 = vmul.f32 %v551, %v1311
      %v1313 = vsub.f32 1.0, %v1312
      %v1314 = vmul.f32 %v1311, %v1313
      %v1315 = vadd.f32 %v1311, %v1314
      %vm1316 = vweird.f32 %v551
      %vm1317 = vweird.f32 %v1311
      %vm1318 = vmor %vm1316, %vm1317
      %v1319 = vsel %vm1318, %v1311, %v1315
      %v1320 = vand.u32 2147483647, %v551
      %vm1321 = vcmp.eq.f32.partialorder %v1320, 8.507059e+37
      %v1322 = vand.u32 %v551, 2147483648
      %v1323 = vor.u32 1.1754944e-38, %v1322
      %v1324 = vsel %vm1321, %v1323, %v1319
      %v1325 = vmul.f32 1.0, %v1324
      %v1326 = vrcp.pop %v552
      %v1327 = vmul.f32 %v552, %v1326
      %v1328 = vsub.f32 1.0, %v1327
      %v1329 = vmul.f32 %v1326, %v1328
      %v1330 = vadd.f32 %v1326, %v1329
      %vm1331 = vweird.f32 %v552
      %vm1332 = vweird.f32 %v1326
      %vm1333 = vmor %vm1331, %vm1332
      %v1334 = vsel %vm1333, %v1326, %v1330
      %v1335 = vand.u32 2147483647, %v552
      %vm1336 = vcmp.eq.f32.partialorder %v1335, 8.507059e+37
      %v1337 = vand.u32 %v552, 2147483648
      %v1338 = vor.u32 1.1754944e-38, %v1337
      %v1339 = vsel %vm1336, %v1338, %v1334
      %v1340 = vmul.f32 1.0, %v1339
      %v1341 = vrcp.pop %v553
      %v1342 = vmul.f32 %v553, %v1341
      %v1343 = vsub.f32 1.0, %v1342
      %v1344 = vmul.f32 %v1341, %v1343
      %v1345 = vadd.f32 %v1341, %v1344
      %vm1346 = vweird.f32 %v553
      %vm1347 = vweird.f32 %v1341
      %vm1348 = vmor %vm1346, %vm1347
      %v1349 = vsel %vm1348, %v1341, %v1345
      %v1350 = vand.u32 2147483647, %v553
      %vm1351 = vcmp.eq.f32.partialorder %v1350, 8.507059e+37
      %v1352 = vand.u32 %v553, 2147483648
      %v1353 = vor.u32 1.1754944e-38, %v1352
      %v1354 = vsel %vm1351, %v1353, %v1349
      %v1355 = vmul.f32 1.0, %v1354
      %v1356 = vrcp.pop %v554
      %v1357 = vmul.f32 %v554, %v1356
      %v1358 = vsub.f32 1.0, %v1357
      %v1359 = vmul.f32 %v1356, %v1358
      %v1360 = vadd.f32 %v1356, %v1359
      %vm1361 = vweird.f32 %v554
      %vm1362 = vweird.f32 %v1356
      %vm1363 = vmor %vm1361, %vm1362
      %v1364 = vsel %vm1363, %v1356, %v1360
      %v1365 = vand.u32 2147483647, %v554
      %vm1366 = vcmp.eq.f32.partialorder %v1365, 8.507059e+37
      %v1367 = vand.u32 %v554, 2147483648
      %v1368 = vor.u32 1.1754944e-38, %v1367
      %v1369 = vsel %vm1366, %v1368, %v1364
      %v1370 = vmul.f32 1.0, %v1369
      %v1371 = vrcp.pop %v555
      %v1372 = vmul.f32 %v555, %v1371
      %v1373 = vsub.f32 1.0, %v1372
      %v1374 = vmul.f32 %v1371, %v1373
      %v1375 = vadd.f32 %v1371, %v1374
      %vm1376 = vweird.f32 %v555
      %vm1377 = vweird.f32 %v1371
      %vm1378 = vmor %vm1376, %vm1377
      %v1379 = vsel %vm1378, %v1371, %v1375
      %v1380 = vand.u32 2147483647, %v555
      %vm1381 = vcmp.eq.f32.partialorder %v1380, 8.507059e+37
      %v1382 = vand.u32 %v555, 2147483648
      %v1383 = vor.u32 1.1754944e-38, %v1382
      %v1384 = vsel %vm1381, %v1383, %v1379
      %v1385 = vmul.f32 1.0, %v1384
      %v1386 = vrcp.pop %v556
      %v1387 = vmul.f32 %v556, %v1386
      %v1388 = vsub.f32 1.0, %v1387
      %v1389 = vmul.f32 %v1386, %v1388
      %v1390 = vadd.f32 %v1386, %v1389
      %vm1391 = vweird.f32 %v556
      %vm1392 = vweird.f32 %v1386
      %vm1393 = vmor %vm1391, %vm1392
      %v1394 = vsel %vm1393, %v1386, %v1390
      %v1395 = vand.u32 2147483647, %v556
      %vm1396 = vcmp.eq.f32.partialorder %v1395, 8.507059e+37
      %v1397 = vand.u32 %v556, 2147483648
      %v1398 = vor.u32 1.1754944e-38, %v1397
      %v1399 = vsel %vm1396, %v1398, %v1394
      %v1400 = vmul.f32 1.0, %v1399
      %v1401 = vrcp.pop %v557
      %v1402 = vmul.f32 %v557, %v1401
      %v1403 = vsub.f32 1.0, %v1402
      %v1404 = vmul.f32 %v1401, %v1403
      %v1405 = vadd.f32 %v1401, %v1404
      %vm1406 = vweird.f32 %v557
      %vm1407 = vweird.f32 %v1401
      %vm1408 = vmor %vm1406, %vm1407
      %v1409 = vsel %vm1408, %v1401, %v1405
      %v1410 = vand.u32 2147483647, %v557
      %vm1411 = vcmp.eq.f32.partialorder %v1410, 8.507059e+37
      %v1412 = vand.u32 %v557, 2147483648
      %v1413 = vor.u32 1.1754944e-38, %v1412
      %v1414 = vsel %vm1411, %v1413, %v1409
      %v1415 = vmul.f32 1.0, %v1414
      %v1416 = vrcp.pop %v558
      %v1417 = vmul.f32 %v558, %v1416
      %v1418 = vsub.f32 1.0, %v1417
      %v1419 = vmul.f32 %v1416, %v1418
      %v1420 = vadd.f32 %v1416, %v1419
      %vm1421 = vweird.f32 %v558
      %vm1422 = vweird.f32 %v1416
      %vm1423 = vmor %vm1421, %vm1422
      %v1424 = vsel %vm1423, %v1416, %v1420
      %v1425 = vand.u32 2147483647, %v558
      %vm1426 = vcmp.eq.f32.partialorder %v1425, 8.507059e+37
      %v1427 = vand.u32 %v558, 2147483648
      %v1428 = vor.u32 1.1754944e-38, %v1427
      %v1429 = vsel %vm1426, %v1428, %v1424
      %v1430 = vmul.f32 1.0, %v1429
      %v1431 = vrcp.pop %v559
      %v1432 = vmul.f32 %v559, %v1431
      %v1433 = vsub.f32 1.0, %v1432
      %v1434 = vmul.f32 %v1431, %v1433
      %v1435 = vadd.f32 %v1431, %v1434
      %vm1436 = vweird.f32 %v559
      %vm1437 = vweird.f32 %v1431
      %vm1438 = vmor %vm1436, %vm1437
      %v1439 = vsel %vm1438, %v1431, %v1435
      %v1440 = vand.u32 2147483647, %v559
      %vm1441 = vcmp.eq.f32.partialorder %v1440, 8.507059e+37
      %v1442 = vand.u32 %v559, 2147483648
      %v1443 = vor.u32 1.1754944e-38, %v1442
      %v1444 = vsel %vm1441, %v1443, %v1439
      %v1445 = vmul.f32 1.0, %v1444
      %v1446 = vrcp.pop %v560
      %v1447 = vmul.f32 %v560, %v1446
      %v1448 = vsub.f32 1.0, %v1447
      %v1449 = vmul.f32 %v1446, %v1448
      %v1450 = vadd.f32 %v1446, %v1449
      %vm1451 = vweird.f32 %v560
      %vm1452 = vweird.f32 %v1446
      %vm1453 = vmor %vm1451, %vm1452
      %v1454 = vsel %vm1453, %v1446, %v1450
      %v1455 = vand.u32 2147483647, %v560
      %vm1456 = vcmp.eq.f32.partialorder %v1455, 8.507059e+37
      %v1457 = vand.u32 %v560, 2147483648
      %v1458 = vor.u32 1.1754944e-38, %v1457
      %v1459 = vsel %vm1456, %v1458, %v1454
      %v1460 = vmul.f32 1.0, %v1459
      %v1461 = vld [vmem:[%s0] sm:$0xff]
      %v1462 = vld [vmem:[%s0 + $0x8] sm:$0xff]
      %v1463 = vld [vmem:[%s0 + $0x10] sm:$0xff]
      %v1464 = vld [vmem:[%s0 + $0x18] sm:$0xff]
      %v1465 = vld [vmem:[%s0 + $0x20] sm:$0xff]
      %v1466 = vld [vmem:[%s0 + $0x28] sm:$0xff]
      %v1467 = vld [vmem:[%s0 + $0x30] sm:$0xff]
      %v1468 = vld [vmem:[%s0 + $0x38] sm:$0xff]
      %v1469 = vld [vmem:[%s0 + $0x40] sm:$0xff]
      %v1470 = vld [vmem:[%s0 + $0x48] sm:$0xff]
      %v1471 = vld [vmem:[%s0 + $0x50] sm:$0xff]
      %v1472 = vld [vmem:[%s0 + $0x58] sm:$0xff]
      %v1473 = vld [vmem:[%s0 + $0x60] sm:$0xff]
      %v1474 = vld [vmem:[%s0 + $0x68] sm:$0xff]
      %v1475 = vld [vmem:[%s0 + $0x70] sm:$0xff]
      %v1476 = vld [vmem:[%s0 + $0x78] sm:$0xff]
      %v1477 = vld [vmem:[%s0 + $0x80] sm:$0xff]
      %v1478 = vld [vmem:[%s0 + $0x88] sm:$0xff]
      %v1479 = vld [vmem:[%s0 + $0x90] sm:$0xff]
      %v1480 = vld [vmem:[%s0 + $0x98] sm:$0xff]
      %v1481 = vld [vmem:[%s0 + $0xa0] sm:$0xff]
      %v1482 = vld [vmem:[%s0 + $0xa8] sm:$0xff]
      %v1483 = vld [vmem:[%s0 + $0xb0] sm:$0xff]
      %v1484 = vld [vmem:[%s0 + $0xb8] sm:$0xff]
      %v1485 = vld [vmem:[%s0 + $0xc0] sm:$0xff]
      %v1486 = vld [vmem:[%s0 + $0xc8] sm:$0xff]
      %v1487 = vld [vmem:[%s0 + $0xd0] sm:$0xff]
      %v1488 = vld [vmem:[%s0 + $0xd8] sm:$0xff]
      %v1489 = vld [vmem:[%s0 + $0xe0] sm:$0xff]
      %v1490 = vld [vmem:[%s0 + $0xe8] sm:$0xff]
      %v1491 = vld [vmem:[%s0 + $0xf0] sm:$0xff]
      %v1492 = vld [vmem:[%s0 + $0xf8] sm:$0xff]
      %v1493 = vld [vmem:[%s0 + $0x100] sm:$0xff]
      %v1494 = vld [vmem:[%s0 + $0x108] sm:$0xff]
      %v1495 = vld [vmem:[%s0 + $0x110] sm:$0xff]
      %v1496 = vld [vmem:[%s0 + $0x118] sm:$0xff]
      %v1497 = vld [vmem:[%s0 + $0x120] sm:$0xff]
      %v1498 = vld [vmem:[%s0 + $0x128] sm:$0xff]
      %v1499 = vld [vmem:[%s0 + $0x130] sm:$0xff]
      %v1500 = vld [vmem:[%s0 + $0x138] sm:$0xff]
      %v1501 = vld [vmem:[%s0 + $0x140] sm:$0xff]
      %v1502 = vld [vmem:[%s0 + $0x148] sm:$0xff]
      %v1503 = vld [vmem:[%s0 + $0x150] sm:$0xff]
      %v1504 = vld [vmem:[%s0 + $0x158] sm:$0xff]
      %v1505 = vld [vmem:[%s0 + $0x160] sm:$0xff]
      %v1506 = vld [vmem:[%s0 + $0x168] sm:$0xff]
      %v1507 = vld [vmem:[%s0 + $0x170] sm:$0xff]
      %v1508 = vld [vmem:[%s0 + $0x178] sm:$0xff]
      %v1509 = vld [vmem:[%s0 + $0x180] sm:$0xff]
      %v1510 = vld [vmem:[%s0 + $0x188] sm:$0xff]
      %v1511 = vld [vmem:[%s0 + $0x190] sm:$0xff]
      %v1512 = vld [vmem:[%s0 + $0x198] sm:$0xff]
      %v1513 = vld [vmem:[%s0 + $0x1a0] sm:$0xff]
      %v1514 = vld [vmem:[%s0 + $0x1a8] sm:$0xff]
      %v1515 = vld [vmem:[%s0 + $0x1b0] sm:$0xff]
      %v1516 = vld [vmem:[%s0 + $0x1b8] sm:$0xff]
      %v1517 = vld [vmem:[%s0 + $0x1c0] sm:$0xff]
      %v1518 = vld [vmem:[%s0 + $0x1c8] sm:$0xff]
      %v1519 = vld [vmem:[%s0 + $0x1d0] sm:$0xff]
      %v1520 = vld [vmem:[%s0 + $0x1d8] sm:$0xff]
      %v1521 = vld [vmem:[%s0 + $0x1e0] sm:$0xff]
      %v1522 = vld [vmem:[%s0 + $0x1e8] sm:$0xff]
      %v1523 = vld [vmem:[%s0 + $0x1f0] sm:$0xff]
      %v1524 = vld [vmem:[%s0 + $0x1f8] sm:$0xff]
      %v1525 = vld [vmem:[%s0 + $0x200] sm:$0xff]
      %v1526 = vld [vmem:[%s0 + $0x208] sm:$0xff]
      %v1527 = vld [vmem:[%s0 + $0x210] sm:$0xff]
      %v1528 = vld [vmem:[%s0 + $0x218] sm:$0xff]
      %v1529 = vld [vmem:[%s0 + $0x220] sm:$0xff]
      %v1530 = vld [vmem:[%s0 + $0x228] sm:$0xff]
      %v1531 = vld [vmem:[%s0 + $0x230] sm:$0xff]
      %v1532 = vld [vmem:[%s0 + $0x238] sm:$0xff]
      %v1533 = vld [vmem:[%s0 + $0x240] sm:$0xff]
      %v1534 = vld [vmem:[%s0 + $0x248] sm:$0xff]
      %v1535 = vld [vmem:[%s0 + $0x250] sm:$0xff]
      %v1536 = vld [vmem:[%s0 + $0x258] sm:$0xff]
      %v1537 = vld [vmem:[%s0 + $0x260] sm:$0xff]
      %v1538 = vld [vmem:[%s0 + $0x268] sm:$0xff]
      %v1539 = vld [vmem:[%s0 + $0x270] sm:$0xff]
      %v1540 = vld [vmem:[%s0 + $0x278] sm:$0xff]
      %v1541 = vld [vmem:[%s0 + $0x280] sm:$0xff]
      %v1542 = vld [vmem:[%s0 + $0x288] sm:$0xff]
      %v1543 = vld [vmem:[%s0 + $0x290] sm:$0xff]
      %v1544 = vld [vmem:[%s0 + $0x298] sm:$0xff]
      %v1545 = vld [vmem:[%s0 + $0x2a0] sm:$0xff]
      %v1546 = vld [vmem:[%s0 + $0x2a8] sm:$0xff]
      %v1547 = vld [vmem:[%s0 + $0x2b0] sm:$0xff]
      %v1548 = vld [vmem:[%s0 + $0x2b8] sm:$0xff]
      %v1549 = vld [vmem:[%s0 + $0x2c0] sm:$0xff]
      %v1550 = vld [vmem:[%s0 + $0x2c8] sm:$0xff]
      %v1551 = vld [vmem:[%s0 + $0x2d0] sm:$0xff]
      %v1552 = vld [vmem:[%s0 + $0x2d8] sm:$0xff]
      %v1553 = vld [vmem:[%s0 + $0x2e0] sm:$0xff]
      %v1554 = vld [vmem:[%s0 + $0x2e8] sm:$0xff]
      %v1555 = vld [vmem:[%s0 + $0x2f0] sm:$0xff]
      %v1556 = vld [vmem:[%s0 + $0x2f8] sm:$0xff]
      %v1557 = vld [vmem:[%s0 + $0x300] sm:$0xff]
      %v1558 = vld [vmem:[%s0 + $0x308] sm:$0xff]
      %v1559 = vld [vmem:[%s0 + $0x310] sm:$0xff]
      %v1560 = vld [vmem:[%s0 + $0x318] sm:$0xff]
      %v1561 = vld [vmem:[%s0 + $0x320] sm:$0xff]
      %v1562 = vld [vmem:[%s0 + $0x328] sm:$0xff]
      %v1563 = vld [vmem:[%s0 + $0x330] sm:$0xff]
      %v1564 = vld [vmem:[%s0 + $0x338] sm:$0xff]
      %v1565 = vld [vmem:[%s0 + $0x340] sm:$0xff]
      %v1566 = vld [vmem:[%s0 + $0x348] sm:$0xff]
      %v1567 = vld [vmem:[%s0 + $0x350] sm:$0xff]
      %v1568 = vld [vmem:[%s0 + $0x358] sm:$0xff]
      %v1569 = vld [vmem:[%s0 + $0x360] sm:$0xff]
      %v1570 = vld [vmem:[%s0 + $0x368] sm:$0xff]
      %v1571 = vld [vmem:[%s0 + $0x370] sm:$0xff]
      %v1572 = vld [vmem:[%s0 + $0x378] sm:$0xff]
      %v1573 = vld [vmem:[%s0 + $0x380] sm:$0xff]
      %v1574 = vld [vmem:[%s0 + $0x388] sm:$0xff]
      %v1575 = vld [vmem:[%s0 + $0x390] sm:$0xff]
      %v1576 = vld [vmem:[%s0 + $0x398] sm:$0xff]
      %v1577 = vld [vmem:[%s0 + $0x3a0] sm:$0xff]
      %v1578 = vld [vmem:[%s0 + $0x3a8] sm:$0xff]
      %v1579 = vld [vmem:[%s0 + $0x3b0] sm:$0xff]
      %v1580 = vld [vmem:[%s0 + $0x3b8] sm:$0xff]
      %1582 = vset.pattern.permute.xlu0 0
      %1583 = vperm.xlu0 %1582, %v575
      %v1584 = vpop.permute.xlu0 %1583
      %1587 = vset.pattern.permute.xlu0 0
      %1588 = vperm.xlu0 %1587, %v590
      %v1589 = vpop.permute.xlu0 %1588
      %1592 = vset.pattern.permute.xlu0 0
      %1593 = vperm.xlu0 %1592, %v605
      %v1594 = vpop.permute.xlu0 %1593
      %1597 = vset.pattern.permute.xlu0 0
      %1598 = vperm.xlu0 %1597, %v620
      %v1599 = vpop.permute.xlu0 %1598
      %1602 = vset.pattern.permute.xlu0 0
      %1603 = vperm.xlu0 %1602, %v635
      %v1604 = vpop.permute.xlu0 %1603
      %1607 = vset.pattern.permute.xlu0 0
      %1608 = vperm.xlu0 %1607, %v650
      %v1609 = vpop.permute.xlu0 %1608
      %1612 = vset.pattern.permute.xlu0 0
      %1613 = vperm.xlu0 %1612, %v665
      %v1614 = vpop.permute.xlu0 %1613
      %1617 = vset.pattern.permute.xlu0 0
      %1618 = vperm.xlu0 %1617, %v680
      %v1619 = vpop.permute.xlu0 %1618
      %1622 = vset.pattern.permute.xlu0 0
      %1623 = vperm.xlu0 %1622, %v695
      %v1624 = vpop.permute.xlu0 %1623
      %1627 = vset.pattern.permute.xlu0 0
      %1628 = vperm.xlu0 %1627, %v710
      %v1629 = vpop.permute.xlu0 %1628
      %1632 = vset.pattern.permute.xlu0 0
      %1633 = vperm.xlu0 %1632, %v725
      %v1634 = vpop.permute.xlu0 %1633
      %1637 = vset.pattern.permute.xlu0 0
      %1638 = vperm.xlu0 %1637, %v740
      %v1639 = vpop.permute.xlu0 %1638
      %1642 = vset.pattern.permute.xlu0 0
      %1643 = vperm.xlu0 %1642, %v755
      %v1644 = vpop.permute.xlu0 %1643
      %1647 = vset.pattern.permute.xlu0 0
      %1648 = vperm.xlu0 %1647, %v770
      %v1649 = vpop.permute.xlu0 %1648
      %1652 = vset.pattern.permute.xlu0 0
      %1653 = vperm.xlu0 %1652, %v785
      %v1654 = vpop.permute.xlu0 %1653
      %1657 = vset.pattern.permute.xlu0 0
      %1658 = vperm.xlu0 %1657, %v800
      %v1659 = vpop.permute.xlu0 %1658
      %1662 = vset.pattern.permute.xlu0 0
      %1663 = vperm.xlu0 %1662, %v815
      %v1664 = vpop.permute.xlu0 %1663
      %1667 = vset.pattern.permute.xlu0 0
      %1668 = vperm.xlu0 %1667, %v830
      %v1669 = vpop.permute.xlu0 %1668
      %1672 = vset.pattern.permute.xlu0 0
      %1673 = vperm.xlu0 %1672, %v845
      %v1674 = vpop.permute.xlu0 %1673
      %1677 = vset.pattern.permute.xlu0 0
      %1678 = vperm.xlu0 %1677, %v860
      %v1679 = vpop.permute.xlu0 %1678
      %1682 = vset.pattern.permute.xlu0 0
      %1683 = vperm.xlu0 %1682, %v875
      %v1684 = vpop.permute.xlu0 %1683
      %1687 = vset.pattern.permute.xlu0 0
      %1688 = vperm.xlu0 %1687, %v890
      %v1689 = vpop.permute.xlu0 %1688
      %1692 = vset.pattern.permute.xlu0 0
      %1693 = vperm.xlu0 %1692, %v905
      %v1694 = vpop.permute.xlu0 %1693
      %1697 = vset.pattern.permute.xlu0 0
      %1698 = vperm.xlu0 %1697, %v920
      %v1699 = vpop.permute.xlu0 %1698
      %1702 = vset.pattern.permute.xlu0 0
      %1703 = vperm.xlu0 %1702, %v935
      %v1704 = vpop.permute.xlu0 %1703
      %1707 = vset.pattern.permute.xlu0 0
      %1708 = vperm.xlu0 %1707, %v950
      %v1709 = vpop.permute.xlu0 %1708
      %1712 = vset.pattern.permute.xlu0 0
      %1713 = vperm.xlu0 %1712, %v965
      %v1714 = vpop.permute.xlu0 %1713
      %1717 = vset.pattern.permute.xlu0 0
      %1718 = vperm.xlu0 %1717, %v980
      %v1719 = vpop.permute.xlu0 %1718
      %1722 = vset.pattern.permute.xlu0 0
      %1723 = vperm.xlu0 %1722, %v995
      %v1724 = vpop.permute.xlu0 %1723
      %1727 = vset.pattern.permute.xlu0 0
      %1728 = vperm.xlu0 %1727, %v1010
      %v1729 = vpop.permute.xlu0 %1728
      %1732 = vset.pattern.permute.xlu0 0
      %1733 = vperm.xlu0 %1732, %v1025
      %v1734 = vpop.permute.xlu0 %1733
      %1737 = vset.pattern.permute.xlu0 0
      %1738 = vperm.xlu0 %1737, %v1040
      %v1739 = vpop.permute.xlu0 %1738
      %1742 = vset.pattern.permute.xlu0 0
      %1743 = vperm.xlu0 %1742, %v1055
      %v1744 = vpop.permute.xlu0 %1743
      %1747 = vset.pattern.permute.xlu0 0
      %1748 = vperm.xlu0 %1747, %v1070
      %v1749 = vpop.permute.xlu0 %1748
      %1752 = vset.pattern.permute.xlu0 0
      %1753 = vperm.xlu0 %1752, %v1085
      %v1754 = vpop.permute.xlu0 %1753
      %1757 = vset.pattern.permute.xlu0 0
      %1758 = vperm.xlu0 %1757, %v1100
      %v1759 = vpop.permute.xlu0 %1758
      %1762 = vset.pattern.permute.xlu0 0
      %1763 = vperm.xlu0 %1762, %v1115
      %v1764 = vpop.permute.xlu0 %1763
      %1767 = vset.pattern.permute.xlu0 0
      %1768 = vperm.xlu0 %1767, %v1130
      %v1769 = vpop.permute.xlu0 %1768
      %1772 = vset.pattern.permute.xlu0 0
      %1773 = vperm.xlu0 %1772, %v1145
      %v1774 = vpop.permute.xlu0 %1773
      %1777 = vset.pattern.permute.xlu0 0
      %1778 = vperm.xlu0 %1777, %v1160
      %v1779 = vpop.permute.xlu0 %1778
      %1782 = vset.pattern.permute.xlu0 0
      %1783 = vperm.xlu0 %1782, %v1175
      %v1784 = vpop.permute.xlu0 %1783
      %1787 = vset.pattern.permute.xlu0 0
      %1788 = vperm.xlu0 %1787, %v1190
      %v1789 = vpop.permute.xlu0 %1788
      %1792 = vset.pattern.permute.xlu0 0
      %1793 = vperm.xlu0 %1792, %v1205
      %v1794 = vpop.permute.xlu0 %1793
      %1797 = vset.pattern.permute.xlu0 0
      %1798 = vperm.xlu0 %1797, %v1220
      %v1799 = vpop.permute.xlu0 %1798
      %1802 = vset.pattern.permute.xlu0 0
      %1803 = vperm.xlu0 %1802, %v1235
      %v1804 = vpop.permute.xlu0 %1803
      %1807 = vset.pattern.permute.xlu0 0
      %1808 = vperm.xlu0 %1807, %v1250
      %v1809 = vpop.permute.xlu0 %1808
      %1812 = vset.pattern.permute.xlu0 0
      %1813 = vperm.xlu0 %1812, %v1265
      %v1814 = vpop.permute.xlu0 %1813
      %1817 = vset.pattern.permute.xlu0 0
      %1818 = vperm.xlu0 %1817, %v1280
      %v1819 = vpop.permute.xlu0 %1818
      %1822 = vset.pattern.permute.xlu0 0
      %1823 = vperm.xlu0 %1822, %v1295
      %v1824 = vpop.permute.xlu0 %1823
      %1827 = vset.pattern.permute.xlu0 0
      %1828 = vperm.xlu0 %1827, %v1310
      %v1829 = vpop.permute.xlu0 %1828
      %1832 = vset.pattern.permute.xlu0 0
      %1833 = vperm.xlu0 %1832, %v1325
      %v1834 = vpop.permute.xlu0 %1833
      %1837 = vset.pattern.permute.xlu0 0
      %1838 = vperm.xlu0 %1837, %v1340
      %v1839 = vpop.permute.xlu0 %1838
      %1842 = vset.pattern.permute.xlu0 0
      %1843 = vperm.xlu0 %1842, %v1355
      %v1844 = vpop.permute.xlu0 %1843
      %1847 = vset.pattern.permute.xlu0 0
      %1848 = vperm.xlu0 %1847, %v1370
      %v1849 = vpop.permute.xlu0 %1848
      %1852 = vset.pattern.permute.xlu0 0
      %1853 = vperm.xlu0 %1852, %v1385
      %v1854 = vpop.permute.xlu0 %1853
      %1857 = vset.pattern.permute.xlu0 0
      %1858 = vperm.xlu0 %1857, %v1400
      %v1859 = vpop.permute.xlu0 %1858
      %1862 = vset.pattern.permute.xlu0 0
      %1863 = vperm.xlu0 %1862, %v1415
      %v1864 = vpop.permute.xlu0 %1863
      %1867 = vset.pattern.permute.xlu0 0
      %1868 = vperm.xlu0 %1867, %v1430
      %v1869 = vpop.permute.xlu0 %1868
      %1872 = vset.pattern.permute.xlu0 0
      %1873 = vperm.xlu0 %1872, %v1445
      %v1874 = vpop.permute.xlu0 %1873
      %1877 = vset.pattern.permute.xlu0 0
      %1878 = vperm.xlu0 %1877, %v1460
      %v1879 = vpop.permute.xlu0 %1878
      %v1881 = vmul.f32 %v1461, %v1584
      %v1882 = vmul.f32 %v1462, %v1584
      %v1883 = vmul.f32 %v1463, %v1589
      %v1884 = vmul.f32 %v1464, %v1589
      %v1885 = vmul.f32 %v1465, %v1594
      %v1886 = vmul.f32 %v1466, %v1594
      %v1887 = vmul.f32 %v1467, %v1599
      %v1888 = vmul.f32 %v1468, %v1599
      %v1889 = vmul.f32 %v1469, %v1604
      %v1890 = vmul.f32 %v1470, %v1604
      %v1891 = vmul.f32 %v1471, %v1609
      %v1892 = vmul.f32 %v1472, %v1609
      %v1893 = vmul.f32 %v1473, %v1614
      %v1894 = vmul.f32 %v1474, %v1614
      %v1895 = vmul.f32 %v1475, %v1619
      %v1896 = vmul.f32 %v1476, %v1619
      %v1897 = vmul.f32 %v1477, %v1624
      %v1898 = vmul.f32 %v1478, %v1624
      %v1899 = vmul.f32 %v1479, %v1629
      %v1900 = vmul.f32 %v1480, %v1629
      %v1901 = vmul.f32 %v1481, %v1634
      %v1902 = vmul.f32 %v1482, %v1634
      %v1903 = vmul.f32 %v1483, %v1639
      %v1904 = vmul.f32 %v1484, %v1639
      %v1905 = vmul.f32 %v1485, %v1644
      %v1906 = vmul.f32 %v1486, %v1644
      %v1907 = vmul.f32 %v1487, %v1649
      %v1908 = vmul.f32 %v1488, %v1649
      %v1909 = vmul.f32 %v1489, %v1654
      %v1910 = vmul.f32 %v1490, %v1654
      %v1911 = vmul.f32 %v1491, %v1659
      %v1912 = vmul.f32 %v1492, %v1659
      %v1913 = vmul.f32 %v1493, %v1664
      %v1914 = vmul.f32 %v1494, %v1664
      %v1915 = vmul.f32 %v1495, %v1669
      %v1916 = vmul.f32 %v1496, %v1669
      %v1917 = vmul.f32 %v1497, %v1674
      %v1918 = vmul.f32 %v1498, %v1674
      %v1919 = vmul.f32 %v1499, %v1679
      %v1920 = vmul.f32 %v1500, %v1679
      %v1921 = vmul.f32 %v1501, %v1684
      %v1922 = vmul.f32 %v1502, %v1684
      %v1923 = vmul.f32 %v1503, %v1689
      %v1924 = vmul.f32 %v1504, %v1689
      %v1925 = vmul.f32 %v1505, %v1694
      %v1926 = vmul.f32 %v1506, %v1694
      %v1927 = vmul.f32 %v1507, %v1699
      %v1928 = vmul.f32 %v1508, %v1699
      %v1929 = vmul.f32 %v1509, %v1704
      %v1930 = vmul.f32 %v1510, %v1704
      %v1931 = vmul.f32 %v1511, %v1709
      %v1932 = vmul.f32 %v1512, %v1709
      %v1933 = vmul.f32 %v1513, %v1714
      %v1934 = vmul.f32 %v1514, %v1714
      %v1935 = vmul.f32 %v1515, %v1719
      %v1936 = vmul.f32 %v1516, %v1719
      %v1937 = vmul.f32 %v1517, %v1724
      %v1938 = vmul.f32 %v1518, %v1724
      %v1939 = vmul.f32 %v1519, %v1729
      %v1940 = vmul.f32 %v1520, %v1729
      %v1941 = vmul.f32 %v1521, %v1734
      %v1942 = vmul.f32 %v1522, %v1734
      %v1943 = vmul.f32 %v1523, %v1739
      %v1944 = vmul.f32 %v1524, %v1739
      %v1945 = vmul.f32 %v1525, %v1744
      %v1946 = vmul.f32 %v1526, %v1744
      %v1947 = vmul.f32 %v1527, %v1749
      %v1948 = vmul.f32 %v1528, %v1749
      %v1949 = vmul.f32 %v1529, %v1754
      %v1950 = vmul.f32 %v1530, %v1754
      %v1951 = vmul.f32 %v1531, %v1759
      %v1952 = vmul.f32 %v1532, %v1759
      %v1953 = vmul.f32 %v1533, %v1764
      %v1954 = vmul.f32 %v1534, %v1764
      %v1955 = vmul.f32 %v1535, %v1769
      %v1956 = vmul.f32 %v1536, %v1769
      %v1957 = vmul.f32 %v1537, %v1774
      %v1958 = vmul.f32 %v1538, %v1774
      %v1959 = vmul.f32 %v1539, %v1779
      %v1960 = vmul.f32 %v1540, %v1779
      %v1961 = vmul.f32 %v1541, %v1784
      %v1962 = vmul.f32 %v1542, %v1784
      %v1963 = vmul.f32 %v1543, %v1789
      %v1964 = vmul.f32 %v1544, %v1789
      %v1965 = vmul.f32 %v1545, %v1794
      %v1966 = vmul.f32 %v1546, %v1794
      %v1967 = vmul.f32 %v1547, %v1799
      %v1968 = vmul.f32 %v1548, %v1799
      %v1969 = vmul.f32 %v1549, %v1804
      %v1970 = vmul.f32 %v1550, %v1804
      %v1971 = vmul.f32 %v1551, %v1809
      %v1972 = vmul.f32 %v1552, %v1809
      %v1973 = vmul.f32 %v1553, %v1814
      %v1974 = vmul.f32 %v1554, %v1814
      %v1975 = vmul.f32 %v1555, %v1819
      %v1976 = vmul.f32 %v1556, %v1819
      %v1977 = vmul.f32 %v1557, %v1824
      %v1978 = vmul.f32 %v1558, %v1824
      %v1979 = vmul.f32 %v1559, %v1829
      %v1980 = vmul.f32 %v1560, %v1829
      %v1981 = vmul.f32 %v1561, %v1834
      %v1982 = vmul.f32 %v1562, %v1834
      %v1983 = vmul.f32 %v1563, %v1839
      %v1984 = vmul.f32 %v1564, %v1839
      %v1985 = vmul.f32 %v1565, %v1844
      %v1986 = vmul.f32 %v1566, %v1844
      %v1987 = vmul.f32 %v1567, %v1849
      %v1988 = vmul.f32 %v1568, %v1849
      %v1989 = vmul.f32 %v1569, %v1854
      %v1990 = vmul.f32 %v1570, %v1854
      %v1991 = vmul.f32 %v1571, %v1859
      %v1992 = vmul.f32 %v1572, %v1859
      %v1993 = vmul.f32 %v1573, %v1864
      %v1994 = vmul.f32 %v1574, %v1864
      %v1995 = vmul.f32 %v1575, %v1869
      %v1996 = vmul.f32 %v1576, %v1869
      %v1997 = vmul.f32 %v1577, %v1874
      %v1998 = vmul.f32 %v1578, %v1874
      %v1999 = vmul.f32 %v1579, %v1879
      %v2000 = vmul.f32 %v1580, %v1879
      %v2001 = vpack.c.bf16 %v1883, %v1881
      %v2002 = vpack.c.bf16 %v1884, %v1882
      %v2003 = vpack.c.bf16 %v1887, %v1885
      %v2004 = vpack.c.bf16 %v1888, %v1886
      %v2005 = vpack.c.bf16 %v1891, %v1889
      %v2006 = vpack.c.bf16 %v1892, %v1890
      %v2007 = vpack.c.bf16 %v1895, %v1893
      %v2008 = vpack.c.bf16 %v1896, %v1894
      %v2009 = vpack.c.bf16 %v1899, %v1897
      %v2010 = vpack.c.bf16 %v1900, %v1898
      %v2011 = vpack.c.bf16 %v1903, %v1901
      %v2012 = vpack.c.bf16 %v1904, %v1902
      %v2013 = vpack.c.bf16 %v1907, %v1905
      %v2014 = vpack.c.bf16 %v1908, %v1906
      %v2015 = vpack.c.bf16 %v1911, %v1909
      %v2016 = vpack.c.bf16 %v1912, %v1910
      %v2017 = vpack.c.bf16 %v1915, %v1913
      %v2018 = vpack.c.bf16 %v1916, %v1914
      %v2019 = vpack.c.bf16 %v1919, %v1917
      %v2020 = vpack.c.bf16 %v1920, %v1918
      %v2021 = vpack.c.bf16 %v1923, %v1921
      %v2022 = vpack.c.bf16 %v1924, %v1922
      %v2023 = vpack.c.bf16 %v1927, %v1925
      %v2024 = vpack.c.bf16 %v1928, %v1926
      %v2025 = vpack.c.bf16 %v1931, %v1929
      %v2026 = vpack.c.bf16 %v1932, %v1930
      %v2027 = vpack.c.bf16 %v1935, %v1933
      %v2028 = vpack.c.bf16 %v1936, %v1934
      %v2029 = vpack.c.bf16 %v1939, %v1937
      %v2030 = vpack.c.bf16 %v1940, %v1938
      %v2031 = vpack.c.bf16 %v1943, %v1941
      %v2032 = vpack.c.bf16 %v1944, %v1942
      %v2033 = vpack.c.bf16 %v1947, %v1945
      %v2034 = vpack.c.bf16 %v1948, %v1946
      %v2035 = vpack.c.bf16 %v1951, %v1949
      %v2036 = vpack.c.bf16 %v1952, %v1950
      %v2037 = vpack.c.bf16 %v1955, %v1953
      %v2038 = vpack.c.bf16 %v1956, %v1954
      %v2039 = vpack.c.bf16 %v1959, %v1957
      %v2040 = vpack.c.bf16 %v1960, %v1958
      %v2041 = vpack.c.bf16 %v1963, %v1961
      %v2042 = vpack.c.bf16 %v1964, %v1962
      %v2043 = vpack.c.bf16 %v1967, %v1965
      %v2044 = vpack.c.bf16 %v1968, %v1966
      %v2045 = vpack.c.bf16 %v1971, %v1969
      %v2046 = vpack.c.bf16 %v1972, %v1970
      %v2047 = vpack.c.bf16 %v1975, %v1973
      %v2048 = vpack.c.bf16 %v1976, %v1974
      %v2049 = vpack.c.bf16 %v1979, %v1977
      %v2050 = vpack.c.bf16 %v1980, %v1978
      %v2051 = vpack.c.bf16 %v1983, %v1981
      %v2052 = vpack.c.bf16 %v1984, %v1982
      %v2053 = vpack.c.bf16 %v1987, %v1985
      %v2054 = vpack.c.bf16 %v1988, %v1986
      %v2055 = vpack.c.bf16 %v1991, %v1989
      %v2056 = vpack.c.bf16 %v1992, %v1990
      %v2057 = vpack.c.bf16 %v1995, %v1993
      %v2058 = vpack.c.bf16 %v1996, %v1994
      %v2059 = vpack.c.bf16 %v1999, %v1997
      %v2060 = vpack.c.bf16 %v2000, %v1998
      %v2061 = vld [vmem:[%s2] sm:$0xff]
      %v2062 = vld [vmem:[%s2 + $0x8] sm:$0xff]
      %v2063 = vld [vmem:[%s2 + $0x10] sm:$0xff]
      %v2064 = vld [vmem:[%s2 + $0x18] sm:$0xff]
      %v2065 = vld [vmem:[%s2 + $0x20] sm:$0xff]
      %v2066 = vld [vmem:[%s2 + $0x28] sm:$0xff]
      %v2067 = vld [vmem:[%s2 + $0x30] sm:$0xff]
      %v2068 = vld [vmem:[%s2 + $0x38] sm:$0xff]
      %v2069 = vld [vmem:[%s2 + $0x40] sm:$0xff]
      %v2070 = vld [vmem:[%s2 + $0x48] sm:$0xff]
      %v2071 = vld [vmem:[%s2 + $0x50] sm:$0xff]
      %v2072 = vld [vmem:[%s2 + $0x58] sm:$0xff]
      %v2073 = vld [vmem:[%s2 + $0x60] sm:$0xff]
      %v2074 = vld [vmem:[%s2 + $0x68] sm:$0xff]
      %v2075 = vld [vmem:[%s2 + $0x70] sm:$0xff]
      %v2076 = vld [vmem:[%s2 + $0x78] sm:$0xff]
      %v2077 = vld [vmem:[%s2 + $0x80] sm:$0xff]
      %v2078 = vld [vmem:[%s2 + $0x88] sm:$0xff]
      %v2079 = vld [vmem:[%s2 + $0x90] sm:$0xff]
      %v2080 = vld [vmem:[%s2 + $0x98] sm:$0xff]
      %v2081 = vld [vmem:[%s2 + $0xa0] sm:$0xff]
      %v2082 = vld [vmem:[%s2 + $0xa8] sm:$0xff]
      %v2083 = vld [vmem:[%s2 + $0xb0] sm:$0xff]
      %v2084 = vld [vmem:[%s2 + $0xb8] sm:$0xff]
      %v2085 = vld [vmem:[%s2 + $0xc0] sm:$0xff]
      %v2086 = vld [vmem:[%s2 + $0xc8] sm:$0xff]
      %v2087 = vld [vmem:[%s2 + $0xd0] sm:$0xff]
      %v2088 = vld [vmem:[%s2 + $0xd8] sm:$0xff]
      %v2089 = vld [vmem:[%s2 + $0xe0] sm:$0xff]
      %v2090 = vld [vmem:[%s2 + $0xe8] sm:$0xff]
      %v2091 = vld [vmem:[%s2 + $0xf0] sm:$0xff]
      %v2092 = vld [vmem:[%s2 + $0xf8] sm:$0xff]
      %v2093 = vld [vmem:[%s2 + $0x100] sm:$0xff]
      %v2094 = vld [vmem:[%s2 + $0x108] sm:$0xff]
      %v2095 = vld [vmem:[%s2 + $0x110] sm:$0xff]
      %v2096 = vld [vmem:[%s2 + $0x118] sm:$0xff]
      %v2097 = vld [vmem:[%s2 + $0x120] sm:$0xff]
      %v2098 = vld [vmem:[%s2 + $0x128] sm:$0xff]
      %v2099 = vld [vmem:[%s2 + $0x130] sm:$0xff]
      %v2100 = vld [vmem:[%s2 + $0x138] sm:$0xff]
      %v2141 = vunpack.c.l.b16 %v2061
      %v2142 = vunpack.c.h.b16 %v2061
      %v2143 = vunpack.c.l.b16 %v2062
      %v2144 = vunpack.c.h.b16 %v2062
      %v2145 = vunpack.c.l.b16 %v2063
      %v2146 = vunpack.c.h.b16 %v2063
      %v2147 = vunpack.c.l.b16 %v2064
      %v2148 = vunpack.c.h.b16 %v2064
      %v2149 = vunpack.c.l.b16 %v2065
      %v2150 = vunpack.c.h.b16 %v2065
      %v2151 = vunpack.c.l.b16 %v2066
      %v2152 = vunpack.c.h.b16 %v2066
      %v2153 = vunpack.c.l.b16 %v2067
      %v2154 = vunpack.c.h.b16 %v2067
      %v2155 = vunpack.c.l.b16 %v2068
      %v2156 = vunpack.c.h.b16 %v2068
      %v2157 = vunpack.c.l.b16 %v2069
      %v2158 = vunpack.c.h.b16 %v2069
      %v2159 = vunpack.c.l.b16 %v2070
      %v2160 = vunpack.c.h.b16 %v2070
      %v2161 = vunpack.c.l.b16 %v2071
      %v2162 = vunpack.c.h.b16 %v2071
      %v2163 = vunpack.c.l.b16 %v2072
      %v2164 = vunpack.c.h.b16 %v2072
      %v2165 = vunpack.c.l.b16 %v2073
      %v2166 = vunpack.c.h.b16 %v2073
      %v2167 = vunpack.c.l.b16 %v2074
      %v2168 = vunpack.c.h.b16 %v2074
      %v2169 = vunpack.c.l.b16 %v2075
      %v2170 = vunpack.c.h.b16 %v2075
      %v2171 = vunpack.c.l.b16 %v2076
      %v2172 = vunpack.c.h.b16 %v2076
      %v2173 = vunpack.c.l.b16 %v2077
      %v2174 = vunpack.c.h.b16 %v2077
      %v2175 = vunpack.c.l.b16 %v2078
      %v2176 = vunpack.c.h.b16 %v2078
      %v2177 = vunpack.c.l.b16 %v2079
      %v2178 = vunpack.c.h.b16 %v2079
      %v2179 = vunpack.c.l.b16 %v2080
      %v2180 = vunpack.c.h.b16 %v2080
      %v2181 = vunpack.c.l.b16 %v2081
      %v2182 = vunpack.c.h.b16 %v2081
      %v2183 = vunpack.c.l.b16 %v2082
      %v2184 = vunpack.c.h.b16 %v2082
      %v2185 = vunpack.c.l.b16 %v2083
      %v2186 = vunpack.c.h.b16 %v2083
      %v2187 = vunpack.c.l.b16 %v2084
      %v2188 = vunpack.c.h.b16 %v2084
      %v2189 = vunpack.c.l.b16 %v2085
      %v2190 = vunpack.c.h.b16 %v2085
      %v2191 = vunpack.c.l.b16 %v2086
      %v2192 = vunpack.c.h.b16 %v2086
      %v2193 = vunpack.c.l.b16 %v2087
      %v2194 = vunpack.c.h.b16 %v2087
      %v2195 = vunpack.c.l.b16 %v2088
      %v2196 = vunpack.c.h.b16 %v2088
      %v2197 = vunpack.c.l.b16 %v2089
      %v2198 = vunpack.c.h.b16 %v2089
      %v2199 = vunpack.c.l.b16 %v2090
      %v2200 = vunpack.c.h.b16 %v2090
      %v2201 = vunpack.c.l.b16 %v2091
      %v2202 = vunpack.c.h.b16 %v2091
      %v2203 = vunpack.c.l.b16 %v2092
      %v2204 = vunpack.c.h.b16 %v2092
      %v2205 = vunpack.c.l.b16 %v2093
      %v2206 = vunpack.c.h.b16 %v2093
      %v2207 = vunpack.c.l.b16 %v2094
      %v2208 = vunpack.c.h.b16 %v2094
      %v2209 = vunpack.c.l.b16 %v2095
      %v2210 = vunpack.c.h.b16 %v2095
      %v2211 = vunpack.c.l.b16 %v2096
      %v2212 = vunpack.c.h.b16 %v2096
      %v2213 = vunpack.c.l.b16 %v2097
      %v2214 = vunpack.c.h.b16 %v2097
      %v2215 = vunpack.c.l.b16 %v2098
      %v2216 = vunpack.c.h.b16 %v2098
      %v2217 = vunpack.c.l.b16 %v2099
      %v2218 = vunpack.c.h.b16 %v2099
      %v2219 = vunpack.c.l.b16 %v2100
      %v2220 = vunpack.c.h.b16 %v2100
      %v2221 = vpack.c.b16 %v2145, %v2141
      %v2222 = vpack.c.b16 %v2146, %v2142
      %v2223 = vpack.c.b16 %v2147, %v2143
      %v2224 = vpack.c.b16 %v2148, %v2144
      %v2225 = vpack.c.b16 %v2153, %v2149
      %v2226 = vpack.c.b16 %v2154, %v2150
      %v2227 = vpack.c.b16 %v2155, %v2151
      %v2228 = vpack.c.b16 %v2156, %v2152
      %v2229 = vpack.c.b16 %v2161, %v2157
      %v2230 = vpack.c.b16 %v2162, %v2158
      %v2231 = vpack.c.b16 %v2163, %v2159
      %v2232 = vpack.c.b16 %v2164, %v2160
      %v2233 = vpack.c.b16 %v2169, %v2165
      %v2234 = vpack.c.b16 %v2170, %v2166
      %v2235 = vpack.c.b16 %v2171, %v2167
      %v2236 = vpack.c.b16 %v2172, %v2168
      %v2237 = vpack.c.b16 %v2177, %v2173
      %v2238 = vpack.c.b16 %v2178, %v2174
      %v2239 = vpack.c.b16 %v2179, %v2175
      %v2240 = vpack.c.b16 %v2180, %v2176
      %v2241 = vpack.c.b16 %v2185, %v2181
      %v2242 = vpack.c.b16 %v2186, %v2182
      %v2243 = vpack.c.b16 %v2187, %v2183
      %v2244 = vpack.c.b16 %v2188, %v2184
      %v2245 = vpack.c.b16 %v2193, %v2189
      %v2246 = vpack.c.b16 %v2194, %v2190
      %v2247 = vpack.c.b16 %v2195, %v2191
      %v2248 = vpack.c.b16 %v2196, %v2192
      %v2249 = vpack.c.b16 %v2201, %v2197
      %v2250 = vpack.c.b16 %v2202, %v2198
      %v2251 = vpack.c.b16 %v2203, %v2199
      %v2252 = vpack.c.b16 %v2204, %v2200
      %v2253 = vpack.c.b16 %v2209, %v2205
      %v2254 = vpack.c.b16 %v2210, %v2206
      %v2255 = vpack.c.b16 %v2211, %v2207
      %v2256 = vpack.c.b16 %v2212, %v2208
      %v2257 = vpack.c.b16 %v2217, %v2213
      %v2258 = vpack.c.b16 %v2218, %v2214
      %v2259 = vpack.c.b16 %v2219, %v2215
      %v2260 = vpack.c.b16 %v2220, %v2216
      %vm2291 = vcmask 785408
      %v2293 = vsel %vm2291, %v2224, 0
      %v2296 = vsel %vm2291, %v2228, 0
      %v2299 = vsel %vm2291, %v2232, 0
      %v2302 = vsel %vm2291, %v2236, 0
      %v2305 = vsel %vm2291, %v2240, 0
      %v2308 = vsel %vm2291, %v2244, 0
      %v2311 = vsel %vm2291, %v2248, 0
      %v2314 = vsel %vm2291, %v2252, 0
      %v2317 = vsel %vm2291, %v2256, 0
      %v2320 = vsel %vm2291, %v2260, 0
      %2322 = vmatpush.bf16.msra.mxu0 %v2015
      %2323 = vmatpush.bf16.msra.mxu0 %v2013
      %2324 = vmatpush.bf16.msra.mxu0 %v2011
      %2325 = vmatpush.bf16.msra.mxu0 %v2009
      %2326 = vmatpush.bf16.msra.mxu0 %v2007
      %2327 = vmatpush.bf16.msra.mxu0 %v2005
      %2328 = vmatpush.bf16.msra.mxu0 %v2003
      %2329 = vmatpush.bf16.msra.mxu0 %v2001
      %2330 = vmatmul.bf16.gmra.mxu0 %v2221
      %v2331 = vpop.f32.mrf.mxu0
      %v2332 = vadd.f32 0.0, %v2331
      %v2333 = vpop.f32.mrf.mxu0
      %v2334 = vadd.f32 0.0, %v2333
      %2335 = vmatmul.bf16.gmra.mxu0 %v2225
      %v2336 = vpop.f32.mrf.mxu0
      %v2337 = vadd.f32 0.0, %v2336
      %v2338 = vpop.f32.mrf.mxu0
      %v2339 = vadd.f32 0.0, %v2338
      %2340 = vmatmul.bf16.gmra.mxu0 %v2229
      %v2341 = vpop.f32.mrf.mxu0
      %v2342 = vadd.f32 0.0, %v2341
      %v2343 = vpop.f32.mrf.mxu0
      %v2344 = vadd.f32 0.0, %v2343
      %2345 = vmatmul.bf16.gmra.mxu0 %v2233
      %v2346 = vpop.f32.mrf.mxu0
      %v2347 = vadd.f32 0.0, %v2346
      %v2348 = vpop.f32.mrf.mxu0
      %v2349 = vadd.f32 0.0, %v2348
      %2350 = vmatmul.bf16.gmra.mxu0 %v2237
      %v2351 = vpop.f32.mrf.mxu0
      %v2352 = vadd.f32 0.0, %v2351
      %v2353 = vpop.f32.mrf.mxu0
      %v2354 = vadd.f32 0.0, %v2353
      %2355 = vmatmul.bf16.gmra.mxu0 %v2241
      %v2356 = vpop.f32.mrf.mxu0
      %v2357 = vadd.f32 0.0, %v2356
      %v2358 = vpop.f32.mrf.mxu0
      %v2359 = vadd.f32 0.0, %v2358
      %2360 = vmatmul.bf16.gmra.mxu0 %v2245
      %v2361 = vpop.f32.mrf.mxu0
      %v2362 = vadd.f32 0.0, %v2361
      %v2363 = vpop.f32.mrf.mxu0
      %v2364 = vadd.f32 0.0, %v2363
      %2365 = vmatmul.bf16.gmra.mxu0 %v2249
      %v2366 = vpop.f32.mrf.mxu0
      %v2367 = vadd.f32 0.0, %v2366
      %v2368 = vpop.f32.mrf.mxu0
      %v2369 = vadd.f32 0.0, %v2368
      %2370 = vmatmul.bf16.gmra.mxu0 %v2253
      %v2371 = vpop.f32.mrf.mxu0
      %v2372 = vadd.f32 0.0, %v2371
      %v2373 = vpop.f32.mrf.mxu0
      %v2374 = vadd.f32 0.0, %v2373
      %2375 = vmatmul.bf16.gmra.mxu0 %v2257
      %v2376 = vpop.f32.mrf.mxu0
      %v2377 = vadd.f32 0.0, %v2376
      %v2378 = vpop.f32.mrf.mxu0
      %v2379 = vadd.f32 0.0, %v2378
      %2380 = vdwg.mxu0
      %2381 = vmatpush.bf16.msra.mxu0 %v2031
      %2382 = vmatpush.bf16.msra.mxu0 %v2029
      %2383 = vmatpush.bf16.msra.mxu0 %v2027
      %2384 = vmatpush.bf16.msra.mxu0 %v2025
      %2385 = vmatpush.bf16.msra.mxu0 %v2023
      %2386 = vmatpush.bf16.msra.mxu0 %v2021
      %2387 = vmatpush.bf16.msra.mxu0 %v2019
      %2388 = vmatpush.bf16.msra.mxu0 %v2017
      %2389 = vmatmul.bf16.gmra.mxu0 %v2222
      %v2390 = vpop.f32.mrf.mxu0
      %v2391 = vadd.f32 %v2332, %v2390
      %v2392 = vpop.f32.mrf.mxu0
      %v2393 = vadd.f32 %v2334, %v2392
      %2394 = vmatmul.bf16.gmra.mxu0 %v2226
      %v2395 = vpop.f32.mrf.mxu0
      %v2396 = vadd.f32 %v2337, %v2395
      %v2397 = vpop.f32.mrf.mxu0
      %v2398 = vadd.f32 %v2339, %v2397
      %2399 = vmatmul.bf16.gmra.mxu0 %v2230
      %v2400 = vpop.f32.mrf.mxu0
      %v2401 = vadd.f32 %v2342, %v2400
      %v2402 = vpop.f32.mrf.mxu0
      %v2403 = vadd.f32 %v2344, %v2402
      %2404 = vmatmul.bf16.gmra.mxu0 %v2234
      %v2405 = vpop.f32.mrf.mxu0
      %v2406 = vadd.f32 %v2347, %v2405
      %v2407 = vpop.f32.mrf.mxu0
      %v2408 = vadd.f32 %v2349, %v2407
      %2409 = vmatmul.bf16.gmra.mxu0 %v2238
      %v2410 = vpop.f32.mrf.mxu0
      %v2411 = vadd.f32 %v2352, %v2410
      %v2412 = vpop.f32.mrf.mxu0
      %v2413 = vadd.f32 %v2354, %v2412
      %2414 = vmatmul.bf16.gmra.mxu0 %v2242
      %v2415 = vpop.f32.mrf.mxu0
      %v2416 = vadd.f32 %v2357, %v2415
      %v2417 = vpop.f32.mrf.mxu0
      %v2418 = vadd.f32 %v2359, %v2417
      %2419 = vmatmul.bf16.gmra.mxu0 %v2246
      %v2420 = vpop.f32.mrf.mxu0
      %v2421 = vadd.f32 %v2362, %v2420
      %v2422 = vpop.f32.mrf.mxu0
      %v2423 = vadd.f32 %v2364, %v2422
      %2424 = vmatmul.bf16.gmra.mxu0 %v2250
      %v2425 = vpop.f32.mrf.mxu0
      %v2426 = vadd.f32 %v2367, %v2425
      %v2427 = vpop.f32.mrf.mxu0
      %v2428 = vadd.f32 %v2369, %v2427
      %2429 = vmatmul.bf16.gmra.mxu0 %v2254
      %v2430 = vpop.f32.mrf.mxu0
      %v2431 = vadd.f32 %v2372, %v2430
      %v2432 = vpop.f32.mrf.mxu0
      %v2433 = vadd.f32 %v2374, %v2432
      %2434 = vmatmul.bf16.gmra.mxu0 %v2258
      %v2435 = vpop.f32.mrf.mxu0
      %v2436 = vadd.f32 %v2377, %v2435
      %v2437 = vpop.f32.mrf.mxu0
      %v2438 = vadd.f32 %v2379, %v2437
      %2439 = vdwg.mxu0
      %2440 = vmatpush.bf16.msra.mxu0 %v2047
      %2441 = vmatpush.bf16.msra.mxu0 %v2045
      %2442 = vmatpush.bf16.msra.mxu0 %v2043
      %2443 = vmatpush.bf16.msra.mxu0 %v2041
      %2444 = vmatpush.bf16.msra.mxu0 %v2039
      %2445 = vmatpush.bf16.msra.mxu0 %v2037
      %2446 = vmatpush.bf16.msra.mxu0 %v2035
      %2447 = vmatpush.bf16.msra.mxu0 %v2033
      %2448 = vmatmul.bf16.gmra.mxu0 %v2223
      %v2449 = vpop.f32.mrf.mxu0
      %v2450 = vadd.f32 %v2391, %v2449
      %v2451 = vpop.f32.mrf.mxu0
      %v2452 = vadd.f32 %v2393, %v2451
      %2453 = vmatmul.bf16.gmra.mxu0 %v2227
      %v2454 = vpop.f32.mrf.mxu0
      %v2455 = vadd.f32 %v2396, %v2454
      %v2456 = vpop.f32.mrf.mxu0
      %v2457 = vadd.f32 %v2398, %v2456
      %2458 = vmatmul.bf16.gmra.mxu0 %v2231
      %v2459 = vpop.f32.mrf.mxu0
      %v2460 = vadd.f32 %v2401, %v2459
      %v2461 = vpop.f32.mrf.mxu0
      %v2462 = vadd.f32 %v2403, %v2461
      %2463 = vmatmul.bf16.gmra.mxu0 %v2235
      %v2464 = vpop.f32.mrf.mxu0
      %v2465 = vadd.f32 %v2406, %v2464
      %v2466 = vpop.f32.mrf.mxu0
      %v2467 = vadd.f32 %v2408, %v2466
      %2468 = vmatmul.bf16.gmra.mxu0 %v2239
      %v2469 = vpop.f32.mrf.mxu0
      %v2470 = vadd.f32 %v2411, %v2469
      %v2471 = vpop.f32.mrf.mxu0
      %v2472 = vadd.f32 %v2413, %v2471
      %2473 = vmatmul.bf16.gmra.mxu0 %v2243
      %v2474 = vpop.f32.mrf.mxu0
      %v2475 = vadd.f32 %v2416, %v2474
      %v2476 = vpop.f32.mrf.mxu0
      %v2477 = vadd.f32 %v2418, %v2476
      %2478 = vmatmul.bf16.gmra.mxu0 %v2247
      %v2479 = vpop.f32.mrf.mxu0
      %v2480 = vadd.f32 %v2421, %v2479
      %v2481 = vpop.f32.mrf.mxu0
      %v2482 = vadd.f32 %v2423, %v2481
      %2483 = vmatmul.bf16.gmra.mxu0 %v2251
      %v2484 = vpop.f32.mrf.mxu0
      %v2485 = vadd.f32 %v2426, %v2484
      %v2486 = vpop.f32.mrf.mxu0
      %v2487 = vadd.f32 %v2428, %v2486
      %2488 = vmatmul.bf16.gmra.mxu0 %v2255
      %v2489 = vpop.f32.mrf.mxu0
      %v2490 = vadd.f32 %v2431, %v2489
      %v2491 = vpop.f32.mrf.mxu0
      %v2492 = vadd.f32 %v2433, %v2491
      %2493 = vmatmul.bf16.gmra.mxu0 %v2259
      %v2494 = vpop.f32.mrf.mxu0
      %v2495 = vadd.f32 %v2436, %v2494
      %v2496 = vpop.f32.mrf.mxu0
      %v2497 = vadd.f32 %v2438, %v2496
      %2498 = vdwg.mxu0
      %2499 = vmatpush.bf16.msra.mxu0 0
      %2500 = vmatpush.bf16.msra.mxu0 0
      %2501 = vmatpush.bf16.msra.mxu0 %v2059
      %2502 = vmatpush.bf16.msra.mxu0 %v2057
      %2503 = vmatpush.bf16.msra.mxu0 %v2055
      %2504 = vmatpush.bf16.msra.mxu0 %v2053
      %2505 = vmatpush.bf16.msra.mxu0 %v2051
      %2506 = vmatpush.bf16.msra.mxu0 %v2049
      %2507 = vmatmul.bf16.gmra.mxu0 %v2293
      %v2508 = vpop.f32.mrf.mxu0
      %v2509 = vadd.f32 %v2450, %v2508
      %v2510 = vpop.f32.mrf.mxu0
      %v2511 = vadd.f32 %v2452, %v2510
      %2512 = vmatmul.bf16.gmra.mxu0 %v2296
      %v2513 = vpop.f32.mrf.mxu0
      %v2514 = vadd.f32 %v2455, %v2513
      %v2515 = vpop.f32.mrf.mxu0
      %v2516 = vadd.f32 %v2457, %v2515
      %2517 = vmatmul.bf16.gmra.mxu0 %v2299
      %v2518 = vpop.f32.mrf.mxu0
      %v2519 = vadd.f32 %v2460, %v2518
      %v2520 = vpop.f32.mrf.mxu0
      %v2521 = vadd.f32 %v2462, %v2520
      %2522 = vmatmul.bf16.gmra.mxu0 %v2302
      %v2523 = vpop.f32.mrf.mxu0
      %v2524 = vadd.f32 %v2465, %v2523
      %v2525 = vpop.f32.mrf.mxu0
      %v2526 = vadd.f32 %v2467, %v2525
      %2527 = vmatmul.bf16.gmra.mxu0 %v2305
      %v2528 = vpop.f32.mrf.mxu0
      %v2529 = vadd.f32 %v2470, %v2528
      %v2530 = vpop.f32.mrf.mxu0
      %v2531 = vadd.f32 %v2472, %v2530
      %2532 = vmatmul.bf16.gmra.mxu0 %v2308
      %v2533 = vpop.f32.mrf.mxu0
      %v2534 = vadd.f32 %v2475, %v2533
      %v2535 = vpop.f32.mrf.mxu0
      %v2536 = vadd.f32 %v2477, %v2535
      %2537 = vmatmul.bf16.gmra.mxu0 %v2311
      %v2538 = vpop.f32.mrf.mxu0
      %v2539 = vadd.f32 %v2480, %v2538
      %v2540 = vpop.f32.mrf.mxu0
      %v2541 = vadd.f32 %v2482, %v2540
      %2542 = vmatmul.bf16.gmra.mxu0 %v2314
      %v2543 = vpop.f32.mrf.mxu0
      %v2544 = vadd.f32 %v2485, %v2543
      %v2545 = vpop.f32.mrf.mxu0
      %v2546 = vadd.f32 %v2487, %v2545
      %2547 = vmatmul.bf16.gmra.mxu0 %v2317
      %v2548 = vpop.f32.mrf.mxu0
      %v2549 = vadd.f32 %v2490, %v2548
      %v2550 = vpop.f32.mrf.mxu0
      %v2551 = vadd.f32 %v2492, %v2550
      %2552 = vmatmul.bf16.gmra.mxu0 %v2320
      %v2553 = vpop.f32.mrf.mxu0
      %v2554 = vadd.f32 %v2495, %v2553
      %v2555 = vpop.f32.mrf.mxu0
      %v2556 = vadd.f32 %v2497, %v2555
      %2557 = vdwg.mxu0
      %2558 = vmatpush.bf16.msra.mxu0 %v2016
      %2559 = vmatpush.bf16.msra.mxu0 %v2014
      %2560 = vmatpush.bf16.msra.mxu0 %v2012
      %2561 = vmatpush.bf16.msra.mxu0 %v2010
      %2562 = vmatpush.bf16.msra.mxu0 %v2008
      %2563 = vmatpush.bf16.msra.mxu0 %v2006
      %2564 = vmatpush.bf16.msra.mxu0 %v2004
      %2565 = vmatpush.bf16.msra.mxu0 %v2002
      %2566 = vmatmul.bf16.gmra.mxu0 %v2221
      %v2567 = vpop.f32.mrf.mxu0
      %v2568 = vadd.f32 0.0, %v2567
      %v2569 = vpop.f32.mrf.mxu0
      %v2570 = vadd.f32 0.0, %v2569
      %2571 = vmatmul.bf16.gmra.mxu0 %v2225
      %v2572 = vpop.f32.mrf.mxu0
      %v2573 = vadd.f32 0.0, %v2572
      %v2574 = vpop.f32.mrf.mxu0
      %v2575 = vadd.f32 0.0, %v2574
      %2576 = vmatmul.bf16.gmra.mxu0 %v2229
      %v2577 = vpop.f32.mrf.mxu0
      %v2578 = vadd.f32 0.0, %v2577
      %v2579 = vpop.f32.mrf.mxu0
      %v2580 = vadd.f32 0.0, %v2579
      %2581 = vmatmul.bf16.gmra.mxu0 %v2233
      %v2582 = vpop.f32.mrf.mxu0
      %v2583 = vadd.f32 0.0, %v2582
      %v2584 = vpop.f32.mrf.mxu0
      %v2585 = vadd.f32 0.0, %v2584
      %2586 = vmatmul.bf16.gmra.mxu0 %v2237
      %v2587 = vpop.f32.mrf.mxu0
      %v2588 = vadd.f32 0.0, %v2587
      %v2589 = vpop.f32.mrf.mxu0
      %v2590 = vadd.f32 0.0, %v2589
      %2591 = vmatmul.bf16.gmra.mxu0 %v2241
      %v2592 = vpop.f32.mrf.mxu0
      %v2593 = vadd.f32 0.0, %v2592
      %v2594 = vpop.f32.mrf.mxu0
      %v2595 = vadd.f32 0.0, %v2594
      %2596 = vmatmul.bf16.gmra.mxu0 %v2245
      %v2597 = vpop.f32.mrf.mxu0
      %v2598 = vadd.f32 0.0, %v2597
      %v2599 = vpop.f32.mrf.mxu0
      %v2600 = vadd.f32 0.0, %v2599
      %2601 = vmatmul.bf16.gmra.mxu0 %v2249
      %v2602 = vpop.f32.mrf.mxu0
      %v2603 = vadd.f32 0.0, %v2602
      %v2604 = vpop.f32.mrf.mxu0
      %v2605 = vadd.f32 0.0, %v2604
      %2606 = vmatmul.bf16.gmra.mxu0 %v2253
      %v2607 = vpop.f32.mrf.mxu0
      %v2608 = vadd.f32 0.0, %v2607
      %v2609 = vpop.f32.mrf.mxu0
      %v2610 = vadd.f32 0.0, %v2609
      %2611 = vmatmul.bf16.gmra.mxu0 %v2257
      %v2612 = vpop.f32.mrf.mxu0
      %v2613 = vadd.f32 0.0, %v2612
      %v2614 = vpop.f32.mrf.mxu0
      %v2615 = vadd.f32 0.0, %v2614
      %2616 = vdwg.mxu0
      %2617 = vmatpush.bf16.msra.mxu0 %v2032
      %2618 = vmatpush.bf16.msra.mxu0 %v2030
      %2619 = vmatpush.bf16.msra.mxu0 %v2028
      %2620 = vmatpush.bf16.msra.mxu0 %v2026
      %2621 = vmatpush.bf16.msra.mxu0 %v2024
      %2622 = vmatpush.bf16.msra.mxu0 %v2022
      %2623 = vmatpush.bf16.msra.mxu0 %v2020
      %2624 = vmatpush.bf16.msra.mxu0 %v2018
      %2625 = vmatmul.bf16.gmra.mxu0 %v2222
      %v2626 = vpop.f32.mrf.mxu0
      %v2627 = vadd.f32 %v2568, %v2626
      %v2628 = vpop.f32.mrf.mxu0
      %v2629 = vadd.f32 %v2570, %v2628
      %2630 = vmatmul.bf16.gmra.mxu0 %v2226
      %v2631 = vpop.f32.mrf.mxu0
      %v2632 = vadd.f32 %v2573, %v2631
      %v2633 = vpop.f32.mrf.mxu0
      %v2634 = vadd.f32 %v2575, %v2633
      %2635 = vmatmul.bf16.gmra.mxu0 %v2230
      %v2636 = vpop.f32.mrf.mxu0
      %v2637 = vadd.f32 %v2578, %v2636
      %v2638 = vpop.f32.mrf.mxu0
      %v2639 = vadd.f32 %v2580, %v2638
      %2640 = vmatmul.bf16.gmra.mxu0 %v2234
      %v2641 = vpop.f32.mrf.mxu0
      %v2642 = vadd.f32 %v2583, %v2641
      %v2643 = vpop.f32.mrf.mxu0
      %v2644 = vadd.f32 %v2585, %v2643
      %2645 = vmatmul.bf16.gmra.mxu0 %v2238
      %v2646 = vpop.f32.mrf.mxu0
      %v2647 = vadd.f32 %v2588, %v2646
      %v2648 = vpop.f32.mrf.mxu0
      %v2649 = vadd.f32 %v2590, %v2648
      %2650 = vmatmul.bf16.gmra.mxu0 %v2242
      %v2651 = vpop.f32.mrf.mxu0
      %v2652 = vadd.f32 %v2593, %v2651
      %v2653 = vpop.f32.mrf.mxu0
      %v2654 = vadd.f32 %v2595, %v2653
      %2655 = vmatmul.bf16.gmra.mxu0 %v2246
      %v2656 = vpop.f32.mrf.mxu0
      %v2657 = vadd.f32 %v2598, %v2656
      %v2658 = vpop.f32.mrf.mxu0
      %v2659 = vadd.f32 %v2600, %v2658
      %2660 = vmatmul.bf16.gmra.mxu0 %v2250
      %v2661 = vpop.f32.mrf.mxu0
      %v2662 = vadd.f32 %v2603, %v2661
      %v2663 = vpop.f32.mrf.mxu0
      %v2664 = vadd.f32 %v2605, %v2663
      %2665 = vmatmul.bf16.gmra.mxu0 %v2254
      %v2666 = vpop.f32.mrf.mxu0
      %v2667 = vadd.f32 %v2608, %v2666
      %v2668 = vpop.f32.mrf.mxu0
      %v2669 = vadd.f32 %v2610, %v2668
      %2670 = vmatmul.bf16.gmra.mxu0 %v2258
      %v2671 = vpop.f32.mrf.mxu0
      %v2672 = vadd.f32 %v2613, %v2671
      %v2673 = vpop.f32.mrf.mxu0
      %v2674 = vadd.f32 %v2615, %v2673
      %2675 = vdwg.mxu0
      %2676 = vmatpush.bf16.msra.mxu0 %v2048
      %2677 = vmatpush.bf16.msra.mxu0 %v2046
      %2678 = vmatpush.bf16.msra.mxu0 %v2044
      %2679 = vmatpush.bf16.msra.mxu0 %v2042
      %2680 = vmatpush.bf16.msra.mxu0 %v2040
      %2681 = vmatpush.bf16.msra.mxu0 %v2038
      %2682 = vmatpush.bf16.msra.mxu0 %v2036
      %2683 = vmatpush.bf16.msra.mxu0 %v2034
      %2684 = vmatmul.bf16.gmra.mxu0 %v2223
      %v2685 = vpop.f32.mrf.mxu0
      %v2686 = vadd.f32 %v2627, %v2685
      %v2687 = vpop.f32.mrf.mxu0
      %v2688 = vadd.f32 %v2629, %v2687
      %2689 = vmatmul.bf16.gmra.mxu0 %v2227
      %v2690 = vpop.f32.mrf.mxu0
      %v2691 = vadd.f32 %v2632, %v2690
      %v2692 = vpop.f32.mrf.mxu0
      %v2693 = vadd.f32 %v2634, %v2692
      %2694 = vmatmul.bf16.gmra.mxu0 %v2231
      %v2695 = vpop.f32.mrf.mxu0
      %v2696 = vadd.f32 %v2637, %v2695
      %v2697 = vpop.f32.mrf.mxu0
      %v2698 = vadd.f32 %v2639, %v2697
      %2699 = vmatmul.bf16.gmra.mxu0 %v2235
      %v2700 = vpop.f32.mrf.mxu0
      %v2701 = vadd.f32 %v2642, %v2700
      %v2702 = vpop.f32.mrf.mxu0
      %v2703 = vadd.f32 %v2644, %v2702
      %2704 = vmatmul.bf16.gmra.mxu0 %v2239
      %v2705 = vpop.f32.mrf.mxu0
      %v2706 = vadd.f32 %v2647, %v2705
      %v2707 = vpop.f32.mrf.mxu0
      %v2708 = vadd.f32 %v2649, %v2707
      %2709 = vmatmul.bf16.gmra.mxu0 %v2243
      %v2710 = vpop.f32.mrf.mxu0
      %v2711 = vadd.f32 %v2652, %v2710
      %v2712 = vpop.f32.mrf.mxu0
      %v2713 = vadd.f32 %v2654, %v2712
      %2714 = vmatmul.bf16.gmra.mxu0 %v2247
      %v2715 = vpop.f32.mrf.mxu0
      %v2716 = vadd.f32 %v2657, %v2715
      %v2717 = vpop.f32.mrf.mxu0
      %v2718 = vadd.f32 %v2659, %v2717
      %2719 = vmatmul.bf16.gmra.mxu0 %v2251
      %v2720 = vpop.f32.mrf.mxu0
      %v2721 = vadd.f32 %v2662, %v2720
      %v2722 = vpop.f32.mrf.mxu0
      %v2723 = vadd.f32 %v2664, %v2722
      %2724 = vmatmul.bf16.gmra.mxu0 %v2255
      %v2725 = vpop.f32.mrf.mxu0
      %v2726 = vadd.f32 %v2667, %v2725
      %v2727 = vpop.f32.mrf.mxu0
      %v2728 = vadd.f32 %v2669, %v2727
      %2729 = vmatmul.bf16.gmra.mxu0 %v2259
      %v2730 = vpop.f32.mrf.mxu0
      %v2731 = vadd.f32 %v2672, %v2730
      %v2732 = vpop.f32.mrf.mxu0
      %v2733 = vadd.f32 %v2674, %v2732
      %2734 = vdwg.mxu0
      %2735 = vmatpush.bf16.msra.mxu0 0
      %2736 = vmatpush.bf16.msra.mxu0 0
      %2737 = vmatpush.bf16.msra.mxu0 %v2060
      %2738 = vmatpush.bf16.msra.mxu0 %v2058
      %2739 = vmatpush.bf16.msra.mxu0 %v2056
      %2740 = vmatpush.bf16.msra.mxu0 %v2054
      %2741 = vmatpush.bf16.msra.mxu0 %v2052
      %2742 = vmatpush.bf16.msra.mxu0 %v2050
      %2743 = vmatmul.bf16.gmra.mxu0 %v2293
      %v2744 = vpop.f32.mrf.mxu0
      %v2745 = vadd.f32 %v2686, %v2744
      %v2746 = vpop.f32.mrf.mxu0
      %v2747 = vadd.f32 %v2688, %v2746
      %2748 = vmatmul.bf16.gmra.mxu0 %v2296
      %v2749 = vpop.f32.mrf.mxu0
      %v2750 = vadd.f32 %v2691, %v2749
      %v2751 = vpop.f32.mrf.mxu0
      %v2752 = vadd.f32 %v2693, %v2751
      %2753 = vmatmul.bf16.gmra.mxu0 %v2299
      %v2754 = vpop.f32.mrf.mxu0
      %v2755 = vadd.f32 %v2696, %v2754
      %v2756 = vpop.f32.mrf.mxu0
      %v2757 = vadd.f32 %v2698, %v2756
      %2758 = vmatmul.bf16.gmra.mxu0 %v2302
      %v2759 = vpop.f32.mrf.mxu0
      %v2760 = vadd.f32 %v2701, %v2759
      %v2761 = vpop.f32.mrf.mxu0
      %v2762 = vadd.f32 %v2703, %v2761
      %2763 = vmatmul.bf16.gmra.mxu0 %v2305
      %v2764 = vpop.f32.mrf.mxu0
      %v2765 = vadd.f32 %v2706, %v2764
      %v2766 = vpop.f32.mrf.mxu0
      %v2767 = vadd.f32 %v2708, %v2766
      %2768 = vmatmul.bf16.gmra.mxu0 %v2308
      %v2769 = vpop.f32.mrf.mxu0
      %v2770 = vadd.f32 %v2711, %v2769
      %v2771 = vpop.f32.mrf.mxu0
      %v2772 = vadd.f32 %v2713, %v2771
      %2773 = vmatmul.bf16.gmra.mxu0 %v2311
      %v2774 = vpop.f32.mrf.mxu0
      %v2775 = vadd.f32 %v2716, %v2774
      %v2776 = vpop.f32.mrf.mxu0
      %v2777 = vadd.f32 %v2718, %v2776
      %2778 = vmatmul.bf16.gmra.mxu0 %v2314
      %v2779 = vpop.f32.mrf.mxu0
      %v2780 = vadd.f32 %v2721, %v2779
      %v2781 = vpop.f32.mrf.mxu0
      %v2782 = vadd.f32 %v2723, %v2781
      %2783 = vmatmul.bf16.gmra.mxu0 %v2317
      %v2784 = vpop.f32.mrf.mxu0
      %v2785 = vadd.f32 %v2726, %v2784
      %v2786 = vpop.f32.mrf.mxu0
      %v2787 = vadd.f32 %v2728, %v2786
      %2788 = vmatmul.bf16.gmra.mxu0 %v2320
      %v2789 = vpop.f32.mrf.mxu0
      %v2790 = vadd.f32 %v2731, %v2789
      %v2791 = vpop.f32.mrf.mxu0
      %v2792 = vadd.f32 %v2733, %v2791
      %2793 = vdwg.mxu0
      %vm2794 = vcmask 556032
      %v2795 = vsel %vm2794, %v2745, 0.0
      %v2796 = vadd.f32 %v2509, %v2795
      %2797 = vadd.xlane.f32.xlu0 %v2796
      %v2798 = vpop.xlane.xlu0 %2797
      %v2799 = vsel %vm2794, %v2747, 0.0
      %v2800 = vadd.f32 %v2511, %v2799
      %2801 = vadd.xlane.f32.xlu0 %v2800
      %v2802 = vpop.xlane.xlu0 %2801
      %v2803 = vsel %vm2794, %v2750, 0.0
      %v2804 = vadd.f32 %v2514, %v2803
      %2805 = vadd.xlane.f32.xlu0 %v2804
      %v2806 = vpop.xlane.xlu0 %2805
      %v2807 = vsel %vm2794, %v2752, 0.0
      %v2808 = vadd.f32 %v2516, %v2807
      %2809 = vadd.xlane.f32.xlu0 %v2808
      %v2810 = vpop.xlane.xlu0 %2809
      %v2811 = vsel %vm2794, %v2755, 0.0
      %v2812 = vadd.f32 %v2519, %v2811
      %2813 = vadd.xlane.f32.xlu0 %v2812
      %v2814 = vpop.xlane.xlu0 %2813
      %v2815 = vsel %vm2794, %v2757, 0.0
      %v2816 = vadd.f32 %v2521, %v2815
      %2817 = vadd.xlane.f32.xlu0 %v2816
      %v2818 = vpop.xlane.xlu0 %2817
      %v2819 = vsel %vm2794, %v2760, 0.0
      %v2820 = vadd.f32 %v2524, %v2819
      %2821 = vadd.xlane.f32.xlu0 %v2820
      %v2822 = vpop.xlane.xlu0 %2821
      %v2823 = vsel %vm2794, %v2762, 0.0
      %v2824 = vadd.f32 %v2526, %v2823
      %2825 = vadd.xlane.f32.xlu0 %v2824
      %v2826 = vpop.xlane.xlu0 %2825
      %v2827 = vsel %vm2794, %v2765, 0.0
      %v2828 = vadd.f32 %v2529, %v2827
      %2829 = vadd.xlane.f32.xlu0 %v2828
      %v2830 = vpop.xlane.xlu0 %2829
      %v2831 = vsel %vm2794, %v2767, 0.0
      %v2832 = vadd.f32 %v2531, %v2831
      %2833 = vadd.xlane.f32.xlu0 %v2832
      %v2834 = vpop.xlane.xlu0 %2833
      %v2835 = vsel %vm2794, %v2770, 0.0
      %v2836 = vadd.f32 %v2534, %v2835
      %2837 = vadd.xlane.f32.xlu0 %v2836
      %v2838 = vpop.xlane.xlu0 %2837
      %v2839 = vsel %vm2794, %v2772, 0.0
      %v2840 = vadd.f32 %v2536, %v2839
      %2841 = vadd.xlane.f32.xlu0 %v2840
      %v2842 = vpop.xlane.xlu0 %2841
      %v2843 = vsel %vm2794, %v2775, 0.0
      %v2844 = vadd.f32 %v2539, %v2843
      %2845 = vadd.xlane.f32.xlu0 %v2844
      %v2846 = vpop.xlane.xlu0 %2845
      %v2847 = vsel %vm2794, %v2777, 0.0
      %v2848 = vadd.f32 %v2541, %v2847
      %2849 = vadd.xlane.f32.xlu0 %v2848
      %v2850 = vpop.xlane.xlu0 %2849
      %v2851 = vsel %vm2794, %v2780, 0.0
      %v2852 = vadd.f32 %v2544, %v2851
      %2853 = vadd.xlane.f32.xlu0 %v2852
      %v2854 = vpop.xlane.xlu0 %2853
      %v2855 = vsel %vm2794, %v2782, 0.0
      %v2856 = vadd.f32 %v2546, %v2855
      %2857 = vadd.xlane.f32.xlu0 %v2856
      %v2858 = vpop.xlane.xlu0 %2857
      %v2859 = vsel %vm2794, %v2785, 0.0
      %v2860 = vadd.f32 %v2549, %v2859
      %2861 = vadd.xlane.f32.xlu0 %v2860
      %v2862 = vpop.xlane.xlu0 %2861
      %v2863 = vsel %vm2794, %v2787, 0.0
      %v2864 = vadd.f32 %v2551, %v2863
      %2865 = vadd.xlane.f32.xlu0 %v2864
      %v2866 = vpop.xlane.xlu0 %2865
      %v2867 = vsel %vm2794, %v2790, 0.0
      %v2868 = vadd.f32 %v2554, %v2867
      %2869 = vadd.xlane.f32.xlu0 %v2868
      %v2870 = vpop.xlane.xlu0 %2869
      %v2871 = vsel %vm2794, %v2792, 0.0
      %v2872 = vadd.f32 %v2556, %v2871
      %2873 = vadd.xlane.f32.xlu0 %v2872
      %v2874 = vpop.xlane.xlu0 %2873
      %v2875 = vrcp.pop 196.0
      %v2876 = vmul.f32 196.0, %v2875
      %v2877 = vsub.f32 1.0, %v2876
      %v2878 = vmul.f32 %v2875, %v2877
      %v2879 = vadd.f32 %v2875, %v2878
      %vm2880 = vweird.f32 %v2875
      %v2881 = vsel %vm2880, %v2875, %v2879
      %v2882 = vmul.f32 %v2798, %v2881
      %v2883 = vmul.f32 %v2802, %v2881
      %v2884 = vmul.f32 %v2806, %v2881
      %v2885 = vmul.f32 %v2810, %v2881
      %v2886 = vmul.f32 %v2814, %v2881
      %v2887 = vmul.f32 %v2818, %v2881
      %v2888 = vmul.f32 %v2822, %v2881
      %v2889 = vmul.f32 %v2826, %v2881
      %v2890 = vmul.f32 %v2830, %v2881
      %v2891 = vmul.f32 %v2834, %v2881
      %v2892 = vmul.f32 %v2838, %v2881
      %v2893 = vmul.f32 %v2842, %v2881
      %v2894 = vmul.f32 %v2846, %v2881
      %v2895 = vmul.f32 %v2850, %v2881
      %v2896 = vmul.f32 %v2854, %v2881
      %v2897 = vmul.f32 %v2858, %v2881
      %v2898 = vmul.f32 %v2862, %v2881
      %v2899 = vmul.f32 %v2866, %v2881
      %v2900 = vmul.f32 %v2870, %v2881
      %v2901 = vmul.f32 %v2874, %v2881
      %v2902 = vsub.f32 %v2509, %v2882
      %v2903 = vsub.f32 %v2745, %v2882
      %v2904 = vsub.f32 %v2511, %v2883
      %v2905 = vsub.f32 %v2747, %v2883
      %v2906 = vsub.f32 %v2514, %v2884
      %v2907 = vsub.f32 %v2750, %v2884
      %v2908 = vsub.f32 %v2516, %v2885
      %v2909 = vsub.f32 %v2752, %v2885
      %v2910 = vsub.f32 %v2519, %v2886
      %v2911 = vsub.f32 %v2755, %v2886
      %v2912 = vsub.f32 %v2521, %v2887
      %v2913 = vsub.f32 %v2757, %v2887
      %v2914 = vsub.f32 %v2524, %v2888
      %v2915 = vsub.f32 %v2760, %v2888
      %v2916 = vsub.f32 %v2526, %v2889
      %v2917 = vsub.f32 %v2762, %v2889
      %v2918 = vsub.f32 %v2529, %v2890
      %v2919 = vsub.f32 %v2765, %v2890
      %v2920 = vsub.f32 %v2531, %v2891
      %v2921 = vsub.f32 %v2767, %v2891
      %v2922 = vsub.f32 %v2534, %v2892
      %v2923 = vsub.f32 %v2770, %v2892
      %v2924 = vsub.f32 %v2536, %v2893
      %v2925 = vsub.f32 %v2772, %v2893
      %v2926 = vsub.f32 %v2539, %v2894
      %v2927 = vsub.f32 %v2775, %v2894
      %v2928 = vsub.f32 %v2541, %v2895
      %v2929 = vsub.f32 %v2777, %v2895
      %v2930 = vsub.f32 %v2544, %v2896
      %v2931 = vsub.f32 %v2780, %v2896
      %v2932 = vsub.f32 %v2546, %v2897
      %v2933 = vsub.f32 %v2782, %v2897
      %v2934 = vsub.f32 %v2549, %v2898
      %v2935 = vsub.f32 %v2785, %v2898
      %v2936 = vsub.f32 %v2551, %v2899
      %v2937 = vsub.f32 %v2787, %v2899
      %v2938 = vsub.f32 %v2554, %v2900
      %v2939 = vsub.f32 %v2790, %v2900
      %v2940 = vsub.f32 %v2556, %v2901
      %v2941 = vsub.f32 %v2792, %v2901
      %v2942 = vmul.f32 %v2902, %v2902
      %v2943 = vmul.f32 %v2903, %v2903
      %v2944 = vmul.f32 %v2904, %v2904
      %v2945 = vmul.f32 %v2905, %v2905
      %v2946 = vmul.f32 %v2906, %v2906
      %v2947 = vmul.f32 %v2907, %v2907
      %v2948 = vmul.f32 %v2908, %v2908
      %v2949 = vmul.f32 %v2909, %v2909
      %v2950 = vmul.f32 %v2910, %v2910
      %v2951 = vmul.f32 %v2911, %v2911
      %v2952 = vmul.f32 %v2912, %v2912
      %v2953 = vmul.f32 %v2913, %v2913
      %v2954 = vmul.f32 %v2914, %v2914
      %v2955 = vmul.f32 %v2915, %v2915
      %v2956 = vmul.f32 %v2916, %v2916
      %v2957 = vmul.f32 %v2917, %v2917
      %v2958 = vmul.f32 %v2918, %v2918
      %v2959 = vmul.f32 %v2919, %v2919
      %v2960 = vmul.f32 %v2920, %v2920
      %v2961 = vmul.f32 %v2921, %v2921
      %v2962 = vmul.f32 %v2922, %v2922
      %v2963 = vmul.f32 %v2923, %v2923
      %v2964 = vmul.f32 %v2924, %v2924
      %v2965 = vmul.f32 %v2925, %v2925
      %v2966 = vmul.f32 %v2926, %v2926
      %v2967 = vmul.f32 %v2927, %v2927
      %v2968 = vmul.f32 %v2928, %v2928
      %v2969 = vmul.f32 %v2929, %v2929
      %v2970 = vmul.f32 %v2930, %v2930
      %v2971 = vmul.f32 %v2931, %v2931
      %v2972 = vmul.f32 %v2932, %v2932
      %v2973 = vmul.f32 %v2933, %v2933
      %v2974 = vmul.f32 %v2934, %v2934
      %v2975 = vmul.f32 %v2935, %v2935
      %v2976 = vmul.f32 %v2936, %v2936
      %v2977 = vmul.f32 %v2937, %v2937
      %v2978 = vmul.f32 %v2938, %v2938
      %v2979 = vmul.f32 %v2939, %v2939
      %v2980 = vmul.f32 %v2940, %v2940
      %v2981 = vmul.f32 %v2941, %v2941
      %v2982 = vsel %vm2794, %v2943, 0.0
      %v2983 = vadd.f32 %v2942, %v2982
      %2984 = vadd.xlane.f32.xlu0 %v2983
      %v2985 = vpop.xlane.xlu0 %2984
      %v2986 = vsel %vm2794, %v2945, 0.0
      %v2987 = vadd.f32 %v2944, %v2986
      %2988 = vadd.xlane.f32.xlu0 %v2987
      %v2989 = vpop.xlane.xlu0 %2988
      %v2990 = vsel %vm2794, %v2947, 0.0
      %v2991 = vadd.f32 %v2946, %v2990
      %2992 = vadd.xlane.f32.xlu0 %v2991
      %v2993 = vpop.xlane.xlu0 %2992
      %v2994 = vsel %vm2794, %v2949, 0.0
      %v2995 = vadd.f32 %v2948, %v2994
      %2996 = vadd.xlane.f32.xlu0 %v2995
      %v2997 = vpop.xlane.xlu0 %2996
      %v2998 = vsel %vm2794, %v2951, 0.0
      %v2999 = vadd.f32 %v2950, %v2998
      %3000 = vadd.xlane.f32.xlu0 %v2999
      %v3001 = vpop.xlane.xlu0 %3000
      %v3002 = vsel %vm2794, %v2953, 0.0
      %v3003 = vadd.f32 %v2952, %v3002
      %3004 = vadd.xlane.f32.xlu0 %v3003
      %v3005 = vpop.xlane.xlu0 %3004
      %v3006 = vsel %vm2794, %v2955, 0.0
      %v3007 = vadd.f32 %v2954, %v3006
      %3008 = vadd.xlane.f32.xlu0 %v3007
      %v3009 = vpop.xlane.xlu0 %3008
      %v3010 = vsel %vm2794, %v2957, 0.0
      %v3011 = vadd.f32 %v2956, %v3010
      %3012 = vadd.xlane.f32.xlu0 %v3011
      %v3013 = vpop.xlane.xlu0 %3012
      %v3014 = vsel %vm2794, %v2959, 0.0
      %v3015 = vadd.f32 %v2958, %v3014
      %3016 = vadd.xlane.f32.xlu0 %v3015
      %v3017 = vpop.xlane.xlu0 %3016
      %v3018 = vsel %vm2794, %v2961, 0.0
      %v3019 = vadd.f32 %v2960, %v3018
      %3020 = vadd.xlane.f32.xlu0 %v3019
      %v3021 = vpop.xlane.xlu0 %3020
      %v3022 = vsel %vm2794, %v2963, 0.0
      %v3023 = vadd.f32 %v2962, %v3022
      %3024 = vadd.xlane.f32.xlu0 %v3023
      %v3025 = vpop.xlane.xlu0 %3024
      %v3026 = vsel %vm2794, %v2965, 0.0
      %v3027 = vadd.f32 %v2964, %v3026
      %3028 = vadd.xlane.f32.xlu0 %v3027
      %v3029 = vpop.xlane.xlu0 %3028
      %v3030 = vsel %vm2794, %v2967, 0.0
      %v3031 = vadd.f32 %v2966, %v3030
      %3032 = vadd.xlane.f32.xlu0 %v3031
      %v3033 = vpop.xlane.xlu0 %3032
      %v3034 = vsel %vm2794, %v2969, 0.0
      %v3035 = vadd.f32 %v2968, %v3034
      %3036 = vadd.xlane.f32.xlu0 %v3035
      %v3037 = vpop.xlane.xlu0 %3036
      %v3038 = vsel %vm2794, %v2971, 0.0
      %v3039 = vadd.f32 %v2970, %v3038
      %3040 = vadd.xlane.f32.xlu0 %v3039
      %v3041 = vpop.xlane.xlu0 %3040
      %v3042 = vsel %vm2794, %v2973, 0.0
      %v3043 = vadd.f32 %v2972, %v3042
      %3044 = vadd.xlane.f32.xlu0 %v3043
      %v3045 = vpop.xlane.xlu0 %3044
      %v3046 = vsel %vm2794, %v2975, 0.0
      %v3047 = vadd.f32 %v2974, %v3046
      %3048 = vadd.xlane.f32.xlu0 %v3047
      %v3049 = vpop.xlane.xlu0 %3048
      %v3050 = vsel %vm2794, %v2977, 0.0
      %v3051 = vadd.f32 %v2976, %v3050
      %3052 = vadd.xlane.f32.xlu0 %v3051
      %v3053 = vpop.xlane.xlu0 %3052
      %v3054 = vsel %vm2794, %v2979, 0.0
      %v3055 = vadd.f32 %v2978, %v3054
      %3056 = vadd.xlane.f32.xlu0 %v3055
      %v3057 = vpop.xlane.xlu0 %3056
      %v3058 = vsel %vm2794, %v2981, 0.0
      %v3059 = vadd.f32 %v2980, %v3058
      %3060 = vadd.xlane.f32.xlu0 %v3059
      %v3061 = vpop.xlane.xlu0 %3060
      %v3062 = vmul.f32 %v2985, %v2881
      %v3063 = vmul.f32 %v2989, %v2881
      %v3064 = vmul.f32 %v2993, %v2881
      %v3065 = vmul.f32 %v2997, %v2881
      %v3066 = vmul.f32 %v3001, %v2881
      %v3067 = vmul.f32 %v3005, %v2881
      %v3068 = vmul.f32 %v3009, %v2881
      %v3069 = vmul.f32 %v3013, %v2881
      %v3070 = vmul.f32 %v3017, %v2881
      %v3071 = vmul.f32 %v3021, %v2881
      %v3072 = vmul.f32 %v3025, %v2881
      %v3073 = vmul.f32 %v3029, %v2881
      %v3074 = vmul.f32 %v3033, %v2881
      %v3075 = vmul.f32 %v3037, %v2881
      %v3076 = vmul.f32 %v3041, %v2881
      %v3077 = vmul.f32 %v3045, %v2881
      %v3078 = vmul.f32 %v3049, %v2881
      %v3079 = vmul.f32 %v3053, %v2881
      %v3080 = vmul.f32 %v3057, %v2881
      %v3081 = vmul.f32 %v3061, %v2881
      %v3082 = vadd.f32 %v3062, 1e-05
      %v3083 = vadd.f32 %v3063, 1e-05
      %v3084 = vadd.f32 %v3064, 1e-05
      %v3085 = vadd.f32 %v3065, 1e-05
      %v3086 = vadd.f32 %v3066, 1e-05
      %v3087 = vadd.f32 %v3067, 1e-05
      %v3088 = vadd.f32 %v3068, 1e-05
      %v3089 = vadd.f32 %v3069, 1e-05
      %v3090 = vadd.f32 %v3070, 1e-05
      %v3091 = vadd.f32 %v3071, 1e-05
      %v3092 = vadd.f32 %v3072, 1e-05
      %v3093 = vadd.f32 %v3073, 1e-05
      %v3094 = vadd.f32 %v3074, 1e-05
      %v3095 = vadd.f32 %v3075, 1e-05
      %v3096 = vadd.f32 %v3076, 1e-05
      %v3097 = vadd.f32 %v3077, 1e-05
      %v3098 = vadd.f32 %v3078, 1e-05
      %v3099 = vadd.f32 %v3079, 1e-05
      %v3100 = vadd.f32 %v3080, 1e-05
      %v3101 = vadd.f32 %v3081, 1e-05
      %v3102 = vrsqrt.pop %v3082
      %v3103 = vmul.f32 %v3102, %v3082
      %v3104 = vmul.f32 %v3103, %v3102
      %v3105 = vmul.f32 0.5, %v3104
      %v3106 = vsub.f32 1.5, %v3105
      %v3107 = vmul.f32 %v3102, %v3106
      %vm3108 = vweird.f32 %v3082
      %vm3109 = vweird.f32 %v3102
      %vm3110 = vmor %vm3108, %vm3109
      %v3111 = vsel %vm3110, %v3102, %v3107
      %v3112 = vrsqrt.pop %v3083
      %v3113 = vmul.f32 %v3112, %v3083
      %v3114 = vmul.f32 %v3113, %v3112
      %v3115 = vmul.f32 0.5, %v3114
      %v3116 = vsub.f32 1.5, %v3115
      %v3117 = vmul.f32 %v3112, %v3116
      %vm3118 = vweird.f32 %v3083
      %vm3119 = vweird.f32 %v3112
      %vm3120 = vmor %vm3118, %vm3119
      %v3121 = vsel %vm3120, %v3112, %v3117
      %v3122 = vrsqrt.pop %v3084
      %v3123 = vmul.f32 %v3122, %v3084
      %v3124 = vmul.f32 %v3123, %v3122
      %v3125 = vmul.f32 0.5, %v3124
      %v3126 = vsub.f32 1.5, %v3125
      %v3127 = vmul.f32 %v3122, %v3126
      %vm3128 = vweird.f32 %v3084
      %vm3129 = vweird.f32 %v3122
      %vm3130 = vmor %vm3128, %vm3129
      %v3131 = vsel %vm3130, %v3122, %v3127
      %v3132 = vrsqrt.pop %v3085
      %v3133 = vmul.f32 %v3132, %v3085
      %v3134 = vmul.f32 %v3133, %v3132
      %v3135 = vmul.f32 0.5, %v3134
      %v3136 = vsub.f32 1.5, %v3135
      %v3137 = vmul.f32 %v3132, %v3136
      %vm3138 = vweird.f32 %v3085
      %vm3139 = vweird.f32 %v3132
      %vm3140 = vmor %vm3138, %vm3139
      %v3141 = vsel %vm3140, %v3132, %v3137
      %v3142 = vrsqrt.pop %v3086
      %v3143 = vmul.f32 %v3142, %v3086
      %v3144 = vmul.f32 %v3143, %v3142
      %v3145 = vmul.f32 0.5, %v3144
      %v3146 = vsub.f32 1.5, %v3145
      %v3147 = vmul.f32 %v3142, %v3146
      %vm3148 = vweird.f32 %v3086
      %vm3149 = vweird.f32 %v3142
      %vm3150 = vmor %vm3148, %vm3149
      %v3151 = vsel %vm3150, %v3142, %v3147
      %v3152 = vrsqrt.pop %v3087
      %v3153 = vmul.f32 %v3152, %v3087
      %v3154 = vmul.f32 %v3153, %v3152
      %v3155 = vmul.f32 0.5, %v3154
      %v3156 = vsub.f32 1.5, %v3155
      %v3157 = vmul.f32 %v3152, %v3156
      %vm3158 = vweird.f32 %v3087
      %vm3159 = vweird.f32 %v3152
      %vm3160 = vmor %vm3158, %vm3159
      %v3161 = vsel %vm3160, %v3152, %v3157
      %v3162 = vrsqrt.pop %v3088
      %v3163 = vmul.f32 %v3162, %v3088
      %v3164 = vmul.f32 %v3163, %v3162
      %v3165 = vmul.f32 0.5, %v3164
      %v3166 = vsub.f32 1.5, %v3165
      %v3167 = vmul.f32 %v3162, %v3166
      %vm3168 = vweird.f32 %v3088
      %vm3169 = vweird.f32 %v3162
      %vm3170 = vmor %vm3168, %vm3169
      %v3171 = vsel %vm3170, %v3162, %v3167
      %v3172 = vrsqrt.pop %v3089
      %v3173 = vmul.f32 %v3172, %v3089
      %v3174 = vmul.f32 %v3173, %v3172
      %v3175 = vmul.f32 0.5, %v3174
      %v3176 = vsub.f32 1.5, %v3175
      %v3177 = vmul.f32 %v3172, %v3176
      %vm3178 = vweird.f32 %v3089
      %vm3179 = vweird.f32 %v3172
      %vm3180 = vmor %vm3178, %vm3179
      %v3181 = vsel %vm3180, %v3172, %v3177
      %v3182 = vrsqrt.pop %v3090
      %v3183 = vmul.f32 %v3182, %v3090
      %v3184 = vmul.f32 %v3183, %v3182
      %v3185 = vmul.f32 0.5, %v3184
      %v3186 = vsub.f32 1.5, %v3185
      %v3187 = vmul.f32 %v3182, %v3186
      %vm3188 = vweird.f32 %v3090
      %vm3189 = vweird.f32 %v3182
      %vm3190 = vmor %vm3188, %vm3189
      %v3191 = vsel %vm3190, %v3182, %v3187
      %v3192 = vrsqrt.pop %v3091
      %v3193 = vmul.f32 %v3192, %v3091
      %v3194 = vmul.f32 %v3193, %v3192
      %v3195 = vmul.f32 0.5, %v3194
      %v3196 = vsub.f32 1.5, %v3195
      %v3197 = vmul.f32 %v3192, %v3196
      %vm3198 = vweird.f32 %v3091
      %vm3199 = vweird.f32 %v3192
      %vm3200 = vmor %vm3198, %vm3199
      %v3201 = vsel %vm3200, %v3192, %v3197
      %v3202 = vrsqrt.pop %v3092
      %v3203 = vmul.f32 %v3202, %v3092
      %v3204 = vmul.f32 %v3203, %v3202
      %v3205 = vmul.f32 0.5, %v3204
      %v3206 = vsub.f32 1.5, %v3205
      %v3207 = vmul.f32 %v3202, %v3206
      %vm3208 = vweird.f32 %v3092
      %vm3209 = vweird.f32 %v3202
      %vm3210 = vmor %vm3208, %vm3209
      %v3211 = vsel %vm3210, %v3202, %v3207
      %v3212 = vrsqrt.pop %v3093
      %v3213 = vmul.f32 %v3212, %v3093
      %v3214 = vmul.f32 %v3213, %v3212
      %v3215 = vmul.f32 0.5, %v3214
      %v3216 = vsub.f32 1.5, %v3215
      %v3217 = vmul.f32 %v3212, %v3216
      %vm3218 = vweird.f32 %v3093
      %vm3219 = vweird.f32 %v3212
      %vm3220 = vmor %vm3218, %vm3219
      %v3221 = vsel %vm3220, %v3212, %v3217
      %v3222 = vrsqrt.pop %v3094
      %v3223 = vmul.f32 %v3222, %v3094
      %v3224 = vmul.f32 %v3223, %v3222
      %v3225 = vmul.f32 0.5, %v3224
      %v3226 = vsub.f32 1.5, %v3225
      %v3227 = vmul.f32 %v3222, %v3226
      %vm3228 = vweird.f32 %v3094
      %vm3229 = vweird.f32 %v3222
      %vm3230 = vmor %vm3228, %vm3229
      %v3231 = vsel %vm3230, %v3222, %v3227
      %v3232 = vrsqrt.pop %v3095
      %v3233 = vmul.f32 %v3232, %v3095
      %v3234 = vmul.f32 %v3233, %v3232
      %v3235 = vmul.f32 0.5, %v3234
      %v3236 = vsub.f32 1.5, %v3235
      %v3237 = vmul.f32 %v3232, %v3236
      %vm3238 = vweird.f32 %v3095
      %vm3239 = vweird.f32 %v3232
      %vm3240 = vmor %vm3238, %vm3239
      %v3241 = vsel %vm3240, %v3232, %v3237
      %v3242 = vrsqrt.pop %v3096
      %v3243 = vmul.f32 %v3242, %v3096
      %v3244 = vmul.f32 %v3243, %v3242
      %v3245 = vmul.f32 0.5, %v3244
      %v3246 = vsub.f32 1.5, %v3245
      %v3247 = vmul.f32 %v3242, %v3246
      %vm3248 = vweird.f32 %v3096
      %vm3249 = vweird.f32 %v3242
      %vm3250 = vmor %vm3248, %vm3249
      %v3251 = vsel %vm3250, %v3242, %v3247
      %v3252 = vrsqrt.pop %v3097
      %v3253 = vmul.f32 %v3252, %v3097
      %v3254 = vmul.f32 %v3253, %v3252
      %v3255 = vmul.f32 0.5, %v3254
      %v3256 = vsub.f32 1.5, %v3255
      %v3257 = vmul.f32 %v3252, %v3256
      %vm3258 = vweird.f32 %v3097
      %vm3259 = vweird.f32 %v3252
      %vm3260 = vmor %vm3258, %vm3259
      %v3261 = vsel %vm3260, %v3252, %v3257
      %v3262 = vrsqrt.pop %v3098
      %v3263 = vmul.f32 %v3262, %v3098
      %v3264 = vmul.f32 %v3263, %v3262
      %v3265 = vmul.f32 0.5, %v3264
      %v3266 = vsub.f32 1.5, %v3265
      %v3267 = vmul.f32 %v3262, %v3266
      %vm3268 = vweird.f32 %v3098
      %vm3269 = vweird.f32 %v3262
      %vm3270 = vmor %vm3268, %vm3269
      %v3271 = vsel %vm3270, %v3262, %v3267
      %v3272 = vrsqrt.pop %v3099
      %v3273 = vmul.f32 %v3272, %v3099
      %v3274 = vmul.f32 %v3273, %v3272
      %v3275 = vmul.f32 0.5, %v3274
      %v3276 = vsub.f32 1.5, %v3275
      %v3277 = vmul.f32 %v3272, %v3276
      %vm3278 = vweird.f32 %v3099
      %vm3279 = vweird.f32 %v3272
      %vm3280 = vmor %vm3278, %vm3279
      %v3281 = vsel %vm3280, %v3272, %v3277
      %v3282 = vrsqrt.pop %v3100
      %v3283 = vmul.f32 %v3282, %v3100
      %v3284 = vmul.f32 %v3283, %v3282
      %v3285 = vmul.f32 0.5, %v3284
      %v3286 = vsub.f32 1.5, %v3285
      %v3287 = vmul.f32 %v3282, %v3286
      %vm3288 = vweird.f32 %v3100
      %vm3289 = vweird.f32 %v3282
      %vm3290 = vmor %vm3288, %vm3289
      %v3291 = vsel %vm3290, %v3282, %v3287
      %v3292 = vrsqrt.pop %v3101
      %v3293 = vmul.f32 %v3292, %v3101
      %v3294 = vmul.f32 %v3293, %v3292
      %v3295 = vmul.f32 0.5, %v3294
      %v3296 = vsub.f32 1.5, %v3295
      %v3297 = vmul.f32 %v3292, %v3296
      %vm3298 = vweird.f32 %v3101
      %vm3299 = vweird.f32 %v3292
      %vm3300 = vmor %vm3298, %vm3299
      %v3301 = vsel %vm3300, %v3292, %v3297
      %v3302 = vld [vmem:[%s3] sm:$0xff]
      %v3303 = vld [vmem:[%s3 + $0x8] sm:$0xff]
      %v3304 = vld [vmem:[%s3 + $0x10] sm:$0xff]
      %v3305 = vld [vmem:[%s3 + $0x18] sm:$0xff]
      %v3306 = vld [vmem:[%s3 + $0x20] sm:$0xff]
      %v3307 = vld [vmem:[%s3 + $0x28] sm:$0xff]
      %v3308 = vld [vmem:[%s3 + $0x30] sm:$0xff]
      %v3309 = vld [vmem:[%s3 + $0x38] sm:$0xff]
      %v3310 = vld [vmem:[%s3 + $0x40] sm:$0xff]
      %v3311 = vld [vmem:[%s3 + $0x48] sm:$0xff]
      %v3312 = vld [vmem:[%s3 + $0x50] sm:$0xff]
      %v3313 = vld [vmem:[%s3 + $0x58] sm:$0xff]
      %v3314 = vld [vmem:[%s3 + $0x60] sm:$0xff]
      %v3315 = vld [vmem:[%s3 + $0x68] sm:$0xff]
      %v3316 = vld [vmem:[%s3 + $0x70] sm:$0xff]
      %v3317 = vld [vmem:[%s3 + $0x78] sm:$0xff]
      %v3318 = vld [vmem:[%s3 + $0x80] sm:$0xff]
      %v3319 = vld [vmem:[%s3 + $0x88] sm:$0xff]
      %v3320 = vld [vmem:[%s3 + $0x90] sm:$0xff]
      %v3321 = vld [vmem:[%s3 + $0x98] sm:$0xff]
      %v3322 = vmul.f32 %v3111, %v3302
      %v3323 = vmul.f32 %v3121, %v3303
      %v3324 = vmul.f32 %v3131, %v3304
      %v3325 = vmul.f32 %v3141, %v3305
      %v3326 = vmul.f32 %v3151, %v3306
      %v3327 = vmul.f32 %v3161, %v3307
      %v3328 = vmul.f32 %v3171, %v3308
      %v3329 = vmul.f32 %v3181, %v3309
      %v3330 = vmul.f32 %v3191, %v3310
      %v3331 = vmul.f32 %v3201, %v3311
      %v3332 = vmul.f32 %v3211, %v3312
      %v3333 = vmul.f32 %v3221, %v3313
      %v3334 = vmul.f32 %v3231, %v3314
      %v3335 = vmul.f32 %v3241, %v3315
      %v3336 = vmul.f32 %v3251, %v3316
      %v3337 = vmul.f32 %v3261, %v3317
      %v3338 = vmul.f32 %v3271, %v3318
      %v3339 = vmul.f32 %v3281, %v3319
      %v3340 = vmul.f32 %v3291, %v3320
      %v3341 = vmul.f32 %v3301, %v3321
      %3343 = vset.pattern.permute.xlu0 0
      %3344 = vperm.xlu0 %3343, %v3322
      %v3345 = vpop.permute.xlu0 %3344
      %3348 = vset.pattern.permute.xlu0 0
      %3349 = vperm.xlu0 %3348, %v3323
      %v3350 = vpop.permute.xlu0 %3349
      %3353 = vset.pattern.permute.xlu0 0
      %3354 = vperm.xlu0 %3353, %v3324
      %v3355 = vpop.permute.xlu0 %3354
      %3358 = vset.pattern.permute.xlu0 0
      %3359 = vperm.xlu0 %3358, %v3325
      %v3360 = vpop.permute.xlu0 %3359
      %3363 = vset.pattern.permute.xlu0 0
      %3364 = vperm.xlu0 %3363, %v3326
      %v3365 = vpop.permute.xlu0 %3364
      %3368 = vset.pattern.permute.xlu0 0
      %3369 = vperm.xlu0 %3368, %v3327
      %v3370 = vpop.permute.xlu0 %3369
      %3373 = vset.pattern.permute.xlu0 0
      %3374 = vperm.xlu0 %3373, %v3328
      %v3375 = vpop.permute.xlu0 %3374
      %3378 = vset.pattern.permute.xlu0 0
      %3379 = vperm.xlu0 %3378, %v3329
      %v3380 = vpop.permute.xlu0 %3379
      %3383 = vset.pattern.permute.xlu0 0
      %3384 = vperm.xlu0 %3383, %v3330
      %v3385 = vpop.permute.xlu0 %3384
      %3388 = vset.pattern.permute.xlu0 0
      %3389 = vperm.xlu0 %3388, %v3331
      %v3390 = vpop.permute.xlu0 %3389
      %3393 = vset.pattern.permute.xlu0 0
      %3394 = vperm.xlu0 %3393, %v3332
      %v3395 = vpop.permute.xlu0 %3394
      %3398 = vset.pattern.permute.xlu0 0
      %3399 = vperm.xlu0 %3398, %v3333
      %v3400 = vpop.permute.xlu0 %3399
      %3403 = vset.pattern.permute.xlu0 0
      %3404 = vperm.xlu0 %3403, %v3334
      %v3405 = vpop.permute.xlu0 %3404
      %3408 = vset.pattern.permute.xlu0 0
      %3409 = vperm.xlu0 %3408, %v3335
      %v3410 = vpop.permute.xlu0 %3409
      %3413 = vset.pattern.permute.xlu0 0
      %3414 = vperm.xlu0 %3413, %v3336
      %v3415 = vpop.permute.xlu0 %3414
      %3418 = vset.pattern.permute.xlu0 0
      %3419 = vperm.xlu0 %3418, %v3337
      %v3420 = vpop.permute.xlu0 %3419
      %3423 = vset.pattern.permute.xlu0 0
      %3424 = vperm.xlu0 %3423, %v3338
      %v3425 = vpop.permute.xlu0 %3424
      %3428 = vset.pattern.permute.xlu0 0
      %3429 = vperm.xlu0 %3428, %v3339
      %v3430 = vpop.permute.xlu0 %3429
      %3433 = vset.pattern.permute.xlu0 0
      %3434 = vperm.xlu0 %3433, %v3340
      %v3435 = vpop.permute.xlu0 %3434
      %3438 = vset.pattern.permute.xlu0 0
      %3439 = vperm.xlu0 %3438, %v3341
      %v3440 = vpop.permute.xlu0 %3439
      %v3442 = vmul.f32 %v2902, %v3345
      %v3443 = vmul.f32 %v2903, %v3345
      %v3444 = vmul.f32 %v2904, %v3350
      %v3445 = vmul.f32 %v2905, %v3350
      %v3446 = vmul.f32 %v2906, %v3355
      %v3447 = vmul.f32 %v2907, %v3355
      %v3448 = vmul.f32 %v2908, %v3360
      %v3449 = vmul.f32 %v2909, %v3360
      %v3450 = vmul.f32 %v2910, %v3365
      %v3451 = vmul.f32 %v2911, %v3365
      %v3452 = vmul.f32 %v2912, %v3370
      %v3453 = vmul.f32 %v2913, %v3370
      %v3454 = vmul.f32 %v2914, %v3375
      %v3455 = vmul.f32 %v2915, %v3375
      %v3456 = vmul.f32 %v2916, %v3380
      %v3457 = vmul.f32 %v2917, %v3380
      %v3458 = vmul.f32 %v2918, %v3385
      %v3459 = vmul.f32 %v2919, %v3385
      %v3460 = vmul.f32 %v2920, %v3390
      %v3461 = vmul.f32 %v2921, %v3390
      %v3462 = vmul.f32 %v2922, %v3395
      %v3463 = vmul.f32 %v2923, %v3395
      %v3464 = vmul.f32 %v2924, %v3400
      %v3465 = vmul.f32 %v2925, %v3400
      %v3466 = vmul.f32 %v2926, %v3405
      %v3467 = vmul.f32 %v2927, %v3405
      %v3468 = vmul.f32 %v2928, %v3410
      %v3469 = vmul.f32 %v2929, %v3410
      %v3470 = vmul.f32 %v2930, %v3415
      %v3471 = vmul.f32 %v2931, %v3415
      %v3472 = vmul.f32 %v2932, %v3420
      %v3473 = vmul.f32 %v2933, %v3420
      %v3474 = vmul.f32 %v2934, %v3425
      %v3475 = vmul.f32 %v2935, %v3425
      %v3476 = vmul.f32 %v2936, %v3430
      %v3477 = vmul.f32 %v2937, %v3430
      %v3478 = vmul.f32 %v2938, %v3435
      %v3479 = vmul.f32 %v2939, %v3435
      %v3480 = vmul.f32 %v2940, %v3440
      %v3481 = vmul.f32 %v2941, %v3440
      %v3482 = vld [vmem:[%s4] sm:$0xff]
      %v3483 = vld [vmem:[%s4 + $0x8] sm:$0xff]
      %v3484 = vld [vmem:[%s4 + $0x10] sm:$0xff]
      %v3485 = vld [vmem:[%s4 + $0x18] sm:$0xff]
      %v3486 = vld [vmem:[%s4 + $0x20] sm:$0xff]
      %v3487 = vld [vmem:[%s4 + $0x28] sm:$0xff]
      %v3488 = vld [vmem:[%s4 + $0x30] sm:$0xff]
      %v3489 = vld [vmem:[%s4 + $0x38] sm:$0xff]
      %v3490 = vld [vmem:[%s4 + $0x40] sm:$0xff]
      %v3491 = vld [vmem:[%s4 + $0x48] sm:$0xff]
      %v3492 = vld [vmem:[%s4 + $0x50] sm:$0xff]
      %v3493 = vld [vmem:[%s4 + $0x58] sm:$0xff]
      %v3494 = vld [vmem:[%s4 + $0x60] sm:$0xff]
      %v3495 = vld [vmem:[%s4 + $0x68] sm:$0xff]
      %v3496 = vld [vmem:[%s4 + $0x70] sm:$0xff]
      %v3497 = vld [vmem:[%s4 + $0x78] sm:$0xff]
      %v3498 = vld [vmem:[%s4 + $0x80] sm:$0xff]
      %v3499 = vld [vmem:[%s4 + $0x88] sm:$0xff]
      %v3500 = vld [vmem:[%s4 + $0x90] sm:$0xff]
      %v3501 = vld [vmem:[%s4 + $0x98] sm:$0xff]
      %3503 = vset.pattern.permute.xlu0 0
      %3504 = vperm.xlu0 %3503, %v3482
      %v3505 = vpop.permute.xlu0 %3504
      %3508 = vset.pattern.permute.xlu0 0
      %3509 = vperm.xlu0 %3508, %v3483
      %v3510 = vpop.permute.xlu0 %3509
      %3513 = vset.pattern.permute.xlu0 0
      %3514 = vperm.xlu0 %3513, %v3484
      %v3515 = vpop.permute.xlu0 %3514
      %3518 = vset.pattern.permute.xlu0 0
      %3519 = vperm.xlu0 %3518, %v3485
      %v3520 = vpop.permute.xlu0 %3519
      %3523 = vset.pattern.permute.xlu0 0
      %3524 = vperm.xlu0 %3523, %v3486
      %v3525 = vpop.permute.xlu0 %3524
      %3528 = vset.pattern.permute.xlu0 0
      %3529 = vperm.xlu0 %3528, %v3487
      %v3530 = vpop.permute.xlu0 %3529
      %3533 = vset.pattern.permute.xlu0 0
      %3534 = vperm.xlu0 %3533, %v3488
      %v3535 = vpop.permute.xlu0 %3534
      %3538 = vset.pattern.permute.xlu0 0
      %3539 = vperm.xlu0 %3538, %v3489
      %v3540 = vpop.permute.xlu0 %3539
      %3543 = vset.pattern.permute.xlu0 0
      %3544 = vperm.xlu0 %3543, %v3490
      %v3545 = vpop.permute.xlu0 %3544
      %3548 = vset.pattern.permute.xlu0 0
      %3549 = vperm.xlu0 %3548, %v3491
      %v3550 = vpop.permute.xlu0 %3549
      %3553 = vset.pattern.permute.xlu0 0
      %3554 = vperm.xlu0 %3553, %v3492
      %v3555 = vpop.permute.xlu0 %3554
      %3558 = vset.pattern.permute.xlu0 0
      %3559 = vperm.xlu0 %3558, %v3493
      %v3560 = vpop.permute.xlu0 %3559
      %3563 = vset.pattern.permute.xlu0 0
      %3564 = vperm.xlu0 %3563, %v3494
      %v3565 = vpop.permute.xlu0 %3564
      %3568 = vset.pattern.permute.xlu0 0
      %3569 = vperm.xlu0 %3568, %v3495
      %v3570 = vpop.permute.xlu0 %3569
      %3573 = vset.pattern.permute.xlu0 0
      %3574 = vperm.xlu0 %3573, %v3496
      %v3575 = vpop.permute.xlu0 %3574
      %3578 = vset.pattern.permute.xlu0 0
      %3579 = vperm.xlu0 %3578, %v3497
      %v3580 = vpop.permute.xlu0 %3579
      %3583 = vset.pattern.permute.xlu0 0
      %3584 = vperm.xlu0 %3583, %v3498
      %v3585 = vpop.permute.xlu0 %3584
      %3588 = vset.pattern.permute.xlu0 0
      %3589 = vperm.xlu0 %3588, %v3499
      %v3590 = vpop.permute.xlu0 %3589
      %3593 = vset.pattern.permute.xlu0 0
      %3594 = vperm.xlu0 %3593, %v3500
      %v3595 = vpop.permute.xlu0 %3594
      %3598 = vset.pattern.permute.xlu0 0
      %3599 = vperm.xlu0 %3598, %v3501
      %v3600 = vpop.permute.xlu0 %3599
      %v3602 = vadd.f32 %v3442, %v3505
      %v3603 = vadd.f32 %v3443, %v3505
      %v3604 = vadd.f32 %v3444, %v3510
      %v3605 = vadd.f32 %v3445, %v3510
      %v3606 = vadd.f32 %v3446, %v3515
      %v3607 = vadd.f32 %v3447, %v3515
      %v3608 = vadd.f32 %v3448, %v3520
      %v3609 = vadd.f32 %v3449, %v3520
      %v3610 = vadd.f32 %v3450, %v3525
      %v3611 = vadd.f32 %v3451, %v3525
      %v3612 = vadd.f32 %v3452, %v3530
      %v3613 = vadd.f32 %v3453, %v3530
      %v3614 = vadd.f32 %v3454, %v3535
      %v3615 = vadd.f32 %v3455, %v3535
      %v3616 = vadd.f32 %v3456, %v3540
      %v3617 = vadd.f32 %v3457, %v3540
      %v3618 = vadd.f32 %v3458, %v3545
      %v3619 = vadd.f32 %v3459, %v3545
      %v3620 = vadd.f32 %v3460, %v3550
      %v3621 = vadd.f32 %v3461, %v3550
      %v3622 = vadd.f32 %v3462, %v3555
      %v3623 = vadd.f32 %v3463, %v3555
      %v3624 = vadd.f32 %v3464, %v3560
      %v3625 = vadd.f32 %v3465, %v3560
      %v3626 = vadd.f32 %v3466, %v3565
      %v3627 = vadd.f32 %v3467, %v3565
      %v3628 = vadd.f32 %v3468, %v3570
      %v3629 = vadd.f32 %v3469, %v3570
      %v3630 = vadd.f32 %v3470, %v3575
      %v3631 = vadd.f32 %v3471, %v3575
      %v3632 = vadd.f32 %v3472, %v3580
      %v3633 = vadd.f32 %v3473, %v3580
      %v3634 = vadd.f32 %v3474, %v3585
      %v3635 = vadd.f32 %v3475, %v3585
      %v3636 = vadd.f32 %v3476, %v3590
      %v3637 = vadd.f32 %v3477, %v3590
      %v3638 = vadd.f32 %v3478, %v3595
      %v3639 = vadd.f32 %v3479, %v3595
      %v3640 = vadd.f32 %v3480, %v3600
      %v3641 = vadd.f32 %v3481, %v3600
      %v3642 = vpack.c.bf16 %v3604, %v3602
      %v3643 = vpack.c.bf16 %v3605, %v3603
      %v3644 = vpack.c.bf16 %v3608, %v3606
      %v3645 = vpack.c.bf16 %v3609, %v3607
      %v3646 = vpack.c.bf16 %v3612, %v3610
      %v3647 = vpack.c.bf16 %v3613, %v3611
      %v3648 = vpack.c.bf16 %v3616, %v3614
      %v3649 = vpack.c.bf16 %v3617, %v3615
      %v3650 = vpack.c.bf16 %v3620, %v3618
      %v3651 = vpack.c.bf16 %v3621, %v3619
      %v3652 = vpack.c.bf16 %v3624, %v3622
      %v3653 = vpack.c.bf16 %v3625, %v3623
      %v3654 = vpack.c.bf16 %v3628, %v3626
      %v3655 = vpack.c.bf16 %v3629, %v3627
      %v3656 = vpack.c.bf16 %v3632, %v3630
      %v3657 = vpack.c.bf16 %v3633, %v3631
      %v3658 = vpack.c.bf16 %v3636, %v3634
      %v3659 = vpack.c.bf16 %v3637, %v3635
      %v3660 = vpack.c.bf16 %v3640, %v3638
      %v3661 = vpack.c.bf16 %v3641, %v3639
      %v3662 = vld [vmem:[%s251] sm:$0xff]
      %v3663 = vld [vmem:[%s251 + $0x8] sm:$0xff]
      %v3664 = vld [vmem:[%s251 + $0x10] sm:$0xff]
      %v3665 = vld [vmem:[%s251 + $0x18] sm:$0xff]
      %v3666 = vld [vmem:[%s251 + $0x20] sm:$0xff]
      %v3667 = vld [vmem:[%s251 + $0x28] sm:$0xff]
      %v3668 = vld [vmem:[%s251 + $0x30] sm:$0xff]
      %v3669 = vld [vmem:[%s251 + $0x38] sm:$0xff]
      %v3670 = vld [vmem:[%s251 + $0x40] sm:$0xff]
      %v3671 = vld [vmem:[%s251 + $0x48] sm:$0xff]
      %v3672 = vld [vmem:[%s251 + $0x50] sm:$0xff]
      %v3673 = vld [vmem:[%s251 + $0x58] sm:$0xff]
      %v3674 = vld [vmem:[%s251 + $0x60] sm:$0xff]
      %v3675 = vld [vmem:[%s251 + $0x68] sm:$0xff]
      %v3676 = vld [vmem:[%s251 + $0x70] sm:$0xff]
      %v3677 = vld [vmem:[%s251 + $0x78] sm:$0xff]
      %v3678 = vld [vmem:[%s251 + $0x80] sm:$0xff]
      %v3679 = vld [vmem:[%s251 + $0x88] sm:$0xff]
      %v3680 = vld [vmem:[%s251 + $0x90] sm:$0xff]
      %v3681 = vld [vmem:[%s251 + $0x98] sm:$0xff]
      %v3682 = vld [vmem:[%s251 + $0xa0] sm:$0xff]
      %v3683 = vld [vmem:[%s251 + $0xa8] sm:$0xff]
      %v3684 = vld [vmem:[%s251 + $0xb0] sm:$0xff]
      %v3685 = vld [vmem:[%s251 + $0xb8] sm:$0xff]
      %v3686 = vld [vmem:[%s251 + $0xc0] sm:$0xff]
      %v3687 = vld [vmem:[%s251 + $0xc8] sm:$0xff]
      %v3688 = vld [vmem:[%s251 + $0xd0] sm:$0xff]
      %v3689 = vld [vmem:[%s251 + $0xd8] sm:$0xff]
      %v3690 = vld [vmem:[%s251 + $0xe0] sm:$0xff]
      %v3691 = vld [vmem:[%s251 + $0xe8] sm:$0xff]
      %v3692 = vld [vmem:[%s251 + $0xf0] sm:$0xff]
      %v3693 = vld [vmem:[%s251 + $0xf8] sm:$0xff]
      %v3694 = vld [vmem:[%s251 + $0x100] sm:$0xff]
      %v3695 = vld [vmem:[%s251 + $0x108] sm:$0xff]
      %v3696 = vld [vmem:[%s251 + $0x110] sm:$0xff]
      %v3697 = vld [vmem:[%s251 + $0x118] sm:$0xff]
      %v3698 = vld [vmem:[%s251 + $0x120] sm:$0xff]
      %v3699 = vld [vmem:[%s251 + $0x128] sm:$0xff]
      %v3700 = vld [vmem:[%s251 + $0x130] sm:$0xff]
      %v3701 = vld [vmem:[%s251 + $0x138] sm:$0xff]
      %v3702 = vld [vmem:[%s251 + $0x140] sm:$0xff]
      %v3703 = vld [vmem:[%s251 + $0x148] sm:$0xff]
      %v3704 = vld [vmem:[%s251 + $0x150] sm:$0xff]
      %v3705 = vld [vmem:[%s251 + $0x158] sm:$0xff]
      %v3706 = vld [vmem:[%s251 + $0x160] sm:$0xff]
      %v3707 = vld [vmem:[%s251 + $0x168] sm:$0xff]
      %v3708 = vld [vmem:[%s251 + $0x170] sm:$0xff]
      %v3709 = vld [vmem:[%s251 + $0x178] sm:$0xff]
      %v3710 = vld [vmem:[%s251 + $0x180] sm:$0xff]
      %v3711 = vld [vmem:[%s251 + $0x188] sm:$0xff]
      %v3712 = vld [vmem:[%s251 + $0x190] sm:$0xff]
      %v3713 = vld [vmem:[%s251 + $0x198] sm:$0xff]
      %v3714 = vld [vmem:[%s251 + $0x1a0] sm:$0xff]
      %v3715 = vld [vmem:[%s251 + $0x1a8] sm:$0xff]
      %v3716 = vld [vmem:[%s251 + $0x1b0] sm:$0xff]
      %v3717 = vld [vmem:[%s251 + $0x1b8] sm:$0xff]
      %v3718 = vld [vmem:[%s251 + $0x1c0] sm:$0xff]
      %v3719 = vld [vmem:[%s251 + $0x1c8] sm:$0xff]
      %v3720 = vld [vmem:[%s251 + $0x1d0] sm:$0xff]
      %v3721 = vld [vmem:[%s251 + $0x1d8] sm:$0xff]
      %v3782 = vunpack.c.l.b16 %v3662
      %v3783 = vunpack.c.h.b16 %v3662
      %v3784 = vunpack.c.l.b16 %v3663
      %v3785 = vunpack.c.h.b16 %v3663
      %v3786 = vunpack.c.l.b16 %v3664
      %v3787 = vunpack.c.h.b16 %v3664
      %v3788 = vunpack.c.l.b16 %v3665
      %v3789 = vunpack.c.h.b16 %v3665
      %v3790 = vunpack.c.l.b16 %v3666
      %v3791 = vunpack.c.h.b16 %v3666
      %v3792 = vunpack.c.l.b16 %v3667
      %v3793 = vunpack.c.h.b16 %v3667
      %v3794 = vunpack.c.l.b16 %v3668
      %v3795 = vunpack.c.h.b16 %v3668
      %v3796 = vunpack.c.l.b16 %v3669
      %v3797 = vunpack.c.h.b16 %v3669
      %v3798 = vunpack.c.l.b16 %v3670
      %v3799 = vunpack.c.h.b16 %v3670
      %v3800 = vunpack.c.l.b16 %v3671
      %v3801 = vunpack.c.h.b16 %v3671
      %v3802 = vunpack.c.l.b16 %v3672
      %v3803 = vunpack.c.h.b16 %v3672
      %v3804 = vunpack.c.l.b16 %v3673
      %v3805 = vunpack.c.h.b16 %v3673
      %v3806 = vunpack.c.l.b16 %v3674
      %v3807 = vunpack.c.h.b16 %v3674
      %v3808 = vunpack.c.l.b16 %v3675
      %v3809 = vunpack.c.h.b16 %v3675
      %v3810 = vunpack.c.l.b16 %v3676
      %v3811 = vunpack.c.h.b16 %v3676
      %v3812 = vunpack.c.l.b16 %v3677
      %v3813 = vunpack.c.h.b16 %v3677
      %v3814 = vunpack.c.l.b16 %v3678
      %v3815 = vunpack.c.h.b16 %v3678
      %v3816 = vunpack.c.l.b16 %v3679
      %v3817 = vunpack.c.h.b16 %v3679
      %v3818 = vunpack.c.l.b16 %v3680
      %v3819 = vunpack.c.h.b16 %v3680
      %v3820 = vunpack.c.l.b16 %v3681
      %v3821 = vunpack.c.h.b16 %v3681
      %v3822 = vunpack.c.l.b16 %v3682
      %v3823 = vunpack.c.h.b16 %v3682
      %v3824 = vunpack.c.l.b16 %v3683
      %v3825 = vunpack.c.h.b16 %v3683
      %v3826 = vunpack.c.l.b16 %v3684
      %v3827 = vunpack.c.h.b16 %v3684
      %v3828 = vunpack.c.l.b16 %v3685
      %v3829 = vunpack.c.h.b16 %v3685
      %v3830 = vunpack.c.l.b16 %v3686
      %v3831 = vunpack.c.h.b16 %v3686
      %v3832 = vunpack.c.l.b16 %v3687
      %v3833 = vunpack.c.h.b16 %v3687
      %v3834 = vunpack.c.l.b16 %v3688
      %v3835 = vunpack.c.h.b16 %v3688
      %v3836 = vunpack.c.l.b16 %v3689
      %v3837 = vunpack.c.h.b16 %v3689
      %v3838 = vunpack.c.l.b16 %v3690
      %v3839 = vunpack.c.h.b16 %v3690
      %v3840 = vunpack.c.l.b16 %v3691
      %v3841 = vunpack.c.h.b16 %v3691
      %v3842 = vunpack.c.l.b16 %v3692
      %v3843 = vunpack.c.h.b16 %v3692
      %v3844 = vunpack.c.l.b16 %v3693
      %v3845 = vunpack.c.h.b16 %v3693
      %v3846 = vunpack.c.l.b16 %v3694
      %v3847 = vunpack.c.h.b16 %v3694
      %v3848 = vunpack.c.l.b16 %v3695
      %v3849 = vunpack.c.h.b16 %v3695
      %v3850 = vunpack.c.l.b16 %v3696
      %v3851 = vunpack.c.h.b16 %v3696
      %v3852 = vunpack.c.l.b16 %v3697
      %v3853 = vunpack.c.h.b16 %v3697
      %v3854 = vunpack.c.l.b16 %v3698
      %v3855 = vunpack.c.h.b16 %v3698
      %v3856 = vunpack.c.l.b16 %v3699
      %v3857 = vunpack.c.h.b16 %v3699
      %v3858 = vunpack.c.l.b16 %v3700
      %v3859 = vunpack.c.h.b16 %v3700
      %v3860 = vunpack.c.l.b16 %v3701
      %v3861 = vunpack.c.h.b16 %v3701
      %v3862 = vunpack.c.l.b16 %v3702
      %v3863 = vunpack.c.h.b16 %v3702
      %v3864 = vunpack.c.l.b16 %v3703
      %v3865 = vunpack.c.h.b16 %v3703
      %v3866 = vunpack.c.l.b16 %v3704
      %v3867 = vunpack.c.h.b16 %v3704
      %v3868 = vunpack.c.l.b16 %v3705
      %v3869 = vunpack.c.h.b16 %v3705
      %v3870 = vunpack.c.l.b16 %v3706
      %v3871 = vunpack.c.h.b16 %v3706
      %v3872 = vunpack.c.l.b16 %v3707
      %v3873 = vunpack.c.h.b16 %v3707
      %v3874 = vunpack.c.l.b16 %v3708
      %v3875 = vunpack.c.h.b16 %v3708
      %v3876 = vunpack.c.l.b16 %v3709
      %v3877 = vunpack.c.h.b16 %v3709
      %v3878 = vunpack.c.l.b16 %v3710
      %v3879 = vunpack.c.h.b16 %v3710
      %v3880 = vunpack.c.l.b16 %v3711
      %v3881 = vunpack.c.h.b16 %v3711
      %v3882 = vunpack.c.l.b16 %v3712
      %v3883 = vunpack.c.h.b16 %v3712
      %v3884 = vunpack.c.l.b16 %v3713
      %v3885 = vunpack.c.h.b16 %v3713
      %v3886 = vunpack.c.l.b16 %v3714
      %v3887 = vunpack.c.h.b16 %v3714
      %v3888 = vunpack.c.l.b16 %v3715
      %v3889 = vunpack.c.h.b16 %v3715
      %v3890 = vunpack.c.l.b16 %v3716
      %v3891 = vunpack.c.h.b16 %v3716
      %v3892 = vunpack.c.l.b16 %v3717
      %v3893 = vunpack.c.h.b16 %v3717
      %v3894 = vunpack.c.l.b16 %v3718
      %v3895 = vunpack.c.h.b16 %v3718
      %v3896 = vunpack.c.l.b16 %v3719
      %v3897 = vunpack.c.h.b16 %v3719
      %v3898 = vunpack.c.l.b16 %v3720
      %v3899 = vunpack.c.h.b16 %v3720
      %v3900 = vunpack.c.l.b16 %v3721
      %v3901 = vunpack.c.h.b16 %v3721
      %v3902 = vpack.c.b16 %v3784, %v3782
      %v3903 = vpack.c.b16 %v3785, %v3783
      %v3904 = vpack.c.b16 %v3788, %v3786
      %v3905 = vpack.c.b16 %v3789, %v3787
      %v3906 = vpack.c.b16 %v3792, %v3790
      %v3907 = vpack.c.b16 %v3793, %v3791
      %v3908 = vpack.c.b16 %v3796, %v3794
      %v3909 = vpack.c.b16 %v3797, %v3795
      %v3910 = vpack.c.b16 %v3800, %v3798
      %v3911 = vpack.c.b16 %v3801, %v3799
      %v3912 = vpack.c.b16 %v3804, %v3802
      %v3913 = vpack.c.b16 %v3805, %v3803
      %v3914 = vpack.c.b16 %v3808, %v3806
      %v3915 = vpack.c.b16 %v3809, %v3807
      %v3916 = vpack.c.b16 %v3812, %v3810
      %v3917 = vpack.c.b16 %v3813, %v3811
      %v3918 = vpack.c.b16 %v3816, %v3814
      %v3919 = vpack.c.b16 %v3817, %v3815
      %v3920 = vpack.c.b16 %v3820, %v3818
      %v3921 = vpack.c.b16 %v3821, %v3819
      %v3922 = vpack.c.b16 %v3824, %v3822
      %v3923 = vpack.c.b16 %v3825, %v3823
      %v3924 = vpack.c.b16 %v3828, %v3826
      %v3925 = vpack.c.b16 %v3829, %v3827
      %v3926 = vpack.c.b16 %v3832, %v3830
      %v3927 = vpack.c.b16 %v3833, %v3831
      %v3928 = vpack.c.b16 %v3836, %v3834
      %v3929 = vpack.c.b16 %v3837, %v3835
      %v3930 = vpack.c.b16 %v3840, %v3838
      %v3931 = vpack.c.b16 %v3841, %v3839
      %v3932 = vpack.c.b16 %v3844, %v3842
      %v3933 = vpack.c.b16 %v3845, %v3843
      %v3934 = vpack.c.b16 %v3848, %v3846
      %v3935 = vpack.c.b16 %v3849, %v3847
      %v3936 = vpack.c.b16 %v3852, %v3850
      %v3937 = vpack.c.b16 %v3853, %v3851
      %v3938 = vpack.c.b16 %v3856, %v3854
      %v3939 = vpack.c.b16 %v3857, %v3855
      %v3940 = vpack.c.b16 %v3860, %v3858
      %v3941 = vpack.c.b16 %v3861, %v3859
      %v3942 = vpack.c.b16 %v3864, %v3862
      %v3943 = vpack.c.b16 %v3865, %v3863
      %v3944 = vpack.c.b16 %v3868, %v3866
      %v3945 = vpack.c.b16 %v3869, %v3867
      %v3946 = vpack.c.b16 %v3872, %v3870
      %v3947 = vpack.c.b16 %v3873, %v3871
      %v3948 = vpack.c.b16 %v3876, %v3874
      %v3949 = vpack.c.b16 %v3877, %v3875
      %v3950 = vpack.c.b16 %v3880, %v3878
      %v3951 = vpack.c.b16 %v3881, %v3879
      %v3952 = vpack.c.b16 %v3884, %v3882
      %v3953 = vpack.c.b16 %v3885, %v3883
      %v3954 = vpack.c.b16 %v3888, %v3886
      %v3955 = vpack.c.b16 %v3889, %v3887
      %v3956 = vpack.c.b16 %v3892, %v3890
      %v3957 = vpack.c.b16 %v3893, %v3891
      %v3958 = vpack.c.b16 %v3896, %v3894
      %v3959 = vpack.c.b16 %v3897, %v3895
      %v3960 = vpack.c.b16 %v3900, %v3898
      %v3961 = vpack.c.b16 %v3901, %v3899
      %vm3992 = vcmask 261120
      %v3994 = vsel %vm3992, %v3903, 0
      %v3997 = vsel %vm3992, %v3905, 0
      %v4000 = vsel %vm3992, %v3907, 0
      %v4003 = vsel %vm3992, %v3909, 0
      %v4006 = vsel %vm3992, %v3911, 0
      %v4009 = vsel %vm3992, %v3913, 0
      %v4012 = vsel %vm3992, %v3915, 0
      %v4015 = vsel %vm3992, %v3917, 0
      %v4018 = vsel %vm3992, %v3919, 0
      %v4021 = vsel %vm3992, %v3921, 0
      %v4024 = vsel %vm3992, %v3923, 0
      %v4027 = vsel %vm3992, %v3925, 0
      %v4030 = vsel %vm3992, %v3927, 0
      %v4033 = vsel %vm3992, %v3929, 0
      %v4036 = vsel %vm3992, %v3931, 0
      %v4039 = vsel %vm3992, %v3933, 0
      %v4042 = vsel %vm3992, %v3935, 0
      %v4045 = vsel %vm3992, %v3937, 0
      %v4048 = vsel %vm3992, %v3939, 0
      %v4051 = vsel %vm3992, %v3941, 0
      %v4054 = vsel %vm3992, %v3943, 0
      %v4057 = vsel %vm3992, %v3945, 0
      %v4060 = vsel %vm3992, %v3947, 0
      %v4063 = vsel %vm3992, %v3949, 0
      %v4066 = vsel %vm3992, %v3951, 0
      %v4069 = vsel %vm3992, %v3953, 0
      %v4072 = vsel %vm3992, %v3955, 0
      %v4075 = vsel %vm3992, %v3957, 0
      %v4078 = vsel %vm3992, %v3959, 0
      %v4081 = vsel %vm3992, %v3961, 0
      %4083 = vmatpush.bf16.msra.mxu0 %v3656
      %4084 = vmatpush.bf16.msra.mxu0 %v3654
      %4085 = vmatpush.bf16.msra.mxu0 %v3652
      %4086 = vmatpush.bf16.msra.mxu0 %v3650
      %4087 = vmatpush.bf16.msra.mxu0 %v3648
      %4088 = vmatpush.bf16.msra.mxu0 %v3646
      %4089 = vmatpush.bf16.msra.mxu0 %v3644
      %4090 = vmatpush.bf16.msra.mxu0 %v3642
      %4091 = vmatmul.bf16.gmra.mxu0 %v3902
      %v4092 = vpop.f32.mrf.mxu0
      %v4093 = vadd.f32 0.0, %v4092
      %v4094 = vpop.f32.mrf.mxu0
      %v4095 = vadd.f32 0.0, %v4094
      %4096 = vmatmul.bf16.gmra.mxu0 %v3904
      %v4097 = vpop.f32.mrf.mxu0
      %v4098 = vadd.f32 0.0, %v4097
      %v4099 = vpop.f32.mrf.mxu0
      %v4100 = vadd.f32 0.0, %v4099
      %4101 = vmatmul.bf16.gmra.mxu0 %v3906
      %v4102 = vpop.f32.mrf.mxu0
      %v4103 = vadd.f32 0.0, %v4102
      %v4104 = vpop.f32.mrf.mxu0
      %v4105 = vadd.f32 0.0, %v4104
      %4106 = vmatmul.bf16.gmra.mxu0 %v3908
      %v4107 = vpop.f32.mrf.mxu0
      %v4108 = vadd.f32 0.0, %v4107
      %v4109 = vpop.f32.mrf.mxu0
      %v4110 = vadd.f32 0.0, %v4109
      %4111 = vmatmul.bf16.gmra.mxu0 %v3910
      %v4112 = vpop.f32.mrf.mxu0
      %v4113 = vadd.f32 0.0, %v4112
      %v4114 = vpop.f32.mrf.mxu0
      %v4115 = vadd.f32 0.0, %v4114
      %4116 = vmatmul.bf16.gmra.mxu0 %v3912
      %v4117 = vpop.f32.mrf.mxu0
      %v4118 = vadd.f32 0.0, %v4117
      %v4119 = vpop.f32.mrf.mxu0
      %v4120 = vadd.f32 0.0, %v4119
      %4121 = vmatmul.bf16.gmra.mxu0 %v3914
      %v4122 = vpop.f32.mrf.mxu0
      %v4123 = vadd.f32 0.0, %v4122
      %v4124 = vpop.f32.mrf.mxu0
      %v4125 = vadd.f32 0.0, %v4124
      %4126 = vmatmul.bf16.gmra.mxu0 %v3916
      %v4127 = vpop.f32.mrf.mxu0
      %v4128 = vadd.f32 0.0, %v4127
      %v4129 = vpop.f32.mrf.mxu0
      %v4130 = vadd.f32 0.0, %v4129
      %4131 = vmatmul.bf16.gmra.mxu0 %v3918
      %v4132 = vpop.f32.mrf.mxu0
      %v4133 = vadd.f32 0.0, %v4132
      %v4134 = vpop.f32.mrf.mxu0
      %v4135 = vadd.f32 0.0, %v4134
      %4136 = vmatmul.bf16.gmra.mxu0 %v3920
      %v4137 = vpop.f32.mrf.mxu0
      %v4138 = vadd.f32 0.0, %v4137
      %v4139 = vpop.f32.mrf.mxu0
      %v4140 = vadd.f32 0.0, %v4139
      %4141 = vmatmul.bf16.gmra.mxu0 %v3922
      %v4142 = vpop.f32.mrf.mxu0
      %v4143 = vadd.f32 0.0, %v4142
      %v4144 = vpop.f32.mrf.mxu0
      %v4145 = vadd.f32 0.0, %v4144
      %4146 = vmatmul.bf16.gmra.mxu0 %v3924
      %v4147 = vpop.f32.mrf.mxu0
      %v4148 = vadd.f32 0.0, %v4147
      %v4149 = vpop.f32.mrf.mxu0
      %v4150 = vadd.f32 0.0, %v4149
      %4151 = vmatmul.bf16.gmra.mxu0 %v3926
      %v4152 = vpop.f32.mrf.mxu0
      %v4153 = vadd.f32 0.0, %v4152
      %v4154 = vpop.f32.mrf.mxu0
      %v4155 = vadd.f32 0.0, %v4154
      %4156 = vmatmul.bf16.gmra.mxu0 %v3928
      %v4157 = vpop.f32.mrf.mxu0
      %v4158 = vadd.f32 0.0, %v4157
      %v4159 = vpop.f32.mrf.mxu0
      %v4160 = vadd.f32 0.0, %v4159
      %4161 = vmatmul.bf16.gmra.mxu0 %v3930
      %v4162 = vpop.f32.mrf.mxu0
      %v4163 = vadd.f32 0.0, %v4162
      %v4164 = vpop.f32.mrf.mxu0
      %v4165 = vadd.f32 0.0, %v4164
      %4166 = vmatmul.bf16.gmra.mxu0 %v3932
      %v4167 = vpop.f32.mrf.mxu0
      %v4168 = vadd.f32 0.0, %v4167
      %v4169 = vpop.f32.mrf.mxu0
      %v4170 = vadd.f32 0.0, %v4169
      %4171 = vmatmul.bf16.gmra.mxu0 %v3934
      %v4172 = vpop.f32.mrf.mxu0
      %v4173 = vadd.f32 0.0, %v4172
      %v4174 = vpop.f32.mrf.mxu0
      %v4175 = vadd.f32 0.0, %v4174
      %4176 = vmatmul.bf16.gmra.mxu0 %v3936
      %v4177 = vpop.f32.mrf.mxu0
      %v4178 = vadd.f32 0.0, %v4177
      %v4179 = vpop.f32.mrf.mxu0
      %v4180 = vadd.f32 0.0, %v4179
      %4181 = vmatmul.bf16.gmra.mxu0 %v3938
      %v4182 = vpop.f32.mrf.mxu0
      %v4183 = vadd.f32 0.0, %v4182
      %v4184 = vpop.f32.mrf.mxu0
      %v4185 = vadd.f32 0.0, %v4184
      %4186 = vmatmul.bf16.gmra.mxu0 %v3940
      %v4187 = vpop.f32.mrf.mxu0
      %v4188 = vadd.f32 0.0, %v4187
      %v4189 = vpop.f32.mrf.mxu0
      %v4190 = vadd.f32 0.0, %v4189
      %4191 = vmatmul.bf16.gmra.mxu0 %v3942
      %v4192 = vpop.f32.mrf.mxu0
      %v4193 = vadd.f32 0.0, %v4192
      %v4194 = vpop.f32.mrf.mxu0
      %v4195 = vadd.f32 0.0, %v4194
      %4196 = vmatmul.bf16.gmra.mxu0 %v3944
      %v4197 = vpop.f32.mrf.mxu0
      %v4198 = vadd.f32 0.0, %v4197
      %v4199 = vpop.f32.mrf.mxu0
      %v4200 = vadd.f32 0.0, %v4199
      %4201 = vmatmul.bf16.gmra.mxu0 %v3946
      %v4202 = vpop.f32.mrf.mxu0
      %v4203 = vadd.f32 0.0, %v4202
      %v4204 = vpop.f32.mrf.mxu0
      %v4205 = vadd.f32 0.0, %v4204
      %4206 = vmatmul.bf16.gmra.mxu0 %v3948
      %v4207 = vpop.f32.mrf.mxu0
      %v4208 = vadd.f32 0.0, %v4207
      %v4209 = vpop.f32.mrf.mxu0
      %v4210 = vadd.f32 0.0, %v4209
      %4211 = vmatmul.bf16.gmra.mxu0 %v3950
      %v4212 = vpop.f32.mrf.mxu0
      %v4213 = vadd.f32 0.0, %v4212
      %v4214 = vpop.f32.mrf.mxu0
      %v4215 = vadd.f32 0.0, %v4214
      %4216 = vmatmul.bf16.gmra.mxu0 %v3952
      %v4217 = vpop.f32.mrf.mxu0
      %v4218 = vadd.f32 0.0, %v4217
      %v4219 = vpop.f32.mrf.mxu0
      %v4220 = vadd.f32 0.0, %v4219
      %4221 = vmatmul.bf16.gmra.mxu0 %v3954
      %v4222 = vpop.f32.mrf.mxu0
      %v4223 = vadd.f32 0.0, %v4222
      %v4224 = vpop.f32.mrf.mxu0
      %v4225 = vadd.f32 0.0, %v4224
      %4226 = vmatmul.bf16.gmra.mxu0 %v3956
      %v4227 = vpop.f32.mrf.mxu0
      %v4228 = vadd.f32 0.0, %v4227
      %v4229 = vpop.f32.mrf.mxu0
      %v4230 = vadd.f32 0.0, %v4229
      %4231 = vmatmul.bf16.gmra.mxu0 %v3958
      %v4232 = vpop.f32.mrf.mxu0
      %v4233 = vadd.f32 0.0, %v4232
      %v4234 = vpop.f32.mrf.mxu0
      %v4235 = vadd.f32 0.0, %v4234
      %4236 = vmatmul.bf16.gmra.mxu0 %v3960
      %v4237 = vpop.f32.mrf.mxu0
      %v4238 = vadd.f32 0.0, %v4237
      %v4239 = vpop.f32.mrf.mxu0
      %v4240 = vadd.f32 0.0, %v4239
      %4241 = vdwg.mxu0
      %4242 = vmatpush.bf16.msra.mxu0 0
      %4243 = vmatpush.bf16.msra.mxu0 0
      %4244 = vmatpush.bf16.msra.mxu0 0
      %4245 = vmatpush.bf16.msra.mxu0 0
      %4246 = vmatpush.bf16.msra.mxu0 0
      %4247 = vmatpush.bf16.msra.mxu0 0
      %4248 = vmatpush.bf16.msra.mxu0 %v3660
      %4249 = vmatpush.bf16.msra.mxu0 %v3658
      %4250 = vmatmul.bf16.gmra.mxu0 %v3994
      %v4251 = vpop.f32.mrf.mxu0
      %v4252 = vadd.f32 %v4093, %v4251
      %v4253 = vpop.f32.mrf.mxu0
      %v4254 = vadd.f32 %v4095, %v4253
      %4255 = vmatmul.bf16.gmra.mxu0 %v3997
      %v4256 = vpop.f32.mrf.mxu0
      %v4257 = vadd.f32 %v4098, %v4256
      %v4258 = vpop.f32.mrf.mxu0
      %v4259 = vadd.f32 %v4100, %v4258
      %4260 = vmatmul.bf16.gmra.mxu0 %v4000
      %v4261 = vpop.f32.mrf.mxu0
      %v4262 = vadd.f32 %v4103, %v4261
      %v4263 = vpop.f32.mrf.mxu0
      %v4264 = vadd.f32 %v4105, %v4263
      %4265 = vmatmul.bf16.gmra.mxu0 %v4003
      %v4266 = vpop.f32.mrf.mxu0
      %v4267 = vadd.f32 %v4108, %v4266
      %v4268 = vpop.f32.mrf.mxu0
      %v4269 = vadd.f32 %v4110, %v4268
      %4270 = vmatmul.bf16.gmra.mxu0 %v4006
      %v4271 = vpop.f32.mrf.mxu0
      %v4272 = vadd.f32 %v4113, %v4271
      %v4273 = vpop.f32.mrf.mxu0
      %v4274 = vadd.f32 %v4115, %v4273
      %4275 = vmatmul.bf16.gmra.mxu0 %v4009
      %v4276 = vpop.f32.mrf.mxu0
      %v4277 = vadd.f32 %v4118, %v4276
      %v4278 = vpop.f32.mrf.mxu0
      %v4279 = vadd.f32 %v4120, %v4278
      %4280 = vmatmul.bf16.gmra.mxu0 %v4012
      %v4281 = vpop.f32.mrf.mxu0
      %v4282 = vadd.f32 %v4123, %v4281
      %v4283 = vpop.f32.mrf.mxu0
      %v4284 = vadd.f32 %v4125, %v4283
      %4285 = vmatmul.bf16.gmra.mxu0 %v4015
      %v4286 = vpop.f32.mrf.mxu0
      %v4287 = vadd.f32 %v4128, %v4286
      %v4288 = vpop.f32.mrf.mxu0
      %v4289 = vadd.f32 %v4130, %v4288
      %4290 = vmatmul.bf16.gmra.mxu0 %v4018
      %v4291 = vpop.f32.mrf.mxu0
      %v4292 = vadd.f32 %v4133, %v4291
      %v4293 = vpop.f32.mrf.mxu0
      %v4294 = vadd.f32 %v4135, %v4293
      %4295 = vmatmul.bf16.gmra.mxu0 %v4021
      %v4296 = vpop.f32.mrf.mxu0
      %v4297 = vadd.f32 %v4138, %v4296
      %v4298 = vpop.f32.mrf.mxu0
      %v4299 = vadd.f32 %v4140, %v4298
      %4300 = vmatmul.bf16.gmra.mxu0 %v4024
      %v4301 = vpop.f32.mrf.mxu0
      %v4302 = vadd.f32 %v4143, %v4301
      %v4303 = vpop.f32.mrf.mxu0
      %v4304 = vadd.f32 %v4145, %v4303
      %4305 = vmatmul.bf16.gmra.mxu0 %v4027
      %v4306 = vpop.f32.mrf.mxu0
      %v4307 = vadd.f32 %v4148, %v4306
      %v4308 = vpop.f32.mrf.mxu0
      %v4309 = vadd.f32 %v4150, %v4308
      %4310 = vmatmul.bf16.gmra.mxu0 %v4030
      %v4311 = vpop.f32.mrf.mxu0
      %v4312 = vadd.f32 %v4153, %v4311
      %v4313 = vpop.f32.mrf.mxu0
      %v4314 = vadd.f32 %v4155, %v4313
      %4315 = vmatmul.bf16.gmra.mxu0 %v4033
      %v4316 = vpop.f32.mrf.mxu0
      %v4317 = vadd.f32 %v4158, %v4316
      %v4318 = vpop.f32.mrf.mxu0
      %v4319 = vadd.f32 %v4160, %v4318
      %4320 = vmatmul.bf16.gmra.mxu0 %v4036
      %v4321 = vpop.f32.mrf.mxu0
      %v4322 = vadd.f32 %v4163, %v4321
      %v4323 = vpop.f32.mrf.mxu0
      %v4324 = vadd.f32 %v4165, %v4323
      %4325 = vmatmul.bf16.gmra.mxu0 %v4039
      %v4326 = vpop.f32.mrf.mxu0
      %v4327 = vadd.f32 %v4168, %v4326
      %v4328 = vpop.f32.mrf.mxu0
      %v4329 = vadd.f32 %v4170, %v4328
      %4330 = vmatmul.bf16.gmra.mxu0 %v4042
      %v4331 = vpop.f32.mrf.mxu0
      %v4332 = vadd.f32 %v4173, %v4331
      %v4333 = vpop.f32.mrf.mxu0
      %v4334 = vadd.f32 %v4175, %v4333
      %4335 = vmatmul.bf16.gmra.mxu0 %v4045
      %v4336 = vpop.f32.mrf.mxu0
      %v4337 = vadd.f32 %v4178, %v4336
      %v4338 = vpop.f32.mrf.mxu0
      %v4339 = vadd.f32 %v4180, %v4338
      %4340 = vmatmul.bf16.gmra.mxu0 %v4048
      %v4341 = vpop.f32.mrf.mxu0
      %v4342 = vadd.f32 %v4183, %v4341
      %v4343 = vpop.f32.mrf.mxu0
      %v4344 = vadd.f32 %v4185, %v4343
      %4345 = vmatmul.bf16.gmra.mxu0 %v4051
      %v4346 = vpop.f32.mrf.mxu0
      %v4347 = vadd.f32 %v4188, %v4346
      %v4348 = vpop.f32.mrf.mxu0
      %v4349 = vadd.f32 %v4190, %v4348
      %4350 = vmatmul.bf16.gmra.mxu0 %v4054
      %v4351 = vpop.f32.mrf.mxu0
      %v4352 = vadd.f32 %v4193, %v4351
      %v4353 = vpop.f32.mrf.mxu0
      %v4354 = vadd.f32 %v4195, %v4353
      %4355 = vmatmul.bf16.gmra.mxu0 %v4057
      %v4356 = vpop.f32.mrf.mxu0
      %v4357 = vadd.f32 %v4198, %v4356
      %v4358 = vpop.f32.mrf.mxu0
      %v4359 = vadd.f32 %v4200, %v4358
      %4360 = vmatmul.bf16.gmra.mxu0 %v4060
      %v4361 = vpop.f32.mrf.mxu0
      %v4362 = vadd.f32 %v4203, %v4361
      %v4363 = vpop.f32.mrf.mxu0
      %v4364 = vadd.f32 %v4205, %v4363
      %4365 = vmatmul.bf16.gmra.mxu0 %v4063
      %v4366 = vpop.f32.mrf.mxu0
      %v4367 = vadd.f32 %v4208, %v4366
      %v4368 = vpop.f32.mrf.mxu0
      %v4369 = vadd.f32 %v4210, %v4368
      %4370 = vmatmul.bf16.gmra.mxu0 %v4066
      %v4371 = vpop.f32.mrf.mxu0
      %v4372 = vadd.f32 %v4213, %v4371
      %v4373 = vpop.f32.mrf.mxu0
      %v4374 = vadd.f32 %v4215, %v4373
      %4375 = vmatmul.bf16.gmra.mxu0 %v4069
      %v4376 = vpop.f32.mrf.mxu0
      %v4377 = vadd.f32 %v4218, %v4376
      %v4378 = vpop.f32.mrf.mxu0
      %v4379 = vadd.f32 %v4220, %v4378
      %4380 = vmatmul.bf16.gmra.mxu0 %v4072
      %v4381 = vpop.f32.mrf.mxu0
      %v4382 = vadd.f32 %v4223, %v4381
      %v4383 = vpop.f32.mrf.mxu0
      %v4384 = vadd.f32 %v4225, %v4383
      %4385 = vmatmul.bf16.gmra.mxu0 %v4075
      %v4386 = vpop.f32.mrf.mxu0
      %v4387 = vadd.f32 %v4228, %v4386
      %v4388 = vpop.f32.mrf.mxu0
      %v4389 = vadd.f32 %v4230, %v4388
      %4390 = vmatmul.bf16.gmra.mxu0 %v4078
      %v4391 = vpop.f32.mrf.mxu0
      %v4392 = vadd.f32 %v4233, %v4391
      %v4393 = vpop.f32.mrf.mxu0
      %v4394 = vadd.f32 %v4235, %v4393
      %4395 = vmatmul.bf16.gmra.mxu0 %v4081
      %v4396 = vpop.f32.mrf.mxu0
      %v4397 = vadd.f32 %v4238, %v4396
      %v4398 = vpop.f32.mrf.mxu0
      %v4399 = vadd.f32 %v4240, %v4398
      %4400 = vdwg.mxu0
      %4401 = vmatpush.bf16.msra.mxu0 %v3657
      %4402 = vmatpush.bf16.msra.mxu0 %v3655
      %4403 = vmatpush.bf16.msra.mxu0 %v3653
      %4404 = vmatpush.bf16.msra.mxu0 %v3651
      %4405 = vmatpush.bf16.msra.mxu0 %v3649
      %4406 = vmatpush.bf16.msra.mxu0 %v3647
      %4407 = vmatpush.bf16.msra.mxu0 %v3645
      %4408 = vmatpush.bf16.msra.mxu0 %v3643
      %4409 = vmatmul.bf16.gmra.mxu0 %v3902
      %v4410 = vpop.f32.mrf.mxu0
      %v4411 = vadd.f32 0.0, %v4410
      %v4412 = vpop.f32.mrf.mxu0
      %v4413 = vadd.f32 0.0, %v4412
      %4414 = vmatmul.bf16.gmra.mxu0 %v3904
      %v4415 = vpop.f32.mrf.mxu0
      %v4416 = vadd.f32 0.0, %v4415
      %v4417 = vpop.f32.mrf.mxu0
      %v4418 = vadd.f32 0.0, %v4417
      %4419 = vmatmul.bf16.gmra.mxu0 %v3906
      %v4420 = vpop.f32.mrf.mxu0
      %v4421 = vadd.f32 0.0, %v4420
      %v4422 = vpop.f32.mrf.mxu0
      %v4423 = vadd.f32 0.0, %v4422
      %4424 = vmatmul.bf16.gmra.mxu0 %v3908
      %v4425 = vpop.f32.mrf.mxu0
      %v4426 = vadd.f32 0.0, %v4425
      %v4427 = vpop.f32.mrf.mxu0
      %v4428 = vadd.f32 0.0, %v4427
      %4429 = vmatmul.bf16.gmra.mxu0 %v3910
      %v4430 = vpop.f32.mrf.mxu0
      %v4431 = vadd.f32 0.0, %v4430
      %v4432 = vpop.f32.mrf.mxu0
      %v4433 = vadd.f32 0.0, %v4432
      %4434 = vmatmul.bf16.gmra.mxu0 %v3912
      %v4435 = vpop.f32.mrf.mxu0
      %v4436 = vadd.f32 0.0, %v4435
      %v4437 = vpop.f32.mrf.mxu0
      %v4438 = vadd.f32 0.0, %v4437
      %4439 = vmatmul.bf16.gmra.mxu0 %v3914
      %v4440 = vpop.f32.mrf.mxu0
      %v4441 = vadd.f32 0.0, %v4440
      %v4442 = vpop.f32.mrf.mxu0
      %v4443 = vadd.f32 0.0, %v4442
      %4444 = vmatmul.bf16.gmra.mxu0 %v3916
      %v4445 = vpop.f32.mrf.mxu0
      %v4446 = vadd.f32 0.0, %v4445
      %v4447 = vpop.f32.mrf.mxu0
      %v4448 = vadd.f32 0.0, %v4447
      %4449 = vmatmul.bf16.gmra.mxu0 %v3918
      %v4450 = vpop.f32.mrf.mxu0
      %v4451 = vadd.f32 0.0, %v4450
      %v4452 = vpop.f32.mrf.mxu0
      %v4453 = vadd.f32 0.0, %v4452
      %4454 = vmatmul.bf16.gmra.mxu0 %v3920
      %v4455 = vpop.f32.mrf.mxu0
      %v4456 = vadd.f32 0.0, %v4455
      %v4457 = vpop.f32.mrf.mxu0
      %v4458 = vadd.f32 0.0, %v4457
      %4459 = vmatmul.bf16.gmra.mxu0 %v3922
      %v4460 = vpop.f32.mrf.mxu0
      %v4461 = vadd.f32 0.0, %v4460
      %v4462 = vpop.f32.mrf.mxu0
      %v4463 = vadd.f32 0.0, %v4462
      %4464 = vmatmul.bf16.gmra.mxu0 %v3924
      %v4465 = vpop.f32.mrf.mxu0
      %v4466 = vadd.f32 0.0, %v4465
      %v4467 = vpop.f32.mrf.mxu0
      %v4468 = vadd.f32 0.0, %v4467
      %4469 = vmatmul.bf16.gmra.mxu0 %v3926
      %v4470 = vpop.f32.mrf.mxu0
      %v4471 = vadd.f32 0.0, %v4470
      %v4472 = vpop.f32.mrf.mxu0
      %v4473 = vadd.f32 0.0, %v4472
      %4474 = vmatmul.bf16.gmra.mxu0 %v3928
      %v4475 = vpop.f32.mrf.mxu0
      %v4476 = vadd.f32 0.0, %v4475
      %v4477 = vpop.f32.mrf.mxu0
      %v4478 = vadd.f32 0.0, %v4477
      %4479 = vmatmul.bf16.gmra.mxu0 %v3930
      %v4480 = vpop.f32.mrf.mxu0
      %v4481 = vadd.f32 0.0, %v4480
      %v4482 = vpop.f32.mrf.mxu0
      %v4483 = vadd.f32 0.0, %v4482
      %4484 = vmatmul.bf16.gmra.mxu0 %v3932
      %v4485 = vpop.f32.mrf.mxu0
      %v4486 = vadd.f32 0.0, %v4485
      %v4487 = vpop.f32.mrf.mxu0
      %v4488 = vadd.f32 0.0, %v4487
      %4489 = vmatmul.bf16.gmra.mxu0 %v3934
      %v4490 = vpop.f32.mrf.mxu0
      %v4491 = vadd.f32 0.0, %v4490
      %v4492 = vpop.f32.mrf.mxu0
      %v4493 = vadd.f32 0.0, %v4492
      %4494 = vmatmul.bf16.gmra.mxu0 %v3936
      %v4495 = vpop.f32.mrf.mxu0
      %v4496 = vadd.f32 0.0, %v4495
      %v4497 = vpop.f32.mrf.mxu0
      %v4498 = vadd.f32 0.0, %v4497
      %4499 = vmatmul.bf16.gmra.mxu0 %v3938
      %v4500 = vpop.f32.mrf.mxu0
      %v4501 = vadd.f32 0.0, %v4500
      %v4502 = vpop.f32.mrf.mxu0
      %v4503 = vadd.f32 0.0, %v4502
      %4504 = vmatmul.bf16.gmra.mxu0 %v3940
      %v4505 = vpop.f32.mrf.mxu0
      %v4506 = vadd.f32 0.0, %v4505
      %v4507 = vpop.f32.mrf.mxu0
      %v4508 = vadd.f32 0.0, %v4507
      %4509 = vmatmul.bf16.gmra.mxu0 %v3942
      %v4510 = vpop.f32.mrf.mxu0
      %v4511 = vadd.f32 0.0, %v4510
      %v4512 = vpop.f32.mrf.mxu0
      %v4513 = vadd.f32 0.0, %v4512
      %4514 = vmatmul.bf16.gmra.mxu0 %v3944
      %v4515 = vpop.f32.mrf.mxu0
      %v4516 = vadd.f32 0.0, %v4515
      %v4517 = vpop.f32.mrf.mxu0
      %v4518 = vadd.f32 0.0, %v4517
      %4519 = vmatmul.bf16.gmra.mxu0 %v3946
      %v4520 = vpop.f32.mrf.mxu0
      %v4521 = vadd.f32 0.0, %v4520
      %v4522 = vpop.f32.mrf.mxu0
      %v4523 = vadd.f32 0.0, %v4522
      %4524 = vmatmul.bf16.gmra.mxu0 %v3948
      %v4525 = vpop.f32.mrf.mxu0
      %v4526 = vadd.f32 0.0, %v4525
      %v4527 = vpop.f32.mrf.mxu0
      %v4528 = vadd.f32 0.0, %v4527
      %4529 = vmatmul.bf16.gmra.mxu0 %v3950
      %v4530 = vpop.f32.mrf.mxu0
      %v4531 = vadd.f32 0.0, %v4530
      %v4532 = vpop.f32.mrf.mxu0
      %v4533 = vadd.f32 0.0, %v4532
      %4534 = vmatmul.bf16.gmra.mxu0 %v3952
      %v4535 = vpop.f32.mrf.mxu0
      %v4536 = vadd.f32 0.0, %v4535
      %v4537 = vpop.f32.mrf.mxu0
      %v4538 = vadd.f32 0.0, %v4537
      %4539 = vmatmul.bf16.gmra.mxu0 %v3954
      %v4540 = vpop.f32.mrf.mxu0
      %v4541 = vadd.f32 0.0, %v4540
      %v4542 = vpop.f32.mrf.mxu0
      %v4543 = vadd.f32 0.0, %v4542
      %4544 = vmatmul.bf16.gmra.mxu0 %v3956
      %v4545 = vpop.f32.mrf.mxu0
      %v4546 = vadd.f32 0.0, %v4545
      %v4547 = vpop.f32.mrf.mxu0
      %v4548 = vadd.f32 0.0, %v4547
      %4549 = vmatmul.bf16.gmra.mxu0 %v3958
      %v4550 = vpop.f32.mrf.mxu0
      %v4551 = vadd.f32 0.0, %v4550
      %v4552 = vpop.f32.mrf.mxu0
      %v4553 = vadd.f32 0.0, %v4552
      %4554 = vmatmul.bf16.gmra.mxu0 %v3960
      %v4555 = vpop.f32.mrf.mxu0
      %v4556 = vadd.f32 0.0, %v4555
      %v4557 = vpop.f32.mrf.mxu0
      %v4558 = vadd.f32 0.0, %v4557
      %4559 = vdwg.mxu0
      %4560 = vmatpush.bf16.msra.mxu0 0
      %4561 = vmatpush.bf16.msra.mxu0 0
      %4562 = vmatpush.bf16.msra.mxu0 0
      %4563 = vmatpush.bf16.msra.mxu0 0
      %4564 = vmatpush.bf16.msra.mxu0 0
      %4565 = vmatpush.bf16.msra.mxu0 0
      %4566 = vmatpush.bf16.msra.mxu0 %v3661
      %4567 = vmatpush.bf16.msra.mxu0 %v3659
      %4568 = vmatmul.bf16.gmra.mxu0 %v3994
      %v4569 = vpop.f32.mrf.mxu0
      %v4570 = vadd.f32 %v4411, %v4569
      %v4571 = vpop.f32.mrf.mxu0
      %v4572 = vadd.f32 %v4413, %v4571
      %4573 = vmatmul.bf16.gmra.mxu0 %v3997
      %v4574 = vpop.f32.mrf.mxu0
      %v4575 = vadd.f32 %v4416, %v4574
      %v4576 = vpop.f32.mrf.mxu0
      %v4577 = vadd.f32 %v4418, %v4576
      %4578 = vmatmul.bf16.gmra.mxu0 %v4000
      %v4579 = vpop.f32.mrf.mxu0
      %v4580 = vadd.f32 %v4421, %v4579
      %v4581 = vpop.f32.mrf.mxu0
      %v4582 = vadd.f32 %v4423, %v4581
      %4583 = vmatmul.bf16.gmra.mxu0 %v4003
      %v4584 = vpop.f32.mrf.mxu0
      %v4585 = vadd.f32 %v4426, %v4584
      %v4586 = vpop.f32.mrf.mxu0
      %v4587 = vadd.f32 %v4428, %v4586
      %4588 = vmatmul.bf16.gmra.mxu0 %v4006
      %v4589 = vpop.f32.mrf.mxu0
      %v4590 = vadd.f32 %v4431, %v4589
      %v4591 = vpop.f32.mrf.mxu0
      %v4592 = vadd.f32 %v4433, %v4591
      %4593 = vmatmul.bf16.gmra.mxu0 %v4009
      %v4594 = vpop.f32.mrf.mxu0
      %v4595 = vadd.f32 %v4436, %v4594
      %v4596 = vpop.f32.mrf.mxu0
      %v4597 = vadd.f32 %v4438, %v4596
      %4598 = vmatmul.bf16.gmra.mxu0 %v4012
      %v4599 = vpop.f32.mrf.mxu0
      %v4600 = vadd.f32 %v4441, %v4599
      %v4601 = vpop.f32.mrf.mxu0
      %v4602 = vadd.f32 %v4443, %v4601
      %4603 = vmatmul.bf16.gmra.mxu0 %v4015
      %v4604 = vpop.f32.mrf.mxu0
      %v4605 = vadd.f32 %v4446, %v4604
      %v4606 = vpop.f32.mrf.mxu0
      %v4607 = vadd.f32 %v4448, %v4606
      %4608 = vmatmul.bf16.gmra.mxu0 %v4018
      %v4609 = vpop.f32.mrf.mxu0
      %v4610 = vadd.f32 %v4451, %v4609
      %v4611 = vpop.f32.mrf.mxu0
      %v4612 = vadd.f32 %v4453, %v4611
      %4613 = vmatmul.bf16.gmra.mxu0 %v4021
      %v4614 = vpop.f32.mrf.mxu0
      %v4615 = vadd.f32 %v4456, %v4614
      %v4616 = vpop.f32.mrf.mxu0
      %v4617 = vadd.f32 %v4458, %v4616
      %4618 = vmatmul.bf16.gmra.mxu0 %v4024
      %v4619 = vpop.f32.mrf.mxu0
      %v4620 = vadd.f32 %v4461, %v4619
      %v4621 = vpop.f32.mrf.mxu0
      %v4622 = vadd.f32 %v4463, %v4621
      %4623 = vmatmul.bf16.gmra.mxu0 %v4027
      %v4624 = vpop.f32.mrf.mxu0
      %v4625 = vadd.f32 %v4466, %v4624
      %v4626 = vpop.f32.mrf.mxu0
      %v4627 = vadd.f32 %v4468, %v4626
      %4628 = vmatmul.bf16.gmra.mxu0 %v4030
      %v4629 = vpop.f32.mrf.mxu0
      %v4630 = vadd.f32 %v4471, %v4629
      %v4631 = vpop.f32.mrf.mxu0
      %v4632 = vadd.f32 %v4473, %v4631
      %4633 = vmatmul.bf16.gmra.mxu0 %v4033
      %v4634 = vpop.f32.mrf.mxu0
      %v4635 = vadd.f32 %v4476, %v4634
      %v4636 = vpop.f32.mrf.mxu0
      %v4637 = vadd.f32 %v4478, %v4636
      %4638 = vmatmul.bf16.gmra.mxu0 %v4036
      %v4639 = vpop.f32.mrf.mxu0
      %v4640 = vadd.f32 %v4481, %v4639
      %v4641 = vpop.f32.mrf.mxu0
      %v4642 = vadd.f32 %v4483, %v4641
      %4643 = vmatmul.bf16.gmra.mxu0 %v4039
      %v4644 = vpop.f32.mrf.mxu0
      %v4645 = vadd.f32 %v4486, %v4644
      %v4646 = vpop.f32.mrf.mxu0
      %v4647 = vadd.f32 %v4488, %v4646
      %4648 = vmatmul.bf16.gmra.mxu0 %v4042
      %v4649 = vpop.f32.mrf.mxu0
      %v4650 = vadd.f32 %v4491, %v4649
      %v4651 = vpop.f32.mrf.mxu0
      %v4652 = vadd.f32 %v4493, %v4651
      %4653 = vmatmul.bf16.gmra.mxu0 %v4045
      %v4654 = vpop.f32.mrf.mxu0
      %v4655 = vadd.f32 %v4496, %v4654
      %v4656 = vpop.f32.mrf.mxu0
      %v4657 = vadd.f32 %v4498, %v4656
      %4658 = vmatmul.bf16.gmra.mxu0 %v4048
      %v4659 = vpop.f32.mrf.mxu0
      %v4660 = vadd.f32 %v4501, %v4659
      %v4661 = vpop.f32.mrf.mxu0
      %v4662 = vadd.f32 %v4503, %v4661
      %4663 = vmatmul.bf16.gmra.mxu0 %v4051
      %v4664 = vpop.f32.mrf.mxu0
      %v4665 = vadd.f32 %v4506, %v4664
      %v4666 = vpop.f32.mrf.mxu0
      %v4667 = vadd.f32 %v4508, %v4666
      %4668 = vmatmul.bf16.gmra.mxu0 %v4054
      %v4669 = vpop.f32.mrf.mxu0
      %v4670 = vadd.f32 %v4511, %v4669
      %v4671 = vpop.f32.mrf.mxu0
      %v4672 = vadd.f32 %v4513, %v4671
      %4673 = vmatmul.bf16.gmra.mxu0 %v4057
      %v4674 = vpop.f32.mrf.mxu0
      %v4675 = vadd.f32 %v4516, %v4674
      %v4676 = vpop.f32.mrf.mxu0
      %v4677 = vadd.f32 %v4518, %v4676
      %4678 = vmatmul.bf16.gmra.mxu0 %v4060
      %v4679 = vpop.f32.mrf.mxu0
      %v4680 = vadd.f32 %v4521, %v4679
      %v4681 = vpop.f32.mrf.mxu0
      %v4682 = vadd.f32 %v4523, %v4681
      %4683 = vmatmul.bf16.gmra.mxu0 %v4063
      %v4684 = vpop.f32.mrf.mxu0
      %v4685 = vadd.f32 %v4526, %v4684
      %v4686 = vpop.f32.mrf.mxu0
      %v4687 = vadd.f32 %v4528, %v4686
      %4688 = vmatmul.bf16.gmra.mxu0 %v4066
      %v4689 = vpop.f32.mrf.mxu0
      %v4690 = vadd.f32 %v4531, %v4689
      %v4691 = vpop.f32.mrf.mxu0
      %v4692 = vadd.f32 %v4533, %v4691
      %4693 = vmatmul.bf16.gmra.mxu0 %v4069
      %v4694 = vpop.f32.mrf.mxu0
      %v4695 = vadd.f32 %v4536, %v4694
      %v4696 = vpop.f32.mrf.mxu0
      %v4697 = vadd.f32 %v4538, %v4696
      %4698 = vmatmul.bf16.gmra.mxu0 %v4072
      %v4699 = vpop.f32.mrf.mxu0
      %v4700 = vadd.f32 %v4541, %v4699
      %v4701 = vpop.f32.mrf.mxu0
      %v4702 = vadd.f32 %v4543, %v4701
      %4703 = vmatmul.bf16.gmra.mxu0 %v4075
      %v4704 = vpop.f32.mrf.mxu0
      %v4705 = vadd.f32 %v4546, %v4704
      %v4706 = vpop.f32.mrf.mxu0
      %v4707 = vadd.f32 %v4548, %v4706
      %4708 = vmatmul.bf16.gmra.mxu0 %v4078
      %v4709 = vpop.f32.mrf.mxu0
      %v4710 = vadd.f32 %v4551, %v4709
      %v4711 = vpop.f32.mrf.mxu0
      %v4712 = vadd.f32 %v4553, %v4711
      %4713 = vmatmul.bf16.gmra.mxu0 %v4081
      %v4714 = vpop.f32.mrf.mxu0
      %v4715 = vadd.f32 %v4556, %v4714
      %v4716 = vpop.f32.mrf.mxu0
      %v4717 = vadd.f32 %v4558, %v4716
      %4718 = vdwg.mxu0
      %4719 = vst [vmem:[%s258] sm:$0xff] %v4252
      %4720 = vst.msk [vmem:[%s258 + $0x8] sm:$0xff] %vm2794, %v4570
      %4721 = vst [vmem:[%s258 + $0x10] sm:$0xff] %v4254
      %4722 = vst.msk [vmem:[%s258 + $0x18] sm:$0xff] %vm2794, %v4572
      %4723 = vst [vmem:[%s258 + $0x20] sm:$0xff] %v4257
      %4724 = vst.msk [vmem:[%s258 + $0x28] sm:$0xff] %vm2794, %v4575
      %4725 = vst [vmem:[%s258 + $0x30] sm:$0xff] %v4259
      %4726 = vst.msk [vmem:[%s258 + $0x38] sm:$0xff] %vm2794, %v4577
      %4727 = vst [vmem:[%s258 + $0x40] sm:$0xff] %v4262
      %4728 = vst.msk [vmem:[%s258 + $0x48] sm:$0xff] %vm2794, %v4580
      %4729 = vst [vmem:[%s258 + $0x50] sm:$0xff] %v4264
      %4730 = vst.msk [vmem:[%s258 + $0x58] sm:$0xff] %vm2794, %v4582
      %4731 = vst [vmem:[%s258 + $0x60] sm:$0xff] %v4267
      %4732 = vst.msk [vmem:[%s258 + $0x68] sm:$0xff] %vm2794, %v4585
      %4733 = vst [vmem:[%s258 + $0x70] sm:$0xff] %v4269
      %4734 = vst.msk [vmem:[%s258 + $0x78] sm:$0xff] %vm2794, %v4587
      %4735 = vst [vmem:[%s258 + $0x80] sm:$0xff] %v4272
      %4736 = vst.msk [vmem:[%s258 + $0x88] sm:$0xff] %vm2794, %v4590
      %4737 = vst [vmem:[%s258 + $0x90] sm:$0xff] %v4274
      %4738 = vst.msk [vmem:[%s258 + $0x98] sm:$0xff] %vm2794, %v4592
      %4739 = vst [vmem:[%s258 + $0xa0] sm:$0xff] %v4277
      %4740 = vst.msk [vmem:[%s258 + $0xa8] sm:$0xff] %vm2794, %v4595
      %4741 = vst [vmem:[%s258 + $0xb0] sm:$0xff] %v4279
      %4742 = vst.msk [vmem:[%s258 + $0xb8] sm:$0xff] %vm2794, %v4597
      %4743 = vst [vmem:[%s258 + $0xc0] sm:$0xff] %v4282
      %4744 = vst.msk [vmem:[%s258 + $0xc8] sm:$0xff] %vm2794, %v4600
      %4745 = vst [vmem:[%s258 + $0xd0] sm:$0xff] %v4284
      %4746 = vst.msk [vmem:[%s258 + $0xd8] sm:$0xff] %vm2794, %v4602
      %4747 = vst [vmem:[%s258 + $0xe0] sm:$0xff] %v4287
      %4748 = vst.msk [vmem:[%s258 + $0xe8] sm:$0xff] %vm2794, %v4605
      %4749 = vst [vmem:[%s258 + $0xf0] sm:$0xff] %v4289
      %4750 = vst.msk [vmem:[%s258 + $0xf8] sm:$0xff] %vm2794, %v4607
      %4751 = vst [vmem:[%s258 + $0x100] sm:$0xff] %v4292
      %4752 = vst.msk [vmem:[%s258 + $0x108] sm:$0xff] %vm2794, %v4610
      %4753 = vst [vmem:[%s258 + $0x110] sm:$0xff] %v4294
      %4754 = vst.msk [vmem:[%s258 + $0x118] sm:$0xff] %vm2794, %v4612
      %4755 = vst [vmem:[%s258 + $0x120] sm:$0xff] %v4297
      %4756 = vst.msk [vmem:[%s258 + $0x128] sm:$0xff] %vm2794, %v4615
      %4757 = vst [vmem:[%s258 + $0x130] sm:$0xff] %v4299
      %4758 = vst.msk [vmem:[%s258 + $0x138] sm:$0xff] %vm2794, %v4617
      %4759 = vst [vmem:[%s258 + $0x140] sm:$0xff] %v4302
      %4760 = vst.msk [vmem:[%s258 + $0x148] sm:$0xff] %vm2794, %v4620
      %4761 = vst [vmem:[%s258 + $0x150] sm:$0xff] %v4304
      %4762 = vst.msk [vmem:[%s258 + $0x158] sm:$0xff] %vm2794, %v4622
      %4763 = vst [vmem:[%s258 + $0x160] sm:$0xff] %v4307
      %4764 = vst.msk [vmem:[%s258 + $0x168] sm:$0xff] %vm2794, %v4625
      %4765 = vst [vmem:[%s258 + $0x170] sm:$0xff] %v4309
      %4766 = vst.msk [vmem:[%s258 + $0x178] sm:$0xff] %vm2794, %v4627
      %4767 = vst [vmem:[%s258 + $0x180] sm:$0xff] %v4312
      %4768 = vst.msk [vmem:[%s258 + $0x188] sm:$0xff] %vm2794, %v4630
      %4769 = vst [vmem:[%s258 + $0x190] sm:$0xff] %v4314
      %4770 = vst.msk [vmem:[%s258 + $0x198] sm:$0xff] %vm2794, %v4632
      %4771 = vst [vmem:[%s258 + $0x1a0] sm:$0xff] %v4317
      %4772 = vst.msk [vmem:[%s258 + $0x1a8] sm:$0xff] %vm2794, %v4635
      %4773 = vst [vmem:[%s258 + $0x1b0] sm:$0xff] %v4319
      %4774 = vst.msk [vmem:[%s258 + $0x1b8] sm:$0xff] %vm2794, %v4637
      %4775 = vst [vmem:[%s258 + $0x1c0] sm:$0xff] %v4322
      %4776 = vst.msk [vmem:[%s258 + $0x1c8] sm:$0xff] %vm2794, %v4640
      %4777 = vst [vmem:[%s258 + $0x1d0] sm:$0xff] %v4324
      %4778 = vst.msk [vmem:[%s258 + $0x1d8] sm:$0xff] %vm2794, %v4642
      %4779 = vst [vmem:[%s258 + $0x1e0] sm:$0xff] %v4327
      %4780 = vst.msk [vmem:[%s258 + $0x1e8] sm:$0xff] %vm2794, %v4645
      %4781 = vst [vmem:[%s258 + $0x1f0] sm:$0xff] %v4329
      %4782 = vst.msk [vmem:[%s258 + $0x1f8] sm:$0xff] %vm2794, %v4647
      %4783 = vst [vmem:[%s258 + $0x200] sm:$0xff] %v4332
      %4784 = vst.msk [vmem:[%s258 + $0x208] sm:$0xff] %vm2794, %v4650
      %4785 = vst [vmem:[%s258 + $0x210] sm:$0xff] %v4334
      %4786 = vst.msk [vmem:[%s258 + $0x218] sm:$0xff] %vm2794, %v4652
      %4787 = vst [vmem:[%s258 + $0x220] sm:$0xff] %v4337
      %4788 = vst.msk [vmem:[%s258 + $0x228] sm:$0xff] %vm2794, %v4655
      %4789 = vst [vmem:[%s258 + $0x230] sm:$0xff] %v4339
      %4790 = vst.msk [vmem:[%s258 + $0x238] sm:$0xff] %vm2794, %v4657
      %4791 = vst [vmem:[%s258 + $0x240] sm:$0xff] %v4342
      %4792 = vst.msk [vmem:[%s258 + $0x248] sm:$0xff] %vm2794, %v4660
      %4793 = vst [vmem:[%s258 + $0x250] sm:$0xff] %v4344
      %4794 = vst.msk [vmem:[%s258 + $0x258] sm:$0xff] %vm2794, %v4662
      %4795 = vst [vmem:[%s258 + $0x260] sm:$0xff] %v4347
      %4796 = vst.msk [vmem:[%s258 + $0x268] sm:$0xff] %vm2794, %v4665
      %4797 = vst [vmem:[%s258 + $0x270] sm:$0xff] %v4349
      %4798 = vst.msk [vmem:[%s258 + $0x278] sm:$0xff] %vm2794, %v4667
      %4799 = vst [vmem:[%s258 + $0x280] sm:$0xff] %v4352
      %4800 = vst.msk [vmem:[%s258 + $0x288] sm:$0xff] %vm2794, %v4670
      %4801 = vst [vmem:[%s258 + $0x290] sm:$0xff] %v4354
      %4802 = vst.msk [vmem:[%s258 + $0x298] sm:$0xff] %vm2794, %v4672
      %4803 = vst [vmem:[%s258 + $0x2a0] sm:$0xff] %v4357
      %4804 = vst.msk [vmem:[%s258 + $0x2a8] sm:$0xff] %vm2794, %v4675
      %4805 = vst [vmem:[%s258 + $0x2b0] sm:$0xff] %v4359
      %4806 = vst.msk [vmem:[%s258 + $0x2b8] sm:$0xff] %vm2794, %v4677
      %4807 = vst [vmem:[%s258 + $0x2c0] sm:$0xff] %v4362
      %4808 = vst.msk [vmem:[%s258 + $0x2c8] sm:$0xff] %vm2794, %v4680
      %4809 = vst [vmem:[%s258 + $0x2d0] sm:$0xff] %v4364
      %4810 = vst.msk [vmem:[%s258 + $0x2d8] sm:$0xff] %vm2794, %v4682
      %4811 = vst [vmem:[%s258 + $0x2e0] sm:$0xff] %v4367
      %4812 = vst.msk [vmem:[%s258 + $0x2e8] sm:$0xff] %vm2794, %v4685
      %4813 = vst [vmem:[%s258 + $0x2f0] sm:$0xff] %v4369
      %4814 = vst.msk [vmem:[%s258 + $0x2f8] sm:$0xff] %vm2794, %v4687
      %4815 = vst [vmem:[%s258 + $0x300] sm:$0xff] %v4372
      %4816 = vst.msk [vmem:[%s258 + $0x308] sm:$0xff] %vm2794, %v4690
      %4817 = vst [vmem:[%s258 + $0x310] sm:$0xff] %v4374
      %4818 = vst.msk [vmem:[%s258 + $0x318] sm:$0xff] %vm2794, %v4692
      %4819 = vst [vmem:[%s258 + $0x320] sm:$0xff] %v4377
      %4820 = vst.msk [vmem:[%s258 + $0x328] sm:$0xff] %vm2794, %v4695
      %4821 = vst [vmem:[%s258 + $0x330] sm:$0xff] %v4379
      %4822 = vst.msk [vmem:[%s258 + $0x338] sm:$0xff] %vm2794, %v4697
      %4823 = vst [vmem:[%s258 + $0x340] sm:$0xff] %v4382
      %4824 = vst.msk [vmem:[%s258 + $0x348] sm:$0xff] %vm2794, %v4700
      %4825 = vst [vmem:[%s258 + $0x350] sm:$0xff] %v4384
      %4826 = vst.msk [vmem:[%s258 + $0x358] sm:$0xff] %vm2794, %v4702
      %4827 = vst [vmem:[%s258 + $0x360] sm:$0xff] %v4387
      %4828 = vst.msk [vmem:[%s258 + $0x368] sm:$0xff] %vm2794, %v4705
      %4829 = vst [vmem:[%s258 + $0x370] sm:$0xff] %v4389
      %4830 = vst.msk [vmem:[%s258 + $0x378] sm:$0xff] %vm2794, %v4707
      %4831 = vst [vmem:[%s258 + $0x380] sm:$0xff] %v4392
      %4832 = vst.msk [vmem:[%s258 + $0x388] sm:$0xff] %vm2794, %v4710
      %4833 = vst [vmem:[%s258 + $0x390] sm:$0xff] %v4394
      %4834 = vst.msk [vmem:[%s258 + $0x398] sm:$0xff] %vm2794, %v4712
      %4835 = vst [vmem:[%s258 + $0x3a0] sm:$0xff] %v4397
      %4836 = vst.msk [vmem:[%s258 + $0x3a8] sm:$0xff] %vm2794, %v4715
      %4837 = vst [vmem:[%s258 + $0x3b0] sm:$0xff] %v4399
      %4838 = vst.msk [vmem:[%s258 + $0x3b8] sm:$0xff] %vm2794, %v4717
      %s4839 = smul.u32 60, %s17
      %p4840 = scmp.lt.s32.totalorder %s4839, 119
      %s4841 = scalar_select %p4840, %s4839, 119
      %s4842 = smul.addr %s4841, 2
      %s4843 = smul.addr %s4842, 8
      %s4844 = scalar_lea.vmem %s6, %s4843
      // Predicated region
      $region45: #{tpu_custom_call.1} parent=43 // pred_check
        %p4845 = pneg %p166
      $region46: #{tpu_custom_call.1} parent=43 // pred_check_branch
        %4847 = sbr.rel (%p4845) target = $region48
      $region47: #{tpu_custom_call.1} parent=43 // pred_region
        %s4848 = smul.u32 60, %s17
      $region48: #{tpu_custom_call.1} parent=43 // pred_fallthru
        _
    $region44: #{tpu_custom_call.1} parent=5 // pred_fallthru
      _
    %p4849 = scmp.le.s32.totalorder 2, %s12
    // Predicated region
    $region49: #{tpu_custom_call.1} parent=5 // pred_check
      %p4850 = pneg %p4849
    $region50: #{tpu_custom_call.1} parent=5 // pred_check_branch
      %4852 = sbr.rel (%p4850) target = $region52
    $region51: #{tpu_custom_call.1} parent=5 // pred_region
      %s4853 = ssub.s32 %s12, 2
      // Predicated region
      $region53: #{tpu_custom_call.1} parent=51 // pred_check
        %p4854 = pneg %p172
      $region54: #{tpu_custom_call.1} parent=51 // pred_check_branch
        %4856 = sbr.rel (%p4854) target = $region56
      $region55: #{tpu_custom_call.1} parent=51 // pred_region
        %s4857 = smul.u32 60, %s18
        %p4858 = scmp.lt.s32.totalorder %s4857, 119
        %s4859 = scalar_select %p4858, %s4857, 119
        %s4860 = smul.addr %s4859, 2
        %s4861 = smul.addr %s4860, 8
        %s4862 = scalar_lea.vmem %s6, %s4861
      $region56: #{tpu_custom_call.1} parent=51 // pred_fallthru
        _
    $region52: #{tpu_custom_call.1} parent=5 // pred_fallthru
      _
  $region6: #{tpu_custom_call.1} parent=0 // loop_footer
    %s16 = sadd.s32 1, %s12
  $region7: #{tpu_custom_call.1} parent=0 // loop_footer_branch
    %11 = sbr.rel target = $region3
  $region8: #{tpu_custom_call.1} parent=0 // loop_exit
    _

</llo_original>
